<compile_context>
chip_gen: v6e
topology: v6e:2x2x1
jax: 0.10.0
libtpu: 0.0.40
codegen_flags: <defaults>
</compile_context>

<pallas_src>
import functools
import math

import jax
import jax.numpy as jnp
from jax.experimental import pallas as pl
from jax.experimental.pallas import tpu as pltpu

EMBED = 64            # num_bins == embed_size == 64 (layer0 is Linear(64, 256))
HEADS = 4
HEAD_DIM = EMBED // HEADS
N_LAYERS = 4
HIDDEN0 = 256         # layer0 hidden
HEAD_HIDDEN = 256     # layer1 hidden
OUT_PAD = 128         # lane-dense padded output width (>= 61 and >= 109)


def make_mano_kernel(batch, num_cameras, matmul_dtype=jnp.bfloat16):
    B, C, H, HD, E, L = batch, num_cameras, HEADS, HEAD_DIM, EMBED, N_LAYERS
    f32 = jnp.float32
    dt = matmul_dtype

    def mm(a, w):
        # MXU matmul: activation cast to the (pre-packed) weight dtype, f32 accumulate.
        return jnp.dot(a.astype(w.dtype), w, preferred_element_type=f32)

    def layernorm(z, gamma, beta, eps=1e-5):
        mu = jnp.mean(z, axis=-1, keepdims=True)
        d = z - mu
        var = jnp.mean(d * d, axis=-1, keepdims=True)
        return d * jax.lax.rsqrt(var + eps) * gamma + beta

    def kernel(xpe_ref, mp_ref, fvec_ref, lvec_ref, w0_ref, w01_ref,
               wqkv_ref, wblk_ref, w1_hbm, w2_hbm,
               out_ref, w1_scr, w2_scr, dma_sem):
        # ---- start prefetch of the head weights; they are only needed at the end ----
        cp_w1 = pltpu.make_async_copy(w1_hbm, w1_scr, dma_sem.at[0])
        cp_w2 = pltpu.make_async_copy(w2_hbm, w2_scr, dma_sem.at[1])
        cp_w1.start()
        cp_w2.start()

        x = xpe_ref[0]                      # [BC, 64]  input histogram features (f32)
        pe = xpe_ref[1]                     # [BC, 64]  positional encoding (f32)
        mbias = mp_ref[0]                   # [BC, BC]  additive block-diagonal mask
        perm = mp_ref[1]                    # [BC, BC]  b-major -> c-major permutation

        fv = fvec_ref[...]                  # [4, 256] f32 bias slab
        b0 = fv[0:1, :]                     # layer0 bias          [1,256]
        b1 = fv[1:2, :]                     # layer1 bias          [1,256]
        b2 = fv[2:3, 0:OUT_PAD]             # layer2 bias (padded) [1,128]
        b01 = fv[3:4, 0:E]                  # layer0_1 bias        [1,64]

        # ---- stem: layer0 -> relu -> layer0_1 -> relu, then add positional enc ----
        h = jnp.maximum(mm(x, w0_ref[...]) + b0, 0.0)           # [BC, 256]
        h = jnp.maximum(mm(h, w01_ref[...]) + b01, 0.0)         # [BC, 64]
        feat = h + pe

        # ---- 4 transformer blocks (dropout = identity in eval mode) ----
        for l in range(L):
            wqkv = wqkv_ref[l]              # [64, 192] q|k|v (softmax scale folded in q)
            wb = wblk_ref[l]                # [192, 64] wo | wf1 | wf2 row blocks
            lv = lvec_ref[l]                # [8, 64]   bo,g1,be1,bf1,bf2,g2,be2,pad (f32)
            bo, g1, be1 = lv[0:1, :], lv[1:2, :], lv[2:3, :]
            bf1, bf2, g2, be2 = lv[3:4, :], lv[4:5, :], lv[5:6, :], lv[6:7, :]

            qkv = mm(feat, wqkv).astype(dt)                     # [BC, 192] bf16 operands
            hvs = []
            for hh in range(H):
                q = qkv[:, hh * HD:(hh + 1) * HD]               # [BC, HD]
                k = qkv[:, E + hh * HD:E + (hh + 1) * HD]
                v = qkv[:, 2 * E + hh * HD:2 * E + (hh + 1) * HD]
                e = jax.lax.dot_general(q, k, (((1,), (1,)), ((), ())),
                                        preferred_element_type=f32) + mbias
                m = jnp.max(e, axis=-1, keepdims=True)
                p = jnp.exp(e - m)
                s = jnp.sum(p, axis=-1, keepdims=True)
                a = p * pl.reciprocal(s, approx=True)
                hvs.append(jnp.dot(a.astype(dt), v, preferred_element_type=f32))
            # head concat in registers (static lane shifts), one fc_out matmul per layer
            hv_all = jnp.concatenate(hvs, axis=-1)              # [BC, 64]
            ao = mm(hv_all, wb[0:E, :])                         # [BC, 64]

            x1 = layernorm(ao + bo + feat, g1, be1)
            ff = jnp.maximum(mm(x1, wb[E:2 * E, :]) + bf1, 0.0)
            ff = mm(ff, wb[2 * E:3 * E, :]) + bf2
            feat = layernorm(ff + x1, g2, be2)

        # ---- head: layer1 over the camera-concatenated feature, then layer2 ----
        cp_w1.wait()
        cp_w2.wait()
        # exact f32 permutation matmul: rows b-major -> camera-major
        featP = jnp.dot(perm, feat, preferred_element_type=f32)            # [BC, 64]
        # lane-concatenate the C camera blocks in registers -> [B, C*64]
        lhs = jnp.concatenate([featP[c * B:(c + 1) * B, :] for c in range(C)], axis=-1)
        z = jnp.maximum(mm(lhs, w1_scr[...]) + b1, 0.0)                    # [B, 256]
        # TODO(synk): nn.Dropout after layer1 is stochastic; eval-mode identity here.
        out_ref[...] = mm(z, w2_scr[...]) + b2                             # [B, 128]

    return kernel


@functools.lru_cache(maxsize=8)
def _constants(batch, num_cameras):
    """Input-independent constants, cached per (B, C)."""
    B, C = batch, num_cameras
    BC = B * C
    # positional encoding -- matches PositionalEncoder.forward exactly
    params = jnp.tile(jnp.arange(C, dtype=jnp.float32), B)                 # [BC]
    div_term = jnp.exp(jnp.arange(0, EMBED, 2, dtype=jnp.float32)
                       * (-math.log(10000.0) / EMBED))                     # [32]
    ang = params[:, None] * div_term[None, :]
    pe = jnp.zeros((BC, EMBED), jnp.float32)
    pe = pe.at[:, 0::2].set(jnp.sin(ang))
    pe = pe.at[:, 1::2].set(jnp.cos(ang))
    # additive block-diagonal attention mask (0 within a batch, -1e30 across batches)
    bid = jnp.arange(BC, dtype=jnp.int32) // C
    mask = jnp.where(bid[:, None] == bid[None, :], 0.0, -1e30).astype(jnp.float32)
    # b-major -> c-major row permutation for the layer1 contraction
    rows = jnp.arange(BC, dtype=jnp.int32)
    perm = jax.nn.one_hot((rows % B) * C + rows // B, BC, dtype=jnp.float32)
    mp = jnp.stack([mask, perm], axis=0)                                   # [2,BC,BC]
    return pe, mp


def init_params(key, num_cameras, out_dim):
    ks = iter(jax.random.split(key, 64))

    def nrm(shape, s=0.05):
        return s * jax.random.normal(next(ks), shape, dtype=jnp.float32)

    p = {}
    p["w0"] = nrm((EMBED, HIDDEN0))
    p["b0"] = nrm((1, HIDDEN0))
    p["w01"] = nrm((HIDDEN0, EMBED))
    p["b01"] = nrm((1, EMBED))

    eye_h = jnp.eye(HEADS, dtype=jnp.float32)
    wq, wk, wv, wo, bo = [], [], [], [], []
    g1, be1, wf1, bf1, wf2, bf2, g2, be2 = [], [], [], [], [], [], [], []
    for _ in range(N_LAYERS):
        # per-head Linear(16,16) without bias, shared across heads -> block-diag 64x64
        wq.append(jnp.kron(eye_h, nrm((HEAD_DIM, HEAD_DIM))))
        wk.append(jnp.kron(eye_h, nrm((HEAD_DIM, HEAD_DIM))))
        wv.append(jnp.kron(eye_h, nrm((HEAD_DIM, HEAD_DIM))))
        wo.append(nrm((EMBED, EMBED)))
        bo.append(nrm((1, EMBED)))
        g1.append(jnp.ones((1, EMBED), jnp.float32))
        be1.append(jnp.zeros((1, EMBED), jnp.float32))
        wf1.append(nrm((EMBED, EMBED)))          # forward_expansion * embed = 64
        bf1.append(nrm((1, EMBED)))
        wf2.append(nrm((EMBED, EMBED)))
        bf2.append(nrm((1, EMBED)))
        g2.append(jnp.ones((1, EMBED), jnp.float32))
        be2.append(jnp.zeros((1, EMBED), jnp.float32))
    p["wq"], p["wk"], p["wv"] = jnp.stack(wq), jnp.stack(wk), jnp.stack(wv)
    p["wo"], p["bo"] = jnp.stack(wo), jnp.stack(bo)
    p["g1"], p["be1"] = jnp.stack(g1), jnp.stack(be1)
    p["wf1"], p["bf1"] = jnp.stack(wf1), jnp.stack(bf1)
    p["wf2"], p["bf2"] = jnp.stack(wf2), jnp.stack(bf2)
    p["g2"], p["be2"] = jnp.stack(g2), jnp.stack(be2)

    # layer1: Linear(C*64, 256) stored as (C, 64, 256); layer2: Linear(256, out_dim)
    p["w1"] = nrm((num_cameras, EMBED, HEAD_HIDDEN))
    p["b1"] = nrm((1, HEAD_HIDDEN))
    p["w2"] = nrm((HEAD_HIDDEN, out_dim))
    p["b2"] = nrm((1, out_dim))
    return p


def pack_params(p, out_dim, out_pad=OUT_PAD, matmul_dtype=jnp.bfloat16):
    """One-time parameter prep: fuse/pack weights into a few kernel input slabs.

    Weight slabs are cast to `matmul_dtype` (bf16 by default -> half the HBM->VMEM
    traffic, single-pass MXU); biases and LayerNorm vectors stay f32.
    Pass matmul_dtype=jnp.float32 for a PyTorch-f32 parity mode.
    """
    dt = matmul_dtype
    scale = 1.0 / math.sqrt(float(EMBED))   # softmax(energy / embed_size**0.5)
    # fused q|k|v projection with the softmax scale folded into the Q block
    wqkv = jnp.concatenate([p["wq"] * scale, p["wk"], p["wv"]], axis=-1).astype(dt)
    # wo | wf1 | wf2 stacked along rows
    wblk = jnp.concatenate([p["wo"], p["wf1"], p["wf2"]], axis=1).astype(dt)
    # per-layer [1,64] f32 vectors: bo,g1,be1,bf1,bf2,g2,be2 (+pad)        -> [L,8,64]
    lvec = jnp.concatenate([p["bo"], p["g1"], p["be1"], p["bf1"],
                            p["bf2"], p["g2"], p["be2"],
                            jnp.zeros_like(p["bo"])], axis=1)
    w0 = p["w0"].astype(dt)                                                # [64,256]
    w01 = p["w01"].astype(dt)                                              # [256,64]
    w1 = p["w1"].reshape(-1, HEAD_HIDDEN).astype(dt)                       # [C*64,256]
    w2 = (jnp.zeros((HEAD_HIDDEN, out_pad), jnp.float32)
          .at[:, :out_dim].set(p["w2"]).astype(dt))                        # [256,128]
    # f32 bias slab: b0 | b1 | b2(padded) | b01(padded)
    fvec = jnp.zeros((4, HIDDEN0), jnp.float32)
    fvec = fvec.at[0, :].set(p["b0"][0])
    fvec = fvec.at[1, :].set(p["b1"][0])
    fvec = fvec.at[2, :out_dim].set(p["b2"][0])
    fvec = fvec.at[3, :EMBED].set(p["b01"][0])
    return dict(w0=w0, w01=w01, wqkv=wqkv, wblk=wblk, lvec=lvec,
                w1=w1, w2=w2, fvec=fvec)


def mano_estimator_forward(x, packed, rot_type="aa"):
    B, C, nbins = x.shape
    assert nbins == EMBED, "num_bins must be 64 (layer0 is Linear(64, 256))"
    out_dim = 15 * 6 + 10 + 3 + 6 if rot_type == "6d" else 15 * 3 + 10 + 3 + 3
    dt = packed["wqkv"].dtype

    pe, mp = _constants(B, C)
    x2d = x.reshape(B * C, EMBED).astype(jnp.float32)
    xpe = jnp.stack([x2d, pe], axis=0)                                     # [2,BC,64]

    vmem_args = (xpe, mp, packed["fvec"], packed["lvec"], packed["w0"],
                 packed["w01"], packed["wqkv"], packed["wblk"])
    hbm_args = (packed["w1"], packed["w2"])        # stay in HBM, DMA'd inside kernel

    def full_spec(a):
        # whole array as a single VMEM block (no grid)
        return pl.BlockSpec(a.shape, lambda *_, _nd=a.ndim: (0,) * _nd)

    kernel = make_mano_kernel(B, C, dt)
    # NOTE: for production batch sizes, switch to a row-tiled grid with
    # dimension_semantics=("parallel",) so both v7x TensorCores are used; gridless
    # is fine for BC <= ~64.
    out = pl.pallas_call(
        kernel,
        out_shape=jax.ShapeDtypeStruct((B, OUT_PAD), jnp.float32),
        in_specs=[full_spec(a) for a in vmem_args]
                 + [pl.BlockSpec(memory_space=pl.ANY),
                    pl.BlockSpec(memory_space=pl.ANY)],
        out_specs=pl.BlockSpec((B, OUT_PAD), lambda *_: (0, 0)),
        scratch_shapes=[
            pltpu.VMEM(packed["w1"].shape, packed["w1"].dtype),
            pltpu.VMEM(packed["w2"].shape, packed["w2"].dtype),
            pltpu.SemaphoreType.DMA((2,)),
        ],
    )(*vmem_args, *hbm_args)
    return out[:, :out_dim]


if __name__ == "__main__":
    key = jax.random.PRNGKey(0)
    kx, kp = jax.random.split(key)

    batch, num_cameras, num_bins = 2, 8, 64
    rot_type = "aa"
    out_dim = 15 * 3 + 10 + 3 + 3   # 61

    x = jax.random.normal(kx, (batch, num_cameras, num_bins), dtype=jnp.float32)
    params = init_params(kp, num_cameras, out_dim)
    # bf16 MXU operands (f32 accumulation) by default; use matmul_dtype=jnp.float32
    # in pack_params for a PyTorch-f32 parity mode.
    packed = pack_params(params, out_dim)

    out = mano_estimator_forward(x, packed, rot_type=rot_type)
    out = jax.block_until_ready(out)
    assert out.shape == (batch, out_dim), out.shape
    assert bool(jnp.all(jnp.isfinite(out)))
    print("KERNEL_OK")
</pallas_src>

<mosaic_0001>
module attributes {stable_mosaic.version = 11 : i64} {
  func.func @kernel(%arg0: memref<2x16x64xf32, #tpu.memory_space<vmem>>, %arg1: memref<2x16x16xf32, #tpu.memory_space<vmem>>, %arg2: memref<4x256xf32, #tpu.memory_space<vmem>>, %arg3: memref<4x8x64xf32, #tpu.memory_space<vmem>>, %arg4: memref<64x256xbf16, #tpu.memory_space<vmem>>, %arg5: memref<256x64xbf16, #tpu.memory_space<vmem>>, %arg6: memref<4x64x192xbf16, #tpu.memory_space<vmem>>, %arg7: memref<4x192x64xbf16, #tpu.memory_space<vmem>>, %arg8: memref<512x256xbf16, #tpu.memory_space<any>>, %arg9: memref<256x128xbf16, #tpu.memory_space<any>>, %arg10: memref<2x128xf32, #tpu.memory_space<vmem>>, %arg11: memref<512x256xbf16, #tpu.memory_space<vmem>>, %arg12: memref<256x128xbf16, #tpu.memory_space<vmem>>, %arg13: memref<2x!tpu.dma_semaphore, #tpu.memory_space<semaphore_mem>>) attributes {dimension_semantics = [], scalar_prefetch = 0 : i64, scratch_operands = 3 : i64, tpu.core_type = #tpu.core_type<tc>} {
    %c0_i32 = arith.constant 0 : i32
    %0 = tpu.memref_slice %arg13[%c0_i32] : memref<2x!tpu.dma_semaphore, #tpu.memory_space<semaphore_mem>> -> memref<1x!tpu.dma_semaphore, #tpu.memory_space<semaphore_mem>>
    %1 = tpu.memref_squeeze %0 : memref<1x!tpu.dma_semaphore, #tpu.memory_space<semaphore_mem>> -> memref<!tpu.dma_semaphore, #tpu.memory_space<semaphore_mem>>
    tpu.enqueue_dma source(%arg8 : memref<512x256xbf16, #tpu.memory_space<any>>) target(%arg11 : memref<512x256xbf16, #tpu.memory_space<vmem>>) target_semaphore(%1 : memref<!tpu.dma_semaphore, #tpu.memory_space<semaphore_mem>>)
    %c1_i32 = arith.constant 1 : i32
    %2 = tpu.memref_slice %arg13[%c1_i32] : memref<2x!tpu.dma_semaphore, #tpu.memory_space<semaphore_mem>> -> memref<1x!tpu.dma_semaphore, #tpu.memory_space<semaphore_mem>>
    %3 = tpu.memref_squeeze %2 : memref<1x!tpu.dma_semaphore, #tpu.memory_space<semaphore_mem>> -> memref<!tpu.dma_semaphore, #tpu.memory_space<semaphore_mem>>
    tpu.enqueue_dma source(%arg9 : memref<256x128xbf16, #tpu.memory_space<any>>) target(%arg12 : memref<256x128xbf16, #tpu.memory_space<vmem>>) target_semaphore(%3 : memref<!tpu.dma_semaphore, #tpu.memory_space<semaphore_mem>>)
    %c0 = arith.constant 0 : index
    %c0_0 = arith.constant 0 : index
    %c0_1 = arith.constant 0 : index
    %4 = vector.load %arg0[%c0, %c0_0, %c0_1] : memref<2x16x64xf32, #tpu.memory_space<vmem>>, vector<1x16x64xf32>
    %5 = vector.shape_cast %4 : vector<1x16x64xf32> to vector<16x64xf32>
    %c1 = arith.constant 1 : index
    %c0_2 = arith.constant 0 : index
    %c0_3 = arith.constant 0 : index
    %6 = vector.load %arg0[%c1, %c0_2, %c0_3] : memref<2x16x64xf32, #tpu.memory_space<vmem>>, vector<1x16x64xf32>
    %7 = vector.shape_cast %6 : vector<1x16x64xf32> to vector<16x64xf32>
    %c0_4 = arith.constant 0 : index
    %c0_5 = arith.constant 0 : index
    %c0_6 = arith.constant 0 : index
    %8 = vector.load %arg1[%c0_4, %c0_5, %c0_6] : memref<2x16x16xf32, #tpu.memory_space<vmem>>, vector<1x16x16xf32>
    %9 = vector.shape_cast %8 : vector<1x16x16xf32> to vector<16x16xf32>
    %c1_7 = arith.constant 1 : index
    %c0_8 = arith.constant 0 : index
    %c0_9 = arith.constant 0 : index
    %10 = vector.load %arg1[%c1_7, %c0_8, %c0_9] : memref<2x16x16xf32, #tpu.memory_space<vmem>>, vector<1x16x16xf32>
    %11 = vector.shape_cast %10 : vector<1x16x16xf32> to vector<16x16xf32>
    %c0_10 = arith.constant 0 : index
    %c0_11 = arith.constant 0 : index
    %12 = vector.load %arg2[%c0_10, %c0_11] : memref<4x256xf32, #tpu.memory_space<vmem>>, vector<4x256xf32>
    %13 = vector.extract_strided_slice %12 {offsets = [0, 0], sizes = [1, 256], strides = [1, 1]} : vector<4x256xf32> to vector<1x256xf32>
    %14 = vector.extract_strided_slice %12 {offsets = [1, 0], sizes = [1, 256], strides = [1, 1]} : vector<4x256xf32> to vector<1x256xf32>
    %15 = vector.extract_strided_slice %12 {offsets = [2, 0], sizes = [1, 128], strides = [1, 1]} : vector<4x256xf32> to vector<1x128xf32>
    %16 = vector.extract_strided_slice %12 {offsets = [3, 0], sizes = [1, 64], strides = [1, 1]} : vector<4x256xf32> to vector<1x64xf32>
    %c0_12 = arith.constant 0 : index
    %c0_13 = arith.constant 0 : index
    %17 = vector.load %arg4[%c0_12, %c0_13] : memref<64x256xbf16, #tpu.memory_space<vmem>>, vector<64x256xbf16>
    %18 = arith.truncf %5 : vector<16x64xf32> to vector<16x64xbf16>
    %cst = arith.constant dense<0.000000e+00> : vector<16x256xf32>
    %19 = tpu.matmul %18, %17, %cst {dimension_numbers = #tpu.dot_dimension_numbers<[1], [0], [0], [1], [0, 0, 1, 1], [], []>} : vector<16x64xbf16>, vector<64x256xbf16>, vector<16x256xf32> -> vector<16x256xf32>
    %20 = vector.broadcast %13 : vector<1x256xf32> to vector<16x256xf32>
    %21 = arith.addf %19, %20 : vector<16x256xf32>
    %cst_14 = arith.constant 0.000000e+00 : f32
    %22 = vector.broadcast %cst_14 : f32 to vector<16x256xf32>
    %23 = arith.maximumf %21, %22 : vector<16x256xf32>
    %c0_15 = arith.constant 0 : index
    %c0_16 = arith.constant 0 : index
    %24 = vector.load %arg5[%c0_15, %c0_16] : memref<256x64xbf16, #tpu.memory_space<vmem>>, vector<256x64xbf16>
    %25 = arith.truncf %23 : vector<16x256xf32> to vector<16x256xbf16>
    %cst_17 = arith.constant dense<0.000000e+00> : vector<16x64xf32>
    %26 = tpu.matmul %25, %24, %cst_17 {dimension_numbers = #tpu.dot_dimension_numbers<[1], [0], [0], [1], [0, 0, 1, 1], [], []>} : vector<16x256xbf16>, vector<256x64xbf16>, vector<16x64xf32> -> vector<16x64xf32>
    %27 = vector.broadcast %16 : vector<1x64xf32> to vector<16x64xf32>
    %28 = arith.addf %26, %27 : vector<16x64xf32>
    %cst_18 = arith.constant 0.000000e+00 : f32
    %29 = vector.broadcast %cst_18 : f32 to vector<16x64xf32>
    %30 = arith.maximumf %28, %29 : vector<16x64xf32>
    %31 = arith.addf %30, %7 : vector<16x64xf32>
    %c0_19 = arith.constant 0 : index
    %c0_20 = arith.constant 0 : index
    %c0_21 = arith.constant 0 : index
    %32 = vector.load %arg6[%c0_19, %c0_20, %c0_21] : memref<4x64x192xbf16, #tpu.memory_space<vmem>>, vector<1x64x192xbf16>
    %33 = vector.shape_cast %32 : vector<1x64x192xbf16> to vector<64x192xbf16>
    %c0_22 = arith.constant 0 : index
    %c0_23 = arith.constant 0 : index
    %c0_24 = arith.constant 0 : index
    %34 = vector.load %arg7[%c0_22, %c0_23, %c0_24] : memref<4x192x64xbf16, #tpu.memory_space<vmem>>, vector<1x192x64xbf16>
    %35 = vector.shape_cast %34 : vector<1x192x64xbf16> to vector<192x64xbf16>
    %c0_25 = arith.constant 0 : index
    %c0_26 = arith.constant 0 : index
    %c0_27 = arith.constant 0 : index
    %36 = vector.load %arg3[%c0_25, %c0_26, %c0_27] : memref<4x8x64xf32, #tpu.memory_space<vmem>>, vector<1x8x64xf32>
    %37 = vector.shape_cast %36 : vector<1x8x64xf32> to vector<8x64xf32>
    %38 = vector.extract_strided_slice %37 {offsets = [0, 0], sizes = [1, 64], strides = [1, 1]} : vector<8x64xf32> to vector<1x64xf32>
    %39 = vector.extract_strided_slice %37 {offsets = [1, 0], sizes = [1, 64], strides = [1, 1]} : vector<8x64xf32> to vector<1x64xf32>
    %40 = vector.extract_strided_slice %37 {offsets = [2, 0], sizes = [1, 64], strides = [1, 1]} : vector<8x64xf32> to vector<1x64xf32>
    %41 = vector.extract_strided_slice %37 {offsets = [3, 0], sizes = [1, 64], strides = [1, 1]} : vector<8x64xf32> to vector<1x64xf32>
    %42 = vector.extract_strided_slice %37 {offsets = [4, 0], sizes = [1, 64], strides = [1, 1]} : vector<8x64xf32> to vector<1x64xf32>
    %43 = vector.extract_strided_slice %37 {offsets = [5, 0], sizes = [1, 64], strides = [1, 1]} : vector<8x64xf32> to vector<1x64xf32>
    %44 = vector.extract_strided_slice %37 {offsets = [6, 0], sizes = [1, 64], strides = [1, 1]} : vector<8x64xf32> to vector<1x64xf32>
    %45 = arith.truncf %31 : vector<16x64xf32> to vector<16x64xbf16>
    %cst_28 = arith.constant dense<0.000000e+00> : vector<16x192xf32>
    %46 = tpu.matmul %45, %33, %cst_28 {dimension_numbers = #tpu.dot_dimension_numbers<[1], [0], [0], [1], [0, 0, 1, 1], [], []>} : vector<16x64xbf16>, vector<64x192xbf16>, vector<16x192xf32> -> vector<16x192xf32>
    %47 = arith.truncf %46 : vector<16x192xf32> to vector<16x192xbf16>
    %48 = vector.extract_strided_slice %47 {offsets = [0, 0], sizes = [16, 16], strides = [1, 1]} : vector<16x192xbf16> to vector<16x16xbf16>
    %49 = vector.extract_strided_slice %47 {offsets = [0, 64], sizes = [16, 16], strides = [1, 1]} : vector<16x192xbf16> to vector<16x16xbf16>
    %50 = vector.extract_strided_slice %47 {offsets = [0, 128], sizes = [16, 16], strides = [1, 1]} : vector<16x192xbf16> to vector<16x16xbf16>
    %cst_29 = arith.constant dense<0.000000e+00> : vector<16x16xf32>
    %51 = tpu.matmul %48, %49, %cst_29 {dimension_numbers = #tpu.dot_dimension_numbers<[1], [1], [0], [0], [0, 0, 1, 0], [], []>} : vector<16x16xbf16>, vector<16x16xbf16>, vector<16x16xf32> -> vector<16x16xf32>
    %52 = arith.addf %51, %9 : vector<16x16xf32>
    %cst_30 = arith.constant dense<0xFF800000> : vector<16xf32>
    %53 = vector.multi_reduction <maximumf>, %52, %cst_30 [1] : vector<16x16xf32> to vector<16xf32>
    %54 = vector.shape_cast %53 : vector<16xf32> to vector<16x1xf32>
    %55 = vector.broadcast %54 : vector<16x1xf32> to vector<16x16xf32>
    %56 = arith.subf %52, %55 : vector<16x16xf32>
    %57 = math.exp %56 : vector<16x16xf32>
    %cst_31 = arith.constant dense<0.000000e+00> : vector<16xf32>
    %58 = vector.multi_reduction <add>, %57, %cst_31 [1] : vector<16x16xf32> to vector<16xf32>
    %59 = vector.shape_cast %58 : vector<16xf32> to vector<16x1xf32>
    %60 = tpu.reciprocal %59 {approx = true} : vector<16x1xf32> -> vector<16x1xf32>
    %61 = vector.broadcast %60 : vector<16x1xf32> to vector<16x16xf32>
    %62 = arith.mulf %57, %61 : vector<16x16xf32>
    %63 = arith.truncf %62 : vector<16x16xf32> to vector<16x16xbf16>
    %cst_32 = arith.constant dense<0.000000e+00> : vector<16x16xf32>
    %64 = tpu.matmul %63, %50, %cst_32 {dimension_numbers = #tpu.dot_dimension_numbers<[1], [0], [0], [1], [0, 0, 1, 1], [], []>} : vector<16x16xbf16>, vector<16x16xbf16>, vector<16x16xf32> -> vector<16x16xf32>
    %65 = vector.extract_strided_slice %47 {offsets = [0, 16], sizes = [16, 16], strides = [1, 1]} : vector<16x192xbf16> to vector<16x16xbf16>
    %66 = vector.extract_strided_slice %47 {offsets = [0, 80], sizes = [16, 16], strides = [1, 1]} : vector<16x192xbf16> to vector<16x16xbf16>
    %67 = vector.extract_strided_slice %47 {offsets = [0, 144], sizes = [16, 16], strides = [1, 1]} : vector<16x192xbf16> to vector<16x16xbf16>
    %cst_33 = arith.constant dense<0.000000e+00> : vector<16x16xf32>
    %68 = tpu.matmul %65, %66, %cst_33 {dimension_numbers = #tpu.dot_dimension_numbers<[1], [1], [0], [0], [0, 0, 1, 0], [], []>} : vector<16x16xbf16>, vector<16x16xbf16>, vector<16x16xf32> -> vector<16x16xf32>
    %69 = arith.addf %68, %9 : vector<16x16xf32>
    %cst_34 = arith.constant dense<0xFF800000> : vector<16xf32>
    %70 = vector.multi_reduction <maximumf>, %69, %cst_34 [1] : vector<16x16xf32> to vector<16xf32>
    %71 = vector.shape_cast %70 : vector<16xf32> to vector<16x1xf32>
    %72 = vector.broadcast %71 : vector<16x1xf32> to vector<16x16xf32>
    %73 = arith.subf %69, %72 : vector<16x16xf32>
    %74 = math.exp %73 : vector<16x16xf32>
    %cst_35 = arith.constant dense<0.000000e+00> : vector<16xf32>
    %75 = vector.multi_reduction <add>, %74, %cst_35 [1] : vector<16x16xf32> to vector<16xf32>
    %76 = vector.shape_cast %75 : vector<16xf32> to vector<16x1xf32>
    %77 = tpu.reciprocal %76 {approx = true} : vector<16x1xf32> -> vector<16x1xf32>
    %78 = vector.broadcast %77 : vector<16x1xf32> to vector<16x16xf32>
    %79 = arith.mulf %74, %78 : vector<16x16xf32>
    %80 = arith.truncf %79 : vector<16x16xf32> to vector<16x16xbf16>
    %cst_36 = arith.constant dense<0.000000e+00> : vector<16x16xf32>
    %81 = tpu.matmul %80, %67, %cst_36 {dimension_numbers = #tpu.dot_dimension_numbers<[1], [0], [0], [1], [0, 0, 1, 1], [], []>} : vector<16x16xbf16>, vector<16x16xbf16>, vector<16x16xf32> -> vector<16x16xf32>
    %82 = vector.extract_strided_slice %47 {offsets = [0, 32], sizes = [16, 16], strides = [1, 1]} : vector<16x192xbf16> to vector<16x16xbf16>
    %83 = vector.extract_strided_slice %47 {offsets = [0, 96], sizes = [16, 16], strides = [1, 1]} : vector<16x192xbf16> to vector<16x16xbf16>
    %84 = vector.extract_strided_slice %47 {offsets = [0, 160], sizes = [16, 16], strides = [1, 1]} : vector<16x192xbf16> to vector<16x16xbf16>
    %cst_37 = arith.constant dense<0.000000e+00> : vector<16x16xf32>
    %85 = tpu.matmul %82, %83, %cst_37 {dimension_numbers = #tpu.dot_dimension_numbers<[1], [1], [0], [0], [0, 0, 1, 0], [], []>} : vector<16x16xbf16>, vector<16x16xbf16>, vector<16x16xf32> -> vector<16x16xf32>
    %86 = arith.addf %85, %9 : vector<16x16xf32>
    %cst_38 = arith.constant dense<0xFF800000> : vector<16xf32>
    %87 = vector.multi_reduction <maximumf>, %86, %cst_38 [1] : vector<16x16xf32> to vector<16xf32>
    %88 = vector.shape_cast %87 : vector<16xf32> to vector<16x1xf32>
    %89 = vector.broadcast %88 : vector<16x1xf32> to vector<16x16xf32>
    %90 = arith.subf %86, %89 : vector<16x16xf32>
    %91 = math.exp %90 : vector<16x16xf32>
    %cst_39 = arith.constant dense<0.000000e+00> : vector<16xf32>
    %92 = vector.multi_reduction <add>, %91, %cst_39 [1] : vector<16x16xf32> to vector<16xf32>
    %93 = vector.shape_cast %92 : vector<16xf32> to vector<16x1xf32>
    %94 = tpu.reciprocal %93 {approx = true} : vector<16x1xf32> -> vector<16x1xf32>
    %95 = vector.broadcast %94 : vector<16x1xf32> to vector<16x16xf32>
    %96 = arith.mulf %91, %95 : vector<16x16xf32>
    %97 = arith.truncf %96 : vector<16x16xf32> to vector<16x16xbf16>
    %cst_40 = arith.constant dense<0.000000e+00> : vector<16x16xf32>
    %98 = tpu.matmul %97, %84, %cst_40 {dimension_numbers = #tpu.dot_dimension_numbers<[1], [0], [0], [1], [0, 0, 1, 1], [], []>} : vector<16x16xbf16>, vector<16x16xbf16>, vector<16x16xf32> -> vector<16x16xf32>
    %99 = vector.extract_strided_slice %47 {offsets = [0, 48], sizes = [16, 16], strides = [1, 1]} : vector<16x192xbf16> to vector<16x16xbf16>
    %100 = vector.extract_strided_slice %47 {offsets = [0, 112], sizes = [16, 16], strides = [1, 1]} : vector<16x192xbf16> to vector<16x16xbf16>
    %101 = vector.extract_strided_slice %47 {offsets = [0, 176], sizes = [16, 16], strides = [1, 1]} : vector<16x192xbf16> to vector<16x16xbf16>
    %cst_41 = arith.constant dense<0.000000e+00> : vector<16x16xf32>
    %102 = tpu.matmul %99, %100, %cst_41 {dimension_numbers = #tpu.dot_dimension_numbers<[1], [1], [0], [0], [0, 0, 1, 0], [], []>} : vector<16x16xbf16>, vector<16x16xbf16>, vector<16x16xf32> -> vector<16x16xf32>
    %103 = arith.addf %102, %9 : vector<16x16xf32>
    %cst_42 = arith.constant dense<0xFF800000> : vector<16xf32>
    %104 = vector.multi_reduction <maximumf>, %103, %cst_42 [1] : vector<16x16xf32> to vector<16xf32>
    %105 = vector.shape_cast %104 : vector<16xf32> to vector<16x1xf32>
    %106 = vector.broadcast %105 : vector<16x1xf32> to vector<16x16xf32>
    %107 = arith.subf %103, %106 : vector<16x16xf32>
    %108 = math.exp %107 : vector<16x16xf32>
    %cst_43 = arith.constant dense<0.000000e+00> : vector<16xf32>
    %109 = vector.multi_reduction <add>, %108, %cst_43 [1] : vector<16x16xf32> to vector<16xf32>
    %110 = vector.shape_cast %109 : vector<16xf32> to vector<16x1xf32>
    %111 = tpu.reciprocal %110 {approx = true} : vector<16x1xf32> -> vector<16x1xf32>
    %112 = vector.broadcast %111 : vector<16x1xf32> to vector<16x16xf32>
    %113 = arith.mulf %108, %112 : vector<16x16xf32>
    %114 = arith.truncf %113 : vector<16x16xf32> to vector<16x16xbf16>
    %cst_44 = arith.constant dense<0.000000e+00> : vector<16x16xf32>
    %115 = tpu.matmul %114, %101, %cst_44 {dimension_numbers = #tpu.dot_dimension_numbers<[1], [0], [0], [1], [0, 0, 1, 1], [], []>} : vector<16x16xbf16>, vector<16x16xbf16>, vector<16x16xf32> -> vector<16x16xf32>
    %116 = tpu.concatenate %64, %81, %98, %115 in 1 : vector<16x16xf32>, vector<16x16xf32>, vector<16x16xf32>, vector<16x16xf32> -> vector<16x64xf32>
    %117 = vector.extract_strided_slice %35 {offsets = [0, 0], sizes = [64, 64], strides = [1, 1]} : vector<192x64xbf16> to vector<64x64xbf16>
    %118 = arith.truncf %116 : vector<16x64xf32> to vector<16x64xbf16>
    %cst_45 = arith.constant dense<0.000000e+00> : vector<16x64xf32>
    %119 = tpu.matmul %118, %117, %cst_45 {dimension_numbers = #tpu.dot_dimension_numbers<[1], [0], [0], [1], [0, 0, 1, 1], [], []>} : vector<16x64xbf16>, vector<64x64xbf16>, vector<16x64xf32> -> vector<16x64xf32>
    %120 = vector.broadcast %38 : vector<1x64xf32> to vector<16x64xf32>
    %121 = arith.addf %119, %120 : vector<16x64xf32>
    %122 = arith.addf %121, %31 : vector<16x64xf32>
    %cst_46 = arith.constant dense<0.000000e+00> : vector<16xf32>
    %123 = vector.multi_reduction <add>, %122, %cst_46 [1] : vector<16x64xf32> to vector<16xf32>
    %124 = vector.shape_cast %123 : vector<16xf32> to vector<16x1xf32>
    %cst_47 = arith.constant 6.400000e+01 : f32
    %125 = vector.broadcast %cst_47 : f32 to vector<16x1xf32>
    %126 = arith.divf %124, %125 : vector<16x1xf32>
    %127 = vector.broadcast %126 : vector<16x1xf32> to vector<16x64xf32>
    %128 = arith.subf %122, %127 : vector<16x64xf32>
    %129 = arith.mulf %128, %128 : vector<16x64xf32>
    %cst_48 = arith.constant dense<0.000000e+00> : vector<16xf32>
    %130 = vector.multi_reduction <add>, %129, %cst_48 [1] : vector<16x64xf32> to vector<16xf32>
    %131 = vector.shape_cast %130 : vector<16xf32> to vector<16x1xf32>
    %cst_49 = arith.constant 6.400000e+01 : f32
    %132 = vector.broadcast %cst_49 : f32 to vector<16x1xf32>
    %133 = arith.divf %131, %132 : vector<16x1xf32>
    %cst_50 = arith.constant 9.99999974E-6 : f32
    %134 = vector.broadcast %cst_50 : f32 to vector<16x1xf32>
    %135 = arith.addf %133, %134 : vector<16x1xf32>
    %136 = math.rsqrt %135 : vector<16x1xf32>
    %137 = vector.broadcast %136 : vector<16x1xf32> to vector<16x64xf32>
    %138 = arith.mulf %128, %137 : vector<16x64xf32>
    %139 = vector.broadcast %39 : vector<1x64xf32> to vector<16x64xf32>
    %140 = arith.mulf %138, %139 : vector<16x64xf32>
    %141 = vector.broadcast %40 : vector<1x64xf32> to vector<16x64xf32>
    %142 = arith.addf %140, %141 : vector<16x64xf32>
    %143 = vector.extract_strided_slice %35 {offsets = [64, 0], sizes = [64, 64], strides = [1, 1]} : vector<192x64xbf16> to vector<64x64xbf16>
    %144 = arith.truncf %142 : vector<16x64xf32> to vector<16x64xbf16>
    %cst_51 = arith.constant dense<0.000000e+00> : vector<16x64xf32>
    %145 = tpu.matmul %144, %143, %cst_51 {dimension_numbers = #tpu.dot_dimension_numbers<[1], [0], [0], [1], [0, 0, 1, 1], [], []>} : vector<16x64xbf16>, vector<64x64xbf16>, vector<16x64xf32> -> vector<16x64xf32>
    %146 = vector.broadcast %41 : vector<1x64xf32> to vector<16x64xf32>
    %147 = arith.addf %145, %146 : vector<16x64xf32>
    %cst_52 = arith.constant 0.000000e+00 : f32
    %148 = vector.broadcast %cst_52 : f32 to vector<16x64xf32>
    %149 = arith.maximumf %147, %148 : vector<16x64xf32>
    %150 = vector.extract_strided_slice %35 {offsets = [128, 0], sizes = [64, 64], strides = [1, 1]} : vector<192x64xbf16> to vector<64x64xbf16>
    %151 = arith.truncf %149 : vector<16x64xf32> to vector<16x64xbf16>
    %cst_53 = arith.constant dense<0.000000e+00> : vector<16x64xf32>
    %152 = tpu.matmul %151, %150, %cst_53 {dimension_numbers = #tpu.dot_dimension_numbers<[1], [0], [0], [1], [0, 0, 1, 1], [], []>} : vector<16x64xbf16>, vector<64x64xbf16>, vector<16x64xf32> -> vector<16x64xf32>
    %153 = vector.broadcast %42 : vector<1x64xf32> to vector<16x64xf32>
    %154 = arith.addf %152, %153 : vector<16x64xf32>
    %155 = arith.addf %154, %142 : vector<16x64xf32>
    %cst_54 = arith.constant dense<0.000000e+00> : vector<16xf32>
    %156 = vector.multi_reduction <add>, %155, %cst_54 [1] : vector<16x64xf32> to vector<16xf32>
    %157 = vector.shape_cast %156 : vector<16xf32> to vector<16x1xf32>
    %cst_55 = arith.constant 6.400000e+01 : f32
    %158 = vector.broadcast %cst_55 : f32 to vector<16x1xf32>
    %159 = arith.divf %157, %158 : vector<16x1xf32>
    %160 = vector.broadcast %159 : vector<16x1xf32> to vector<16x64xf32>
    %161 = arith.subf %155, %160 : vector<16x64xf32>
    %162 = arith.mulf %161, %161 : vector<16x64xf32>
    %cst_56 = arith.constant dense<0.000000e+00> : vector<16xf32>
    %163 = vector.multi_reduction <add>, %162, %cst_56 [1] : vector<16x64xf32> to vector<16xf32>
    %164 = vector.shape_cast %163 : vector<16xf32> to vector<16x1xf32>
    %cst_57 = arith.constant 6.400000e+01 : f32
    %165 = vector.broadcast %cst_57 : f32 to vector<16x1xf32>
    %166 = arith.divf %164, %165 : vector<16x1xf32>
    %cst_58 = arith.constant 9.99999974E-6 : f32
    %167 = vector.broadcast %cst_58 : f32 to vector<16x1xf32>
    %168 = arith.addf %166, %167 : vector<16x1xf32>
    %169 = math.rsqrt %168 : vector<16x1xf32>
    %170 = vector.broadcast %169 : vector<16x1xf32> to vector<16x64xf32>
    %171 = arith.mulf %161, %170 : vector<16x64xf32>
    %172 = vector.broadcast %43 : vector<1x64xf32> to vector<16x64xf32>
    %173 = arith.mulf %171, %172 : vector<16x64xf32>
    %174 = vector.broadcast %44 : vector<1x64xf32> to vector<16x64xf32>
    %175 = arith.addf %173, %174 : vector<16x64xf32>
    %c1_59 = arith.constant 1 : index
    %c0_60 = arith.constant 0 : index
    %c0_61 = arith.constant 0 : index
    %176 = vector.load %arg6[%c1_59, %c0_60, %c0_61] : memref<4x64x192xbf16, #tpu.memory_space<vmem>>, vector<1x64x192xbf16>
    %177 = vector.shape_cast %176 : vector<1x64x192xbf16> to vector<64x192xbf16>
    %c1_62 = arith.constant 1 : index
    %c0_63 = arith.constant 0 : index
    %c0_64 = arith.constant 0 : index
    %178 = vector.load %arg7[%c1_62, %c0_63, %c0_64] : memref<4x192x64xbf16, #tpu.memory_space<vmem>>, vector<1x192x64xbf16>
    %179 = vector.shape_cast %178 : vector<1x192x64xbf16> to vector<192x64xbf16>
    %c1_65 = arith.constant 1 : index
    %c0_66 = arith.constant 0 : index
    %c0_67 = arith.constant 0 : index
    %180 = vector.load %arg3[%c1_65, %c0_66, %c0_67] : memref<4x8x64xf32, #tpu.memory_space<vmem>>, vector<1x8x64xf32>
    %181 = vector.shape_cast %180 : vector<1x8x64xf32> to vector<8x64xf32>
    %182 = vector.extract_strided_slice %181 {offsets = [0, 0], sizes = [1, 64], strides = [1, 1]} : vector<8x64xf32> to vector<1x64xf32>
    %183 = vector.extract_strided_slice %181 {offsets = [1, 0], sizes = [1, 64], strides = [1, 1]} : vector<8x64xf32> to vector<1x64xf32>
    %184 = vector.extract_strided_slice %181 {offsets = [2, 0], sizes = [1, 64], strides = [1, 1]} : vector<8x64xf32> to vector<1x64xf32>
    %185 = vector.extract_strided_slice %181 {offsets = [3, 0], sizes = [1, 64], strides = [1, 1]} : vector<8x64xf32> to vector<1x64xf32>
    %186 = vector.extract_strided_slice %181 {offsets = [4, 0], sizes = [1, 64], strides = [1, 1]} : vector<8x64xf32> to vector<1x64xf32>
    %187 = vector.extract_strided_slice %181 {offsets = [5, 0], sizes = [1, 64], strides = [1, 1]} : vector<8x64xf32> to vector<1x64xf32>
    %188 = vector.extract_strided_slice %181 {offsets = [6, 0], sizes = [1, 64], strides = [1, 1]} : vector<8x64xf32> to vector<1x64xf32>
    %189 = arith.truncf %175 : vector<16x64xf32> to vector<16x64xbf16>
    %cst_68 = arith.constant dense<0.000000e+00> : vector<16x192xf32>
    %190 = tpu.matmul %189, %177, %cst_68 {dimension_numbers = #tpu.dot_dimension_numbers<[1], [0], [0], [1], [0, 0, 1, 1], [], []>} : vector<16x64xbf16>, vector<64x192xbf16>, vector<16x192xf32> -> vector<16x192xf32>
    %191 = arith.truncf %190 : vector<16x192xf32> to vector<16x192xbf16>
    %192 = vector.extract_strided_slice %191 {offsets = [0, 0], sizes = [16, 16], strides = [1, 1]} : vector<16x192xbf16> to vector<16x16xbf16>
    %193 = vector.extract_strided_slice %191 {offsets = [0, 64], sizes = [16, 16], strides = [1, 1]} : vector<16x192xbf16> to vector<16x16xbf16>
    %194 = vector.extract_strided_slice %191 {offsets = [0, 128], sizes = [16, 16], strides = [1, 1]} : vector<16x192xbf16> to vector<16x16xbf16>
    %cst_69 = arith.constant dense<0.000000e+00> : vector<16x16xf32>
    %195 = tpu.matmul %192, %193, %cst_69 {dimension_numbers = #tpu.dot_dimension_numbers<[1], [1], [0], [0], [0, 0, 1, 0], [], []>} : vector<16x16xbf16>, vector<16x16xbf16>, vector<16x16xf32> -> vector<16x16xf32>
    %196 = arith.addf %195, %9 : vector<16x16xf32>
    %cst_70 = arith.constant dense<0xFF800000> : vector<16xf32>
    %197 = vector.multi_reduction <maximumf>, %196, %cst_70 [1] : vector<16x16xf32> to vector<16xf32>
    %198 = vector.shape_cast %197 : vector<16xf32> to vector<16x1xf32>
    %199 = vector.broadcast %198 : vector<16x1xf32> to vector<16x16xf32>
    %200 = arith.subf %196, %199 : vector<16x16xf32>
    %201 = math.exp %200 : vector<16x16xf32>
    %cst_71 = arith.constant dense<0.000000e+00> : vector<16xf32>
    %202 = vector.multi_reduction <add>, %201, %cst_71 [1] : vector<16x16xf32> to vector<16xf32>
    %203 = vector.shape_cast %202 : vector<16xf32> to vector<16x1xf32>
    %204 = tpu.reciprocal %203 {approx = true} : vector<16x1xf32> -> vector<16x1xf32>
    %205 = vector.broadcast %204 : vector<16x1xf32> to vector<16x16xf32>
    %206 = arith.mulf %201, %205 : vector<16x16xf32>
    %207 = arith.truncf %206 : vector<16x16xf32> to vector<16x16xbf16>
    %cst_72 = arith.constant dense<0.000000e+00> : vector<16x16xf32>
    %208 = tpu.matmul %207, %194, %cst_72 {dimension_numbers = #tpu.dot_dimension_numbers<[1], [0], [0], [1], [0, 0, 1, 1], [], []>} : vector<16x16xbf16>, vector<16x16xbf16>, vector<16x16xf32> -> vector<16x16xf32>
    %209 = vector.extract_strided_slice %191 {offsets = [0, 16], sizes = [16, 16], strides = [1, 1]} : vector<16x192xbf16> to vector<16x16xbf16>
    %210 = vector.extract_strided_slice %191 {offsets = [0, 80], sizes = [16, 16], strides = [1, 1]} : vector<16x192xbf16> to vector<16x16xbf16>
    %211 = vector.extract_strided_slice %191 {offsets = [0, 144], sizes = [16, 16], strides = [1, 1]} : vector<16x192xbf16> to vector<16x16xbf16>
    %cst_73 = arith.constant dense<0.000000e+00> : vector<16x16xf32>
    %212 = tpu.matmul %209, %210, %cst_73 {dimension_numbers = #tpu.dot_dimension_numbers<[1], [1], [0], [0], [0, 0, 1, 0], [], []>} : vector<16x16xbf16>, vector<16x16xbf16>, vector<16x16xf32> -> vector<16x16xf32>
    %213 = arith.addf %212, %9 : vector<16x16xf32>
    %cst_74 = arith.constant dense<0xFF800000> : vector<16xf32>
    %214 = vector.multi_reduction <maximumf>, %213, %cst_74 [1] : vector<16x16xf32> to vector<16xf32>
    %215 = vector.shape_cast %214 : vector<16xf32> to vector<16x1xf32>
    %216 = vector.broadcast %215 : vector<16x1xf32> to vector<16x16xf32>
    %217 = arith.subf %213, %216 : vector<16x16xf32>
    %218 = math.exp %217 : vector<16x16xf32>
    %cst_75 = arith.constant dense<0.000000e+00> : vector<16xf32>
    %219 = vector.multi_reduction <add>, %218, %cst_75 [1] : vector<16x16xf32> to vector<16xf32>
    %220 = vector.shape_cast %219 : vector<16xf32> to vector<16x1xf32>
    %221 = tpu.reciprocal %220 {approx = true} : vector<16x1xf32> -> vector<16x1xf32>
    %222 = vector.broadcast %221 : vector<16x1xf32> to vector<16x16xf32>
    %223 = arith.mulf %218, %222 : vector<16x16xf32>
    %224 = arith.truncf %223 : vector<16x16xf32> to vector<16x16xbf16>
    %cst_76 = arith.constant dense<0.000000e+00> : vector<16x16xf32>
    %225 = tpu.matmul %224, %211, %cst_76 {dimension_numbers = #tpu.dot_dimension_numbers<[1], [0], [0], [1], [0, 0, 1, 1], [], []>} : vector<16x16xbf16>, vector<16x16xbf16>, vector<16x16xf32> -> vector<16x16xf32>
    %226 = vector.extract_strided_slice %191 {offsets = [0, 32], sizes = [16, 16], strides = [1, 1]} : vector<16x192xbf16> to vector<16x16xbf16>
    %227 = vector.extract_strided_slice %191 {offsets = [0, 96], sizes = [16, 16], strides = [1, 1]} : vector<16x192xbf16> to vector<16x16xbf16>
    %228 = vector.extract_strided_slice %191 {offsets = [0, 160], sizes = [16, 16], strides = [1, 1]} : vector<16x192xbf16> to vector<16x16xbf16>
    %cst_77 = arith.constant dense<0.000000e+00> : vector<16x16xf32>
    %229 = tpu.matmul %226, %227, %cst_77 {dimension_numbers = #tpu.dot_dimension_numbers<[1], [1], [0], [0], [0, 0, 1, 0], [], []>} : vector<16x16xbf16>, vector<16x16xbf16>, vector<16x16xf32> -> vector<16x16xf32>
    %230 = arith.addf %229, %9 : vector<16x16xf32>
    %cst_78 = arith.constant dense<0xFF800000> : vector<16xf32>
    %231 = vector.multi_reduction <maximumf>, %230, %cst_78 [1] : vector<16x16xf32> to vector<16xf32>
    %232 = vector.shape_cast %231 : vector<16xf32> to vector<16x1xf32>
    %233 = vector.broadcast %232 : vector<16x1xf32> to vector<16x16xf32>
    %234 = arith.subf %230, %233 : vector<16x16xf32>
    %235 = math.exp %234 : vector<16x16xf32>
    %cst_79 = arith.constant dense<0.000000e+00> : vector<16xf32>
    %236 = vector.multi_reduction <add>, %235, %cst_79 [1] : vector<16x16xf32> to vector<16xf32>
    %237 = vector.shape_cast %236 : vector<16xf32> to vector<16x1xf32>
    %238 = tpu.reciprocal %237 {approx = true} : vector<16x1xf32> -> vector<16x1xf32>
    %239 = vector.broadcast %238 : vector<16x1xf32> to vector<16x16xf32>
    %240 = arith.mulf %235, %239 : vector<16x16xf32>
    %241 = arith.truncf %240 : vector<16x16xf32> to vector<16x16xbf16>
    %cst_80 = arith.constant dense<0.000000e+00> : vector<16x16xf32>
    %242 = tpu.matmul %241, %228, %cst_80 {dimension_numbers = #tpu.dot_dimension_numbers<[1], [0], [0], [1], [0, 0, 1, 1], [], []>} : vector<16x16xbf16>, vector<16x16xbf16>, vector<16x16xf32> -> vector<16x16xf32>
    %243 = vector.extract_strided_slice %191 {offsets = [0, 48], sizes = [16, 16], strides = [1, 1]} : vector<16x192xbf16> to vector<16x16xbf16>
    %244 = vector.extract_strided_slice %191 {offsets = [0, 112], sizes = [16, 16], strides = [1, 1]} : vector<16x192xbf16> to vector<16x16xbf16>
    %245 = vector.extract_strided_slice %191 {offsets = [0, 176], sizes = [16, 16], strides = [1, 1]} : vector<16x192xbf16> to vector<16x16xbf16>
    %cst_81 = arith.constant dense<0.000000e+00> : vector<16x16xf32>
    %246 = tpu.matmul %243, %244, %cst_81 {dimension_numbers = #tpu.dot_dimension_numbers<[1], [1], [0], [0], [0, 0, 1, 0], [], []>} : vector<16x16xbf16>, vector<16x16xbf16>, vector<16x16xf32> -> vector<16x16xf32>
    %247 = arith.addf %246, %9 : vector<16x16xf32>
    %cst_82 = arith.constant dense<0xFF800000> : vector<16xf32>
    %248 = vector.multi_reduction <maximumf>, %247, %cst_82 [1] : vector<16x16xf32> to vector<16xf32>
    %249 = vector.shape_cast %248 : vector<16xf32> to vector<16x1xf32>
    %250 = vector.broadcast %249 : vector<16x1xf32> to vector<16x16xf32>
    %251 = arith.subf %247, %250 : vector<16x16xf32>
    %252 = math.exp %251 : vector<16x16xf32>
    %cst_83 = arith.constant dense<0.000000e+00> : vector<16xf32>
    %253 = vector.multi_reduction <add>, %252, %cst_83 [1] : vector<16x16xf32> to vector<16xf32>
    %254 = vector.shape_cast %253 : vector<16xf32> to vector<16x1xf32>
    %255 = tpu.reciprocal %254 {approx = true} : vector<16x1xf32> -> vector<16x1xf32>
    %256 = vector.broadcast %255 : vector<16x1xf32> to vector<16x16xf32>
    %257 = arith.mulf %252, %256 : vector<16x16xf32>
    %258 = arith.truncf %257 : vector<16x16xf32> to vector<16x16xbf16>
    %cst_84 = arith.constant dense<0.000000e+00> : vector<16x16xf32>
    %259 = tpu.matmul %258, %245, %cst_84 {dimension_numbers = #tpu.dot_dimension_numbers<[1], [0], [0], [1], [0, 0, 1, 1], [], []>} : vector<16x16xbf16>, vector<16x16xbf16>, vector<16x16xf32> -> vector<16x16xf32>
    %260 = tpu.concatenate %208, %225, %242, %259 in 1 : vector<16x16xf32>, vector<16x16xf32>, vector<16x16xf32>, vector<16x16xf32> -> vector<16x64xf32>
    %261 = vector.extract_strided_slice %179 {offsets = [0, 0], sizes = [64, 64], strides = [1, 1]} : vector<192x64xbf16> to vector<64x64xbf16>
    %262 = arith.truncf %260 : vector<16x64xf32> to vector<16x64xbf16>
    %cst_85 = arith.constant dense<0.000000e+00> : vector<16x64xf32>
    %263 = tpu.matmul %262, %261, %cst_85 {dimension_numbers = #tpu.dot_dimension_numbers<[1], [0], [0], [1], [0, 0, 1, 1], [], []>} : vector<16x64xbf16>, vector<64x64xbf16>, vector<16x64xf32> -> vector<16x64xf32>
    %264 = vector.broadcast %182 : vector<1x64xf32> to vector<16x64xf32>
    %265 = arith.addf %263, %264 : vector<16x64xf32>
    %266 = arith.addf %265, %175 : vector<16x64xf32>
    %cst_86 = arith.constant dense<0.000000e+00> : vector<16xf32>
    %267 = vector.multi_reduction <add>, %266, %cst_86 [1] : vector<16x64xf32> to vector<16xf32>
    %268 = vector.shape_cast %267 : vector<16xf32> to vector<16x1xf32>
    %cst_87 = arith.constant 6.400000e+01 : f32
    %269 = vector.broadcast %cst_87 : f32 to vector<16x1xf32>
    %270 = arith.divf %268, %269 : vector<16x1xf32>
    %271 = vector.broadcast %270 : vector<16x1xf32> to vector<16x64xf32>
    %272 = arith.subf %266, %271 : vector<16x64xf32>
    %273 = arith.mulf %272, %272 : vector<16x64xf32>
    %cst_88 = arith.constant dense<0.000000e+00> : vector<16xf32>
    %274 = vector.multi_reduction <add>, %273, %cst_88 [1] : vector<16x64xf32> to vector<16xf32>
    %275 = vector.shape_cast %274 : vector<16xf32> to vector<16x1xf32>
    %cst_89 = arith.constant 6.400000e+01 : f32
    %276 = vector.broadcast %cst_89 : f32 to vector<16x1xf32>
    %277 = arith.divf %275, %276 : vector<16x1xf32>
    %cst_90 = arith.constant 9.99999974E-6 : f32
    %278 = vector.broadcast %cst_90 : f32 to vector<16x1xf32>
    %279 = arith.addf %277, %278 : vector<16x1xf32>
    %280 = math.rsqrt %279 : vector<16x1xf32>
    %281 = vector.broadcast %280 : vector<16x1xf32> to vector<16x64xf32>
    %282 = arith.mulf %272, %281 : vector<16x64xf32>
    %283 = vector.broadcast %183 : vector<1x64xf32> to vector<16x64xf32>
    %284 = arith.mulf %282, %283 : vector<16x64xf32>
    %285 = vector.broadcast %184 : vector<1x64xf32> to vector<16x64xf32>
    %286 = arith.addf %284, %285 : vector<16x64xf32>
    %287 = vector.extract_strided_slice %179 {offsets = [64, 0], sizes = [64, 64], strides = [1, 1]} : vector<192x64xbf16> to vector<64x64xbf16>
    %288 = arith.truncf %286 : vector<16x64xf32> to vector<16x64xbf16>
    %cst_91 = arith.constant dense<0.000000e+00> : vector<16x64xf32>
    %289 = tpu.matmul %288, %287, %cst_91 {dimension_numbers = #tpu.dot_dimension_numbers<[1], [0], [0], [1], [0, 0, 1, 1], [], []>} : vector<16x64xbf16>, vector<64x64xbf16>, vector<16x64xf32> -> vector<16x64xf32>
    %290 = vector.broadcast %185 : vector<1x64xf32> to vector<16x64xf32>
    %291 = arith.addf %289, %290 : vector<16x64xf32>
    %cst_92 = arith.constant 0.000000e+00 : f32
    %292 = vector.broadcast %cst_92 : f32 to vector<16x64xf32>
    %293 = arith.maximumf %291, %292 : vector<16x64xf32>
    %294 = vector.extract_strided_slice %179 {offsets = [128, 0], sizes = [64, 64], strides = [1, 1]} : vector<192x64xbf16> to vector<64x64xbf16>
    %295 = arith.truncf %293 : vector<16x64xf32> to vector<16x64xbf16>
    %cst_93 = arith.constant dense<0.000000e+00> : vector<16x64xf32>
    %296 = tpu.matmul %295, %294, %cst_93 {dimension_numbers = #tpu.dot_dimension_numbers<[1], [0], [0], [1], [0, 0, 1, 1], [], []>} : vector<16x64xbf16>, vector<64x64xbf16>, vector<16x64xf32> -> vector<16x64xf32>
    %297 = vector.broadcast %186 : vector<1x64xf32> to vector<16x64xf32>
    %298 = arith.addf %296, %297 : vector<16x64xf32>
    %299 = arith.addf %298, %286 : vector<16x64xf32>
    %cst_94 = arith.constant dense<0.000000e+00> : vector<16xf32>
    %300 = vector.multi_reduction <add>, %299, %cst_94 [1] : vector<16x64xf32> to vector<16xf32>
    %301 = vector.shape_cast %300 : vector<16xf32> to vector<16x1xf32>
    %cst_95 = arith.constant 6.400000e+01 : f32
    %302 = vector.broadcast %cst_95 : f32 to vector<16x1xf32>
    %303 = arith.divf %301, %302 : vector<16x1xf32>
    %304 = vector.broadcast %303 : vector<16x1xf32> to vector<16x64xf32>
    %305 = arith.subf %299, %304 : vector<16x64xf32>
    %306 = arith.mulf %305, %305 : vector<16x64xf32>
    %cst_96 = arith.constant dense<0.000000e+00> : vector<16xf32>
    %307 = vector.multi_reduction <add>, %306, %cst_96 [1] : vector<16x64xf32> to vector<16xf32>
    %308 = vector.shape_cast %307 : vector<16xf32> to vector<16x1xf32>
    %cst_97 = arith.constant 6.400000e+01 : f32
    %309 = vector.broadcast %cst_97 : f32 to vector<16x1xf32>
    %310 = arith.divf %308, %309 : vector<16x1xf32>
    %cst_98 = arith.constant 9.99999974E-6 : f32
    %311 = vector.broadcast %cst_98 : f32 to vector<16x1xf32>
    %312 = arith.addf %310, %311 : vector<16x1xf32>
    %313 = math.rsqrt %312 : vector<16x1xf32>
    %314 = vector.broadcast %313 : vector<16x1xf32> to vector<16x64xf32>
    %315 = arith.mulf %305, %314 : vector<16x64xf32>
    %316 = vector.broadcast %187 : vector<1x64xf32> to vector<16x64xf32>
    %317 = arith.mulf %315, %316 : vector<16x64xf32>
    %318 = vector.broadcast %188 : vector<1x64xf32> to vector<16x64xf32>
    %319 = arith.addf %317, %318 : vector<16x64xf32>
    %c2 = arith.constant 2 : index
    %c0_99 = arith.constant 0 : index
    %c0_100 = arith.constant 0 : index
    %320 = vector.load %arg6[%c2, %c0_99, %c0_100] : memref<4x64x192xbf16, #tpu.memory_space<vmem>>, vector<1x64x192xbf16>
    %321 = vector.shape_cast %320 : vector<1x64x192xbf16> to vector<64x192xbf16>
    %c2_101 = arith.constant 2 : index
    %c0_102 = arith.constant 0 : index
    %c0_103 = arith.constant 0 : index
    %322 = vector.load %arg7[%c2_101, %c0_102, %c0_103] : memref<4x192x64xbf16, #tpu.memory_space<vmem>>, vector<1x192x64xbf16>
    %323 = vector.shape_cast %322 : vector<1x192x64xbf16> to vector<192x64xbf16>
    %c2_104 = arith.constant 2 : index
    %c0_105 = arith.constant 0 : index
    %c0_106 = arith.constant 0 : index
    %324 = vector.load %arg3[%c2_104, %c0_105, %c0_106] : memref<4x8x64xf32, #tpu.memory_space<vmem>>, vector<1x8x64xf32>
    %325 = vector.shape_cast %324 : vector<1x8x64xf32> to vector<8x64xf32>
    %326 = vector.extract_strided_slice %325 {offsets = [0, 0], sizes = [1, 64], strides = [1, 1]} : vector<8x64xf32> to vector<1x64xf32>
    %327 = vector.extract_strided_slice %325 {offsets = [1, 0], sizes = [1, 64], strides = [1, 1]} : vector<8x64xf32> to vector<1x64xf32>
    %328 = vector.extract_strided_slice %325 {offsets = [2, 0], sizes = [1, 64], strides = [1, 1]} : vector<8x64xf32> to vector<1x64xf32>
    %329 = vector.extract_strided_slice %325 {offsets = [3, 0], sizes = [1, 64], strides = [1, 1]} : vector<8x64xf32> to vector<1x64xf32>
    %330 = vector.extract_strided_slice %325 {offsets = [4, 0], sizes = [1, 64], strides = [1, 1]} : vector<8x64xf32> to vector<1x64xf32>
    %331 = vector.extract_strided_slice %325 {offsets = [5, 0], sizes = [1, 64], strides = [1, 1]} : vector<8x64xf32> to vector<1x64xf32>
    %332 = vector.extract_strided_slice %325 {offsets = [6, 0], sizes = [1, 64], strides = [1, 1]} : vector<8x64xf32> to vector<1x64xf32>
    %333 = arith.truncf %319 : vector<16x64xf32> to vector<16x64xbf16>
    %cst_107 = arith.constant dense<0.000000e+00> : vector<16x192xf32>
    %334 = tpu.matmul %333, %321, %cst_107 {dimension_numbers = #tpu.dot_dimension_numbers<[1], [0], [0], [1], [0, 0, 1, 1], [], []>} : vector<16x64xbf16>, vector<64x192xbf16>, vector<16x192xf32> -> vector<16x192xf32>
    %335 = arith.truncf %334 : vector<16x192xf32> to vector<16x192xbf16>
    %336 = vector.extract_strided_slice %335 {offsets = [0, 0], sizes = [16, 16], strides = [1, 1]} : vector<16x192xbf16> to vector<16x16xbf16>
    %337 = vector.extract_strided_slice %335 {offsets = [0, 64], sizes = [16, 16], strides = [1, 1]} : vector<16x192xbf16> to vector<16x16xbf16>
    %338 = vector.extract_strided_slice %335 {offsets = [0, 128], sizes = [16, 16], strides = [1, 1]} : vector<16x192xbf16> to vector<16x16xbf16>
    %cst_108 = arith.constant dense<0.000000e+00> : vector<16x16xf32>
    %339 = tpu.matmul %336, %337, %cst_108 {dimension_numbers = #tpu.dot_dimension_numbers<[1], [1], [0], [0], [0, 0, 1, 0], [], []>} : vector<16x16xbf16>, vector<16x16xbf16>, vector<16x16xf32> -> vector<16x16xf32>
    %340 = arith.addf %339, %9 : vector<16x16xf32>
    %cst_109 = arith.constant dense<0xFF800000> : vector<16xf32>
    %341 = vector.multi_reduction <maximumf>, %340, %cst_109 [1] : vector<16x16xf32> to vector<16xf32>
    %342 = vector.shape_cast %341 : vector<16xf32> to vector<16x1xf32>
    %343 = vector.broadcast %342 : vector<16x1xf32> to vector<16x16xf32>
    %344 = arith.subf %340, %343 : vector<16x16xf32>
    %345 = math.exp %344 : vector<16x16xf32>
    %cst_110 = arith.constant dense<0.000000e+00> : vector<16xf32>
    %346 = vector.multi_reduction <add>, %345, %cst_110 [1] : vector<16x16xf32> to vector<16xf32>
    %347 = vector.shape_cast %346 : vector<16xf32> to vector<16x1xf32>
    %348 = tpu.reciprocal %347 {approx = true} : vector<16x1xf32> -> vector<16x1xf32>
    %349 = vector.broadcast %348 : vector<16x1xf32> to vector<16x16xf32>
    %350 = arith.mulf %345, %349 : vector<16x16xf32>
    %351 = arith.truncf %350 : vector<16x16xf32> to vector<16x16xbf16>
    %cst_111 = arith.constant dense<0.000000e+00> : vector<16x16xf32>
    %352 = tpu.matmul %351, %338, %cst_111 {dimension_numbers = #tpu.dot_dimension_numbers<[1], [0], [0], [1], [0, 0, 1, 1], [], []>} : vector<16x16xbf16>, vector<16x16xbf16>, vector<16x16xf32> -> vector<16x16xf32>
    %353 = vector.extract_strided_slice %335 {offsets = [0, 16], sizes = [16, 16], strides = [1, 1]} : vector<16x192xbf16> to vector<16x16xbf16>
    %354 = vector.extract_strided_slice %335 {offsets = [0, 80], sizes = [16, 16], strides = [1, 1]} : vector<16x192xbf16> to vector<16x16xbf16>
    %355 = vector.extract_strided_slice %335 {offsets = [0, 144], sizes = [16, 16], strides = [1, 1]} : vector<16x192xbf16> to vector<16x16xbf16>
    %cst_112 = arith.constant dense<0.000000e+00> : vector<16x16xf32>
    %356 = tpu.matmul %353, %354, %cst_112 {dimension_numbers = #tpu.dot_dimension_numbers<[1], [1], [0], [0], [0, 0, 1, 0], [], []>} : vector<16x16xbf16>, vector<16x16xbf16>, vector<16x16xf32> -> vector<16x16xf32>
    %357 = arith.addf %356, %9 : vector<16x16xf32>
    %cst_113 = arith.constant dense<0xFF800000> : vector<16xf32>
    %358 = vector.multi_reduction <maximumf>, %357, %cst_113 [1] : vector<16x16xf32> to vector<16xf32>
    %359 = vector.shape_cast %358 : vector<16xf32> to vector<16x1xf32>
    %360 = vector.broadcast %359 : vector<16x1xf32> to vector<16x16xf32>
    %361 = arith.subf %357, %360 : vector<16x16xf32>
    %362 = math.exp %361 : vector<16x16xf32>
    %cst_114 = arith.constant dense<0.000000e+00> : vector<16xf32>
    %363 = vector.multi_reduction <add>, %362, %cst_114 [1] : vector<16x16xf32> to vector<16xf32>
    %364 = vector.shape_cast %363 : vector<16xf32> to vector<16x1xf32>
    %365 = tpu.reciprocal %364 {approx = true} : vector<16x1xf32> -> vector<16x1xf32>
    %366 = vector.broadcast %365 : vector<16x1xf32> to vector<16x16xf32>
    %367 = arith.mulf %362, %366 : vector<16x16xf32>
    %368 = arith.truncf %367 : vector<16x16xf32> to vector<16x16xbf16>
    %cst_115 = arith.constant dense<0.000000e+00> : vector<16x16xf32>
    %369 = tpu.matmul %368, %355, %cst_115 {dimension_numbers = #tpu.dot_dimension_numbers<[1], [0], [0], [1], [0, 0, 1, 1], [], []>} : vector<16x16xbf16>, vector<16x16xbf16>, vector<16x16xf32> -> vector<16x16xf32>
    %370 = vector.extract_strided_slice %335 {offsets = [0, 32], sizes = [16, 16], strides = [1, 1]} : vector<16x192xbf16> to vector<16x16xbf16>
    %371 = vector.extract_strided_slice %335 {offsets = [0, 96], sizes = [16, 16], strides = [1, 1]} : vector<16x192xbf16> to vector<16x16xbf16>
    %372 = vector.extract_strided_slice %335 {offsets = [0, 160], sizes = [16, 16], strides = [1, 1]} : vector<16x192xbf16> to vector<16x16xbf16>
    %cst_116 = arith.constant dense<0.000000e+00> : vector<16x16xf32>
    %373 = tpu.matmul %370, %371, %cst_116 {dimension_numbers = #tpu.dot_dimension_numbers<[1], [1], [0], [0], [0, 0, 1, 0], [], []>} : vector<16x16xbf16>, vector<16x16xbf16>, vector<16x16xf32> -> vector<16x16xf32>
    %374 = arith.addf %373, %9 : vector<16x16xf32>
    %cst_117 = arith.constant dense<0xFF800000> : vector<16xf32>
    %375 = vector.multi_reduction <maximumf>, %374, %cst_117 [1] : vector<16x16xf32> to vector<16xf32>
    %376 = vector.shape_cast %375 : vector<16xf32> to vector<16x1xf32>
    %377 = vector.broadcast %376 : vector<16x1xf32> to vector<16x16xf32>
    %378 = arith.subf %374, %377 : vector<16x16xf32>
    %379 = math.exp %378 : vector<16x16xf32>
    %cst_118 = arith.constant dense<0.000000e+00> : vector<16xf32>
    %380 = vector.multi_reduction <add>, %379, %cst_118 [1] : vector<16x16xf32> to vector<16xf32>
    %381 = vector.shape_cast %380 : vector<16xf32> to vector<16x1xf32>
    %382 = tpu.reciprocal %381 {approx = true} : vector<16x1xf32> -> vector<16x1xf32>
    %383 = vector.broadcast %382 : vector<16x1xf32> to vector<16x16xf32>
    %384 = arith.mulf %379, %383 : vector<16x16xf32>
    %385 = arith.truncf %384 : vector<16x16xf32> to vector<16x16xbf16>
    %cst_119 = arith.constant dense<0.000000e+00> : vector<16x16xf32>
    %386 = tpu.matmul %385, %372, %cst_119 {dimension_numbers = #tpu.dot_dimension_numbers<[1], [0], [0], [1], [0, 0, 1, 1], [], []>} : vector<16x16xbf16>, vector<16x16xbf16>, vector<16x16xf32> -> vector<16x16xf32>
    %387 = vector.extract_strided_slice %335 {offsets = [0, 48], sizes = [16, 16], strides = [1, 1]} : vector<16x192xbf16> to vector<16x16xbf16>
    %388 = vector.extract_strided_slice %335 {offsets = [0, 112], sizes = [16, 16], strides = [1, 1]} : vector<16x192xbf16> to vector<16x16xbf16>
    %389 = vector.extract_strided_slice %335 {offsets = [0, 176], sizes = [16, 16], strides = [1, 1]} : vector<16x192xbf16> to vector<16x16xbf16>
    %cst_120 = arith.constant dense<0.000000e+00> : vector<16x16xf32>
    %390 = tpu.matmul %387, %388, %cst_120 {dimension_numbers = #tpu.dot_dimension_numbers<[1], [1], [0], [0], [0, 0, 1, 0], [], []>} : vector<16x16xbf16>, vector<16x16xbf16>, vector<16x16xf32> -> vector<16x16xf32>
    %391 = arith.addf %390, %9 : vector<16x16xf32>
    %cst_121 = arith.constant dense<0xFF800000> : vector<16xf32>
    %392 = vector.multi_reduction <maximumf>, %391, %cst_121 [1] : vector<16x16xf32> to vector<16xf32>
    %393 = vector.shape_cast %392 : vector<16xf32> to vector<16x1xf32>
    %394 = vector.broadcast %393 : vector<16x1xf32> to vector<16x16xf32>
    %395 = arith.subf %391, %394 : vector<16x16xf32>
    %396 = math.exp %395 : vector<16x16xf32>
    %cst_122 = arith.constant dense<0.000000e+00> : vector<16xf32>
    %397 = vector.multi_reduction <add>, %396, %cst_122 [1] : vector<16x16xf32> to vector<16xf32>
    %398 = vector.shape_cast %397 : vector<16xf32> to vector<16x1xf32>
    %399 = tpu.reciprocal %398 {approx = true} : vector<16x1xf32> -> vector<16x1xf32>
    %400 = vector.broadcast %399 : vector<16x1xf32> to vector<16x16xf32>
    %401 = arith.mulf %396, %400 : vector<16x16xf32>
    %402 = arith.truncf %401 : vector<16x16xf32> to vector<16x16xbf16>
    %cst_123 = arith.constant dense<0.000000e+00> : vector<16x16xf32>
    %403 = tpu.matmul %402, %389, %cst_123 {dimension_numbers = #tpu.dot_dimension_numbers<[1], [0], [0], [1], [0, 0, 1, 1], [], []>} : vector<16x16xbf16>, vector<16x16xbf16>, vector<16x16xf32> -> vector<16x16xf32>
    %404 = tpu.concatenate %352, %369, %386, %403 in 1 : vector<16x16xf32>, vector<16x16xf32>, vector<16x16xf32>, vector<16x16xf32> -> vector<16x64xf32>
    %405 = vector.extract_strided_slice %323 {offsets = [0, 0], sizes = [64, 64], strides = [1, 1]} : vector<192x64xbf16> to vector<64x64xbf16>
    %406 = arith.truncf %404 : vector<16x64xf32> to vector<16x64xbf16>
    %cst_124 = arith.constant dense<0.000000e+00> : vector<16x64xf32>
    %407 = tpu.matmul %406, %405, %cst_124 {dimension_numbers = #tpu.dot_dimension_numbers<[1], [0], [0], [1], [0, 0, 1, 1], [], []>} : vector<16x64xbf16>, vector<64x64xbf16>, vector<16x64xf32> -> vector<16x64xf32>
    %408 = vector.broadcast %326 : vector<1x64xf32> to vector<16x64xf32>
    %409 = arith.addf %407, %408 : vector<16x64xf32>
    %410 = arith.addf %409, %319 : vector<16x64xf32>
    %cst_125 = arith.constant dense<0.000000e+00> : vector<16xf32>
    %411 = vector.multi_reduction <add>, %410, %cst_125 [1] : vector<16x64xf32> to vector<16xf32>
    %412 = vector.shape_cast %411 : vector<16xf32> to vector<16x1xf32>
    %cst_126 = arith.constant 6.400000e+01 : f32
    %413 = vector.broadcast %cst_126 : f32 to vector<16x1xf32>
    %414 = arith.divf %412, %413 : vector<16x1xf32>
    %415 = vector.broadcast %414 : vector<16x1xf32> to vector<16x64xf32>
    %416 = arith.subf %410, %415 : vector<16x64xf32>
    %417 = arith.mulf %416, %416 : vector<16x64xf32>
    %cst_127 = arith.constant dense<0.000000e+00> : vector<16xf32>
    %418 = vector.multi_reduction <add>, %417, %cst_127 [1] : vector<16x64xf32> to vector<16xf32>
    %419 = vector.shape_cast %418 : vector<16xf32> to vector<16x1xf32>
    %cst_128 = arith.constant 6.400000e+01 : f32
    %420 = vector.broadcast %cst_128 : f32 to vector<16x1xf32>
    %421 = arith.divf %419, %420 : vector<16x1xf32>
    %cst_129 = arith.constant 9.99999974E-6 : f32
    %422 = vector.broadcast %cst_129 : f32 to vector<16x1xf32>
    %423 = arith.addf %421, %422 : vector<16x1xf32>
    %424 = math.rsqrt %423 : vector<16x1xf32>
    %425 = vector.broadcast %424 : vector<16x1xf32> to vector<16x64xf32>
    %426 = arith.mulf %416, %425 : vector<16x64xf32>
    %427 = vector.broadcast %327 : vector<1x64xf32> to vector<16x64xf32>
    %428 = arith.mulf %426, %427 : vector<16x64xf32>
    %429 = vector.broadcast %328 : vector<1x64xf32> to vector<16x64xf32>
    %430 = arith.addf %428, %429 : vector<16x64xf32>
    %431 = vector.extract_strided_slice %323 {offsets = [64, 0], sizes = [64, 64], strides = [1, 1]} : vector<192x64xbf16> to vector<64x64xbf16>
    %432 = arith.truncf %430 : vector<16x64xf32> to vector<16x64xbf16>
    %cst_130 = arith.constant dense<0.000000e+00> : vector<16x64xf32>
    %433 = tpu.matmul %432, %431, %cst_130 {dimension_numbers = #tpu.dot_dimension_numbers<[1], [0], [0], [1], [0, 0, 1, 1], [], []>} : vector<16x64xbf16>, vector<64x64xbf16>, vector<16x64xf32> -> vector<16x64xf32>
    %434 = vector.broadcast %329 : vector<1x64xf32> to vector<16x64xf32>
    %435 = arith.addf %433, %434 : vector<16x64xf32>
    %cst_131 = arith.constant 0.000000e+00 : f32
    %436 = vector.broadcast %cst_131 : f32 to vector<16x64xf32>
    %437 = arith.maximumf %435, %436 : vector<16x64xf32>
    %438 = vector.extract_strided_slice %323 {offsets = [128, 0], sizes = [64, 64], strides = [1, 1]} : vector<192x64xbf16> to vector<64x64xbf16>
    %439 = arith.truncf %437 : vector<16x64xf32> to vector<16x64xbf16>
    %cst_132 = arith.constant dense<0.000000e+00> : vector<16x64xf32>
    %440 = tpu.matmul %439, %438, %cst_132 {dimension_numbers = #tpu.dot_dimension_numbers<[1], [0], [0], [1], [0, 0, 1, 1], [], []>} : vector<16x64xbf16>, vector<64x64xbf16>, vector<16x64xf32> -> vector<16x64xf32>
    %441 = vector.broadcast %330 : vector<1x64xf32> to vector<16x64xf32>
    %442 = arith.addf %440, %441 : vector<16x64xf32>
    %443 = arith.addf %442, %430 : vector<16x64xf32>
    %cst_133 = arith.constant dense<0.000000e+00> : vector<16xf32>
    %444 = vector.multi_reduction <add>, %443, %cst_133 [1] : vector<16x64xf32> to vector<16xf32>
    %445 = vector.shape_cast %444 : vector<16xf32> to vector<16x1xf32>
    %cst_134 = arith.constant 6.400000e+01 : f32
    %446 = vector.broadcast %cst_134 : f32 to vector<16x1xf32>
    %447 = arith.divf %445, %446 : vector<16x1xf32>
    %448 = vector.broadcast %447 : vector<16x1xf32> to vector<16x64xf32>
    %449 = arith.subf %443, %448 : vector<16x64xf32>
    %450 = arith.mulf %449, %449 : vector<16x64xf32>
    %cst_135 = arith.constant dense<0.000000e+00> : vector<16xf32>
    %451 = vector.multi_reduction <add>, %450, %cst_135 [1] : vector<16x64xf32> to vector<16xf32>
    %452 = vector.shape_cast %451 : vector<16xf32> to vector<16x1xf32>
    %cst_136 = arith.constant 6.400000e+01 : f32
    %453 = vector.broadcast %cst_136 : f32 to vector<16x1xf32>
    %454 = arith.divf %452, %453 : vector<16x1xf32>
    %cst_137 = arith.constant 9.99999974E-6 : f32
    %455 = vector.broadcast %cst_137 : f32 to vector<16x1xf32>
    %456 = arith.addf %454, %455 : vector<16x1xf32>
    %457 = math.rsqrt %456 : vector<16x1xf32>
    %458 = vector.broadcast %457 : vector<16x1xf32> to vector<16x64xf32>
    %459 = arith.mulf %449, %458 : vector<16x64xf32>
    %460 = vector.broadcast %331 : vector<1x64xf32> to vector<16x64xf32>
    %461 = arith.mulf %459, %460 : vector<16x64xf32>
    %462 = vector.broadcast %332 : vector<1x64xf32> to vector<16x64xf32>
    %463 = arith.addf %461, %462 : vector<16x64xf32>
    %c3 = arith.constant 3 : index
    %c0_138 = arith.constant 0 : index
    %c0_139 = arith.constant 0 : index
    %464 = vector.load %arg6[%c3, %c0_138, %c0_139] : memref<4x64x192xbf16, #tpu.memory_space<vmem>>, vector<1x64x192xbf16>
    %465 = vector.shape_cast %464 : vector<1x64x192xbf16> to vector<64x192xbf16>
    %c3_140 = arith.constant 3 : index
    %c0_141 = arith.constant 0 : index
    %c0_142 = arith.constant 0 : index
    %466 = vector.load %arg7[%c3_140, %c0_141, %c0_142] : memref<4x192x64xbf16, #tpu.memory_space<vmem>>, vector<1x192x64xbf16>
    %467 = vector.shape_cast %466 : vector<1x192x64xbf16> to vector<192x64xbf16>
    %c3_143 = arith.constant 3 : index
    %c0_144 = arith.constant 0 : index
    %c0_145 = arith.constant 0 : index
    %468 = vector.load %arg3[%c3_143, %c0_144, %c0_145] : memref<4x8x64xf32, #tpu.memory_space<vmem>>, vector<1x8x64xf32>
    %469 = vector.shape_cast %468 : vector<1x8x64xf32> to vector<8x64xf32>
    %470 = vector.extract_strided_slice %469 {offsets = [0, 0], sizes = [1, 64], strides = [1, 1]} : vector<8x64xf32> to vector<1x64xf32>
    %471 = vector.extract_strided_slice %469 {offsets = [1, 0], sizes = [1, 64], strides = [1, 1]} : vector<8x64xf32> to vector<1x64xf32>
    %472 = vector.extract_strided_slice %469 {offsets = [2, 0], sizes = [1, 64], strides = [1, 1]} : vector<8x64xf32> to vector<1x64xf32>
    %473 = vector.extract_strided_slice %469 {offsets = [3, 0], sizes = [1, 64], strides = [1, 1]} : vector<8x64xf32> to vector<1x64xf32>
    %474 = vector.extract_strided_slice %469 {offsets = [4, 0], sizes = [1, 64], strides = [1, 1]} : vector<8x64xf32> to vector<1x64xf32>
    %475 = vector.extract_strided_slice %469 {offsets = [5, 0], sizes = [1, 64], strides = [1, 1]} : vector<8x64xf32> to vector<1x64xf32>
    %476 = vector.extract_strided_slice %469 {offsets = [6, 0], sizes = [1, 64], strides = [1, 1]} : vector<8x64xf32> to vector<1x64xf32>
    %477 = arith.truncf %463 : vector<16x64xf32> to vector<16x64xbf16>
    %cst_146 = arith.constant dense<0.000000e+00> : vector<16x192xf32>
    %478 = tpu.matmul %477, %465, %cst_146 {dimension_numbers = #tpu.dot_dimension_numbers<[1], [0], [0], [1], [0, 0, 1, 1], [], []>} : vector<16x64xbf16>, vector<64x192xbf16>, vector<16x192xf32> -> vector<16x192xf32>
    %479 = arith.truncf %478 : vector<16x192xf32> to vector<16x192xbf16>
    %480 = vector.extract_strided_slice %479 {offsets = [0, 0], sizes = [16, 16], strides = [1, 1]} : vector<16x192xbf16> to vector<16x16xbf16>
    %481 = vector.extract_strided_slice %479 {offsets = [0, 64], sizes = [16, 16], strides = [1, 1]} : vector<16x192xbf16> to vector<16x16xbf16>
    %482 = vector.extract_strided_slice %479 {offsets = [0, 128], sizes = [16, 16], strides = [1, 1]} : vector<16x192xbf16> to vector<16x16xbf16>
    %cst_147 = arith.constant dense<0.000000e+00> : vector<16x16xf32>
    %483 = tpu.matmul %480, %481, %cst_147 {dimension_numbers = #tpu.dot_dimension_numbers<[1], [1], [0], [0], [0, 0, 1, 0], [], []>} : vector<16x16xbf16>, vector<16x16xbf16>, vector<16x16xf32> -> vector<16x16xf32>
    %484 = arith.addf %483, %9 : vector<16x16xf32>
    %cst_148 = arith.constant dense<0xFF800000> : vector<16xf32>
    %485 = vector.multi_reduction <maximumf>, %484, %cst_148 [1] : vector<16x16xf32> to vector<16xf32>
    %486 = vector.shape_cast %485 : vector<16xf32> to vector<16x1xf32>
    %487 = vector.broadcast %486 : vector<16x1xf32> to vector<16x16xf32>
    %488 = arith.subf %484, %487 : vector<16x16xf32>
    %489 = math.exp %488 : vector<16x16xf32>
    %cst_149 = arith.constant dense<0.000000e+00> : vector<16xf32>
    %490 = vector.multi_reduction <add>, %489, %cst_149 [1] : vector<16x16xf32> to vector<16xf32>
    %491 = vector.shape_cast %490 : vector<16xf32> to vector<16x1xf32>
    %492 = tpu.reciprocal %491 {approx = true} : vector<16x1xf32> -> vector<16x1xf32>
    %493 = vector.broadcast %492 : vector<16x1xf32> to vector<16x16xf32>
    %494 = arith.mulf %489, %493 : vector<16x16xf32>
    %495 = arith.truncf %494 : vector<16x16xf32> to vector<16x16xbf16>
    %cst_150 = arith.constant dense<0.000000e+00> : vector<16x16xf32>
    %496 = tpu.matmul %495, %482, %cst_150 {dimension_numbers = #tpu.dot_dimension_numbers<[1], [0], [0], [1], [0, 0, 1, 1], [], []>} : vector<16x16xbf16>, vector<16x16xbf16>, vector<16x16xf32> -> vector<16x16xf32>
    %497 = vector.extract_strided_slice %479 {offsets = [0, 16], sizes = [16, 16], strides = [1, 1]} : vector<16x192xbf16> to vector<16x16xbf16>
    %498 = vector.extract_strided_slice %479 {offsets = [0, 80], sizes = [16, 16], strides = [1, 1]} : vector<16x192xbf16> to vector<16x16xbf16>
    %499 = vector.extract_strided_slice %479 {offsets = [0, 144], sizes = [16, 16], strides = [1, 1]} : vector<16x192xbf16> to vector<16x16xbf16>
    %cst_151 = arith.constant dense<0.000000e+00> : vector<16x16xf32>
    %500 = tpu.matmul %497, %498, %cst_151 {dimension_numbers = #tpu.dot_dimension_numbers<[1], [1], [0], [0], [0, 0, 1, 0], [], []>} : vector<16x16xbf16>, vector<16x16xbf16>, vector<16x16xf32> -> vector<16x16xf32>
    %501 = arith.addf %500, %9 : vector<16x16xf32>
    %cst_152 = arith.constant dense<0xFF800000> : vector<16xf32>
    %502 = vector.multi_reduction <maximumf>, %501, %cst_152 [1] : vector<16x16xf32> to vector<16xf32>
    %503 = vector.shape_cast %502 : vector<16xf32> to vector<16x1xf32>
    %504 = vector.broadcast %503 : vector<16x1xf32> to vector<16x16xf32>
    %505 = arith.subf %501, %504 : vector<16x16xf32>
    %506 = math.exp %505 : vector<16x16xf32>
    %cst_153 = arith.constant dense<0.000000e+00> : vector<16xf32>
    %507 = vector.multi_reduction <add>, %506, %cst_153 [1] : vector<16x16xf32> to vector<16xf32>
    %508 = vector.shape_cast %507 : vector<16xf32> to vector<16x1xf32>
    %509 = tpu.reciprocal %508 {approx = true} : vector<16x1xf32> -> vector<16x1xf32>
    %510 = vector.broadcast %509 : vector<16x1xf32> to vector<16x16xf32>
    %511 = arith.mulf %506, %510 : vector<16x16xf32>
    %512 = arith.truncf %511 : vector<16x16xf32> to vector<16x16xbf16>
    %cst_154 = arith.constant dense<0.000000e+00> : vector<16x16xf32>
    %513 = tpu.matmul %512, %499, %cst_154 {dimension_numbers = #tpu.dot_dimension_numbers<[1], [0], [0], [1], [0, 0, 1, 1], [], []>} : vector<16x16xbf16>, vector<16x16xbf16>, vector<16x16xf32> -> vector<16x16xf32>
    %514 = vector.extract_strided_slice %479 {offsets = [0, 32], sizes = [16, 16], strides = [1, 1]} : vector<16x192xbf16> to vector<16x16xbf16>
    %515 = vector.extract_strided_slice %479 {offsets = [0, 96], sizes = [16, 16], strides = [1, 1]} : vector<16x192xbf16> to vector<16x16xbf16>
    %516 = vector.extract_strided_slice %479 {offsets = [0, 160], sizes = [16, 16], strides = [1, 1]} : vector<16x192xbf16> to vector<16x16xbf16>
    %cst_155 = arith.constant dense<0.000000e+00> : vector<16x16xf32>
    %517 = tpu.matmul %514, %515, %cst_155 {dimension_numbers = #tpu.dot_dimension_numbers<[1], [1], [0], [0], [0, 0, 1, 0], [], []>} : vector<16x16xbf16>, vector<16x16xbf16>, vector<16x16xf32> -> vector<16x16xf32>
    %518 = arith.addf %517, %9 : vector<16x16xf32>
    %cst_156 = arith.constant dense<0xFF800000> : vector<16xf32>
    %519 = vector.multi_reduction <maximumf>, %518, %cst_156 [1] : vector<16x16xf32> to vector<16xf32>
    %520 = vector.shape_cast %519 : vector<16xf32> to vector<16x1xf32>
    %521 = vector.broadcast %520 : vector<16x1xf32> to vector<16x16xf32>
    %522 = arith.subf %518, %521 : vector<16x16xf32>
    %523 = math.exp %522 : vector<16x16xf32>
    %cst_157 = arith.constant dense<0.000000e+00> : vector<16xf32>
    %524 = vector.multi_reduction <add>, %523, %cst_157 [1] : vector<16x16xf32> to vector<16xf32>
    %525 = vector.shape_cast %524 : vector<16xf32> to vector<16x1xf32>
    %526 = tpu.reciprocal %525 {approx = true} : vector<16x1xf32> -> vector<16x1xf32>
    %527 = vector.broadcast %526 : vector<16x1xf32> to vector<16x16xf32>
    %528 = arith.mulf %523, %527 : vector<16x16xf32>
    %529 = arith.truncf %528 : vector<16x16xf32> to vector<16x16xbf16>
    %cst_158 = arith.constant dense<0.000000e+00> : vector<16x16xf32>
    %530 = tpu.matmul %529, %516, %cst_158 {dimension_numbers = #tpu.dot_dimension_numbers<[1], [0], [0], [1], [0, 0, 1, 1], [], []>} : vector<16x16xbf16>, vector<16x16xbf16>, vector<16x16xf32> -> vector<16x16xf32>
    %531 = vector.extract_strided_slice %479 {offsets = [0, 48], sizes = [16, 16], strides = [1, 1]} : vector<16x192xbf16> to vector<16x16xbf16>
    %532 = vector.extract_strided_slice %479 {offsets = [0, 112], sizes = [16, 16], strides = [1, 1]} : vector<16x192xbf16> to vector<16x16xbf16>
    %533 = vector.extract_strided_slice %479 {offsets = [0, 176], sizes = [16, 16], strides = [1, 1]} : vector<16x192xbf16> to vector<16x16xbf16>
    %cst_159 = arith.constant dense<0.000000e+00> : vector<16x16xf32>
    %534 = tpu.matmul %531, %532, %cst_159 {dimension_numbers = #tpu.dot_dimension_numbers<[1], [1], [0], [0], [0, 0, 1, 0], [], []>} : vector<16x16xbf16>, vector<16x16xbf16>, vector<16x16xf32> -> vector<16x16xf32>
    %535 = arith.addf %534, %9 : vector<16x16xf32>
    %cst_160 = arith.constant dense<0xFF800000> : vector<16xf32>
    %536 = vector.multi_reduction <maximumf>, %535, %cst_160 [1] : vector<16x16xf32> to vector<16xf32>
    %537 = vector.shape_cast %536 : vector<16xf32> to vector<16x1xf32>
    %538 = vector.broadcast %537 : vector<16x1xf32> to vector<16x16xf32>
    %539 = arith.subf %535, %538 : vector<16x16xf32>
    %540 = math.exp %539 : vector<16x16xf32>
    %cst_161 = arith.constant dense<0.000000e+00> : vector<16xf32>
    %541 = vector.multi_reduction <add>, %540, %cst_161 [1] : vector<16x16xf32> to vector<16xf32>
    %542 = vector.shape_cast %541 : vector<16xf32> to vector<16x1xf32>
    %543 = tpu.reciprocal %542 {approx = true} : vector<16x1xf32> -> vector<16x1xf32>
    %544 = vector.broadcast %543 : vector<16x1xf32> to vector<16x16xf32>
    %545 = arith.mulf %540, %544 : vector<16x16xf32>
    %546 = arith.truncf %545 : vector<16x16xf32> to vector<16x16xbf16>
    %cst_162 = arith.constant dense<0.000000e+00> : vector<16x16xf32>
    %547 = tpu.matmul %546, %533, %cst_162 {dimension_numbers = #tpu.dot_dimension_numbers<[1], [0], [0], [1], [0, 0, 1, 1], [], []>} : vector<16x16xbf16>, vector<16x16xbf16>, vector<16x16xf32> -> vector<16x16xf32>
    %548 = tpu.concatenate %496, %513, %530, %547 in 1 : vector<16x16xf32>, vector<16x16xf32>, vector<16x16xf32>, vector<16x16xf32> -> vector<16x64xf32>
    %549 = vector.extract_strided_slice %467 {offsets = [0, 0], sizes = [64, 64], strides = [1, 1]} : vector<192x64xbf16> to vector<64x64xbf16>
    %550 = arith.truncf %548 : vector<16x64xf32> to vector<16x64xbf16>
    %cst_163 = arith.constant dense<0.000000e+00> : vector<16x64xf32>
    %551 = tpu.matmul %550, %549, %cst_163 {dimension_numbers = #tpu.dot_dimension_numbers<[1], [0], [0], [1], [0, 0, 1, 1], [], []>} : vector<16x64xbf16>, vector<64x64xbf16>, vector<16x64xf32> -> vector<16x64xf32>
    %552 = vector.broadcast %470 : vector<1x64xf32> to vector<16x64xf32>
    %553 = arith.addf %551, %552 : vector<16x64xf32>
    %554 = arith.addf %553, %463 : vector<16x64xf32>
    %cst_164 = arith.constant dense<0.000000e+00> : vector<16xf32>
    %555 = vector.multi_reduction <add>, %554, %cst_164 [1] : vector<16x64xf32> to vector<16xf32>
    %556 = vector.shape_cast %555 : vector<16xf32> to vector<16x1xf32>
    %cst_165 = arith.constant 6.400000e+01 : f32
    %557 = vector.broadcast %cst_165 : f32 to vector<16x1xf32>
    %558 = arith.divf %556, %557 : vector<16x1xf32>
    %559 = vector.broadcast %558 : vector<16x1xf32> to vector<16x64xf32>
    %560 = arith.subf %554, %559 : vector<16x64xf32>
    %561 = arith.mulf %560, %560 : vector<16x64xf32>
    %cst_166 = arith.constant dense<0.000000e+00> : vector<16xf32>
    %562 = vector.multi_reduction <add>, %561, %cst_166 [1] : vector<16x64xf32> to vector<16xf32>
    %563 = vector.shape_cast %562 : vector<16xf32> to vector<16x1xf32>
    %cst_167 = arith.constant 6.400000e+01 : f32
    %564 = vector.broadcast %cst_167 : f32 to vector<16x1xf32>
    %565 = arith.divf %563, %564 : vector<16x1xf32>
    %cst_168 = arith.constant 9.99999974E-6 : f32
    %566 = vector.broadcast %cst_168 : f32 to vector<16x1xf32>
    %567 = arith.addf %565, %566 : vector<16x1xf32>
    %568 = math.rsqrt %567 : vector<16x1xf32>
    %569 = vector.broadcast %568 : vector<16x1xf32> to vector<16x64xf32>
    %570 = arith.mulf %560, %569 : vector<16x64xf32>
    %571 = vector.broadcast %471 : vector<1x64xf32> to vector<16x64xf32>
    %572 = arith.mulf %570, %571 : vector<16x64xf32>
    %573 = vector.broadcast %472 : vector<1x64xf32> to vector<16x64xf32>
    %574 = arith.addf %572, %573 : vector<16x64xf32>
    %575 = vector.extract_strided_slice %467 {offsets = [64, 0], sizes = [64, 64], strides = [1, 1]} : vector<192x64xbf16> to vector<64x64xbf16>
    %576 = arith.truncf %574 : vector<16x64xf32> to vector<16x64xbf16>
    %cst_169 = arith.constant dense<0.000000e+00> : vector<16x64xf32>
    %577 = tpu.matmul %576, %575, %cst_169 {dimension_numbers = #tpu.dot_dimension_numbers<[1], [0], [0], [1], [0, 0, 1, 1], [], []>} : vector<16x64xbf16>, vector<64x64xbf16>, vector<16x64xf32> -> vector<16x64xf32>
    %578 = vector.broadcast %473 : vector<1x64xf32> to vector<16x64xf32>
    %579 = arith.addf %577, %578 : vector<16x64xf32>
    %cst_170 = arith.constant 0.000000e+00 : f32
    %580 = vector.broadcast %cst_170 : f32 to vector<16x64xf32>
    %581 = arith.maximumf %579, %580 : vector<16x64xf32>
    %582 = vector.extract_strided_slice %467 {offsets = [128, 0], sizes = [64, 64], strides = [1, 1]} : vector<192x64xbf16> to vector<64x64xbf16>
    %583 = arith.truncf %581 : vector<16x64xf32> to vector<16x64xbf16>
    %cst_171 = arith.constant dense<0.000000e+00> : vector<16x64xf32>
    %584 = tpu.matmul %583, %582, %cst_171 {dimension_numbers = #tpu.dot_dimension_numbers<[1], [0], [0], [1], [0, 0, 1, 1], [], []>} : vector<16x64xbf16>, vector<64x64xbf16>, vector<16x64xf32> -> vector<16x64xf32>
    %585 = vector.broadcast %474 : vector<1x64xf32> to vector<16x64xf32>
    %586 = arith.addf %584, %585 : vector<16x64xf32>
    %587 = arith.addf %586, %574 : vector<16x64xf32>
    %cst_172 = arith.constant dense<0.000000e+00> : vector<16xf32>
    %588 = vector.multi_reduction <add>, %587, %cst_172 [1] : vector<16x64xf32> to vector<16xf32>
    %589 = vector.shape_cast %588 : vector<16xf32> to vector<16x1xf32>
    %cst_173 = arith.constant 6.400000e+01 : f32
    %590 = vector.broadcast %cst_173 : f32 to vector<16x1xf32>
    %591 = arith.divf %589, %590 : vector<16x1xf32>
    %592 = vector.broadcast %591 : vector<16x1xf32> to vector<16x64xf32>
    %593 = arith.subf %587, %592 : vector<16x64xf32>
    %594 = arith.mulf %593, %593 : vector<16x64xf32>
    %cst_174 = arith.constant dense<0.000000e+00> : vector<16xf32>
    %595 = vector.multi_reduction <add>, %594, %cst_174 [1] : vector<16x64xf32> to vector<16xf32>
    %596 = vector.shape_cast %595 : vector<16xf32> to vector<16x1xf32>
    %cst_175 = arith.constant 6.400000e+01 : f32
    %597 = vector.broadcast %cst_175 : f32 to vector<16x1xf32>
    %598 = arith.divf %596, %597 : vector<16x1xf32>
    %cst_176 = arith.constant 9.99999974E-6 : f32
    %599 = vector.broadcast %cst_176 : f32 to vector<16x1xf32>
    %600 = arith.addf %598, %599 : vector<16x1xf32>
    %601 = math.rsqrt %600 : vector<16x1xf32>
    %602 = vector.broadcast %601 : vector<16x1xf32> to vector<16x64xf32>
    %603 = arith.mulf %593, %602 : vector<16x64xf32>
    %604 = vector.broadcast %475 : vector<1x64xf32> to vector<16x64xf32>
    %605 = arith.mulf %603, %604 : vector<16x64xf32>
    %606 = vector.broadcast %476 : vector<1x64xf32> to vector<16x64xf32>
    %607 = arith.addf %605, %606 : vector<16x64xf32>
    %c0_i32_177 = arith.constant 0 : i32
    %608 = tpu.memref_slice %arg13[%c0_i32_177] : memref<2x!tpu.dma_semaphore, #tpu.memory_space<semaphore_mem>> -> memref<1x!tpu.dma_semaphore, #tpu.memory_space<semaphore_mem>>
    %609 = tpu.memref_squeeze %608 : memref<1x!tpu.dma_semaphore, #tpu.memory_space<semaphore_mem>> -> memref<!tpu.dma_semaphore, #tpu.memory_space<semaphore_mem>>
    tpu.wait_dma2 semaphore(%609 : memref<!tpu.dma_semaphore, #tpu.memory_space<semaphore_mem>>) src(%arg8 : memref<512x256xbf16, #tpu.memory_space<any>>) dst(%arg11 : memref<512x256xbf16, #tpu.memory_space<vmem>>)
    %c1_i32_178 = arith.constant 1 : i32
    %610 = tpu.memref_slice %arg13[%c1_i32_178] : memref<2x!tpu.dma_semaphore, #tpu.memory_space<semaphore_mem>> -> memref<1x!tpu.dma_semaphore, #tpu.memory_space<semaphore_mem>>
    %611 = tpu.memref_squeeze %610 : memref<1x!tpu.dma_semaphore, #tpu.memory_space<semaphore_mem>> -> memref<!tpu.dma_semaphore, #tpu.memory_space<semaphore_mem>>
    tpu.wait_dma2 semaphore(%611 : memref<!tpu.dma_semaphore, #tpu.memory_space<semaphore_mem>>) src(%arg9 : memref<256x128xbf16, #tpu.memory_space<any>>) dst(%arg12 : memref<256x128xbf16, #tpu.memory_space<vmem>>)
    %cst_179 = arith.constant dense<0.000000e+00> : vector<16x64xf32>
    %612 = tpu.matmul %11, %607, %cst_179 {dimension_numbers = #tpu.dot_dimension_numbers<[1], [0], [0], [1], [0, 0, 1, 1], [], []>} : vector<16x16xf32>, vector<16x64xf32>, vector<16x64xf32> -> vector<16x64xf32>
    %613 = vector.extract_strided_slice %612 {offsets = [0, 0], sizes = [2, 64], strides = [1, 1]} : vector<16x64xf32> to vector<2x64xf32>
    %614 = vector.extract_strided_slice %612 {offsets = [2, 0], sizes = [2, 64], strides = [1, 1]} : vector<16x64xf32> to vector<2x64xf32>
    %615 = vector.extract_strided_slice %612 {offsets = [4, 0], sizes = [2, 64], strides = [1, 1]} : vector<16x64xf32> to vector<2x64xf32>
    %616 = vector.extract_strided_slice %612 {offsets = [6, 0], sizes = [2, 64], strides = [1, 1]} : vector<16x64xf32> to vector<2x64xf32>
    %617 = vector.extract_strided_slice %612 {offsets = [8, 0], sizes = [2, 64], strides = [1, 1]} : vector<16x64xf32> to vector<2x64xf32>
    %618 = vector.extract_strided_slice %612 {offsets = [10, 0], sizes = [2, 64], strides = [1, 1]} : vector<16x64xf32> to vector<2x64xf32>
    %619 = vector.extract_strided_slice %612 {offsets = [12, 0], sizes = [2, 64], strides = [1, 1]} : vector<16x64xf32> to vector<2x64xf32>
    %620 = vector.extract_strided_slice %612 {offsets = [14, 0], sizes = [2, 64], strides = [1, 1]} : vector<16x64xf32> to vector<2x64xf32>
    %621 = tpu.concatenate %613, %614, %615, %616, %617, %618, %619, %620 in 1 : vector<2x64xf32>, vector<2x64xf32>, vector<2x64xf32>, vector<2x64xf32>, vector<2x64xf32>, vector<2x64xf32>, vector<2x64xf32>, vector<2x64xf32> -> vector<2x512xf32>
    %c0_180 = arith.constant 0 : index
    %c0_181 = arith.constant 0 : index
    %622 = vector.load %arg11[%c0_180, %c0_181] : memref<512x256xbf16, #tpu.memory_space<vmem>>, vector<512x256xbf16>
    %623 = arith.truncf %621 : vector<2x512xf32> to vector<2x512xbf16>
    %cst_182 = arith.constant dense<0.000000e+00> : vector<2x256xf32>
    %624 = tpu.matmul %623, %622, %cst_182 {dimension_numbers = #tpu.dot_dimension_numbers<[1], [0], [0], [1], [0, 0, 1, 1], [], []>} : vector<2x512xbf16>, vector<512x256xbf16>, vector<2x256xf32> -> vector<2x256xf32>
    %625 = vector.broadcast %14 : vector<1x256xf32> to vector<2x256xf32>
    %626 = arith.addf %624, %625 : vector<2x256xf32>
    %cst_183 = arith.constant 0.000000e+00 : f32
    %627 = vector.broadcast %cst_183 : f32 to vector<2x256xf32>
    %628 = arith.maximumf %626, %627 : vector<2x256xf32>
    %c0_184 = arith.constant 0 : index
    %c0_185 = arith.constant 0 : index
    %629 = vector.load %arg12[%c0_184, %c0_185] : memref<256x128xbf16, #tpu.memory_space<vmem>>, vector<256x128xbf16>
    %630 = arith.truncf %628 : vector<2x256xf32> to vector<2x256xbf16>
    %cst_186 = arith.constant dense<0.000000e+00> : vector<2x128xf32>
    %631 = tpu.matmul %630, %629, %cst_186 {dimension_numbers = #tpu.dot_dimension_numbers<[1], [0], [0], [1], [0, 0, 1, 1], [], []>} : vector<2x256xbf16>, vector<256x128xbf16>, vector<2x128xf32> -> vector<2x128xf32>
    %632 = vector.broadcast %15 : vector<1x128xf32> to vector<2x128xf32>
    %633 = arith.addf %631, %632 : vector<2x128xf32>
    %c0_187 = arith.constant 0 : index
    %c0_188 = arith.constant 0 : index
    %634 = vector.load %arg10[%c0_187, %c0_188] : memref<2x128xf32, #tpu.memory_space<vmem>>, vector<2x128xf32>
    tpu.vector_store %arg10[%c0_187, %c0_188], %633 {strides = array<i32>} : memref<2x128xf32, #tpu.memory_space<vmem>>, vector<2x128xf32>,
    return
  }
}

</mosaic_0001>

<llo_original>
// kernel: tpu_custom_call.1
$region0: #{tpu_custom_call.1}
  #allocation0 [shape = 'u32[]', space=smem, size = 0x4, offset = 0x4, fixed_abs, tag = 'smem constant byte address 0x4 - core index']
  #allocation1 [shape = 'u32[144,128]{1,0:T(1,128)}', space=vmem, size = 0x12000, scoped, tag = 'internal scratch']
  #allocation2 [shape = 'bf16[512,256]{1,0:T(8,128)(2,1)}', space=vmem, size = 0x40000, scoped, tag = 'scratch operand']
  #allocation3 [shape = 'bf16[256,128]{1,0:T(8,128)(2,1)}', space=vmem, size = 0x10000, scoped, tag = 'scratch operand']
  #allocation4 [shape = 's32[2]{0}', space=sflag, size = 0x8, scoped, tag = 'scratch operand']
  #allocation12 [shape = 's32[]', space=sflag, size = 0x4, offset = 0, fixed_abs, tag = 'sflag constant byte address 0x0 - dummy sync flag']
  #allocation13 [shape = 's32[]', space=sflag, size = 0x4, offset = 0, fixed_abs, tag = 'sflag constant byte address 0x0 - dummy sync flag']
  #allocation14 [shape = 's32[]', space=sflag, size = 0x4, offset = 0, fixed_abs, tag = 'sflag constant byte address 0x0 - dummy sync flag']
  #allocation15 [shape = 'u32[]', space=smem, size = 0x4, offset = 0x44, fixed_abs, tag = 'smem constant byte address 0x44 - assertion arg 0']
  #allocation16 [shape = 'u32[]', space=smem, size = 0x4, offset = 0x48, fixed_abs, tag = 'smem constant byte address 0x48 - assertion arg 1']
  %s0 = inlined_call_operand.hbm [shape: f32[2,16,64], index: 0, kind: input, shape index: {}]
  %s1 = inlined_call_operand.hbm [shape: f32[2,16,16], index: 1, kind: input, shape index: {}]
  %s2 = inlined_call_operand.vmem [shape: f32[4,256], index: 2, kind: input, shape index: {}]
  %s3 = inlined_call_operand.hbm [shape: f32[4,8,64], index: 3, kind: input, shape index: {}]
  %s4 = inlined_call_operand.vmem [shape: bf16[64,256], index: 4, kind: input, shape index: {}]
  %s5 = inlined_call_operand.vmem [shape: bf16[256,64], index: 5, kind: input, shape index: {}]
  %s6 = inlined_call_operand.vmem [shape: bf16[4,64,192], index: 6, kind: input, shape index: {}]
  %s7 = inlined_call_operand.vmem [shape: bf16[4,192,64], index: 7, kind: input, shape index: {}]
  %s8 = inlined_call_operand.vmem [shape: bf16[512,256], index: 8, kind: input, shape index: {}]
  %s9 = inlined_call_operand.hbm [shape: bf16[256,128], index: 9, kind: input, shape index: {}]
  %s10 = inlined_call_operand.hbm [shape: f32[2,128], index: 10, kind: output, shape index: {}]
  %s11 = sld [smem:[#allocation0]]
  $region92: #{tpu_custom_call.1} parent=0
    _
  %s13 = ssub.s32 1, %s11
  %s14 = scalar_select 0, %s13, %s11
  $region1: #{tpu_custom_call.1} parent=0
    #allocation5 [shape = 'u8[16384]{0}', space=vmem, size = 0x4000, scoped, tag = 'input window, operand 0, single buffered']
    #allocation6 [shape = 's32[1]{0}', space=sflag, size = 0x4, scoped, tag = 'scoped memory for tpu_custom_call.1']
    #allocation7 [shape = 's32[1]{0}', space=sflag, size = 0x4, scoped, tag = 'scoped memory for tpu_custom_call.1']
    #allocation8 [shape = 'u8[16384]{0}', space=vmem, size = 0x4000, scoped, tag = 'input window, operand 1, single buffered']
    #allocation9 [shape = 's32[1]{0}', space=sflag, size = 0x4, scoped, tag = 'scoped memory for tpu_custom_call.1']
    #allocation10 [shape = 'u8[16384]{0}', space=vmem, size = 0x4000, scoped, tag = 'input window, operand 3, single buffered']
    #allocation11 [shape = 'u8[1024]{0}', space=vmem, size = 0x400, scoped, tag = 'output window, operand 0, single buffered']
    %15 = vsyncpa [#allocation6], 0
    %16 = vsyncpa [#allocation9], 0
    %17 = vsyncpa [#allocation7], 0
    // Predicated region
    $region2: #{tpu_custom_call.1} parent=1 // pred_check
      _
    $region3: #{tpu_custom_call.1} parent=1 // pred_check_branch
      %19 = sbr.rel (0) target = $region5
    $region4: #{tpu_custom_call.1} parent=1 // pred_region
      %s21 = ssub.s32 512, 512
      %22 = vsyncadd [#allocation6], %s21
      %s23 = sshll.u32 [#allocation5], 4
      %s24 = int_to_ptr.vmem [resolvable:$true] %s23
      %29 = dma.hbm_to_vmem [thread:$0]  %s0, 512, %s24, [#allocation6], 128, 128, 8
    $region5: #{tpu_custom_call.1} parent=1 // pred_fallthru
      _
    // Predicated region
    $region6: #{tpu_custom_call.1} parent=1 // pred_check
      _
    $region7: #{tpu_custom_call.1} parent=1 // pred_check_branch
      %31 = sbr.rel (0) target = $region9
    $region8: #{tpu_custom_call.1} parent=1 // pred_region
      %s33 = ssub.s32 512, 512
      %34 = vsyncadd [#allocation9], %s33
      %s35 = sshll.u32 [#allocation8], 4
      %s36 = int_to_ptr.vmem [resolvable:$true] %s35
      %41 = dma.hbm_to_vmem [thread:$0]  %s1, 512, %s36, [#allocation9], 128, 128, 8
    $region9: #{tpu_custom_call.1} parent=1 // pred_fallthru
      _
    // Predicated region
    $region10: #{tpu_custom_call.1} parent=1 // pred_check
      _
    $region11: #{tpu_custom_call.1} parent=1 // pred_check_branch
      %43 = sbr.rel (0) target = $region13
    $region12: #{tpu_custom_call.1} parent=1 // pred_region
      _
    $region13: #{tpu_custom_call.1} parent=1 // pred_fallthru
      _
    // Predicated region
    $region14: #{tpu_custom_call.1} parent=1 // pred_check
      _
    $region15: #{tpu_custom_call.1} parent=1 // pred_check_branch
      %45 = sbr.rel (0) target = $region17
    $region16: #{tpu_custom_call.1} parent=1 // pred_region
      %s47 = ssub.s32 512, 512
      %48 = vsyncadd [#allocation9], %s47
      %s49 = sshll.u32 [#allocation10], 4
      %s50 = int_to_ptr.vmem [resolvable:$true] %s49
      %55 = dma.hbm_to_vmem [thread:$0]  %s3, 512, %s50, [#allocation9], 128, 128, 8
    $region17: #{tpu_custom_call.1} parent=1 // pred_fallthru
      _
    // Predicated region
    $region18: #{tpu_custom_call.1} parent=1 // pred_check
      _
    $region19: #{tpu_custom_call.1} parent=1 // pred_check_branch
      %57 = sbr.rel (0) target = $region21
    $region20: #{tpu_custom_call.1} parent=1 // pred_region
      _
    $region21: #{tpu_custom_call.1} parent=1 // pred_fallthru
      _
    // Predicated region
    $region22: #{tpu_custom_call.1} parent=1 // pred_check
      _
    $region23: #{tpu_custom_call.1} parent=1 // pred_check_branch
      %59 = sbr.rel (0) target = $region25
    $region24: #{tpu_custom_call.1} parent=1 // pred_region
      _
    $region25: #{tpu_custom_call.1} parent=1 // pred_fallthru
      _
    // Predicated region
    $region26: #{tpu_custom_call.1} parent=1 // pred_check
      _
    $region27: #{tpu_custom_call.1} parent=1 // pred_check_branch
      %61 = sbr.rel (0) target = $region29
    $region28: #{tpu_custom_call.1} parent=1 // pred_region
      _
    $region29: #{tpu_custom_call.1} parent=1 // pred_fallthru
      _
    // Predicated region
    $region30: #{tpu_custom_call.1} parent=1 // pred_check
      _
    $region31: #{tpu_custom_call.1} parent=1 // pred_check_branch
      %63 = sbr.rel (0) target = $region33
    $region32: #{tpu_custom_call.1} parent=1 // pred_region
      _
    $region33: #{tpu_custom_call.1} parent=1 // pred_fallthru
      _
    // Predicated region
    $region34: #{tpu_custom_call.1} parent=1 // pred_check
      _
    $region35: #{tpu_custom_call.1} parent=1 // pred_check_branch
      %65 = sbr.rel (0) target = $region37
    $region36: #{tpu_custom_call.1} parent=1 // pred_region
      %66 = dma.done [#allocation6], 512
    $region37: #{tpu_custom_call.1} parent=1 // pred_fallthru
      _
    // Predicated region
    $region38: #{tpu_custom_call.1} parent=1 // pred_check
      _
    $region39: #{tpu_custom_call.1} parent=1 // pred_check_branch
      %68 = sbr.rel (0) target = $region41
    $region40: #{tpu_custom_call.1} parent=1 // pred_region
      %69 = dma.done [#allocation9], 512
    $region41: #{tpu_custom_call.1} parent=1 // pred_fallthru
      _
    // Predicated region
    $region42: #{tpu_custom_call.1} parent=1 // pred_check
      _
    $region43: #{tpu_custom_call.1} parent=1 // pred_check_branch
      %71 = sbr.rel (0) target = $region45
    $region44: #{tpu_custom_call.1} parent=1 // pred_region
      %72 = dma.done [#allocation9], 512
    $region45: #{tpu_custom_call.1} parent=1 // pred_fallthru
      _
    %p75 = scmp.lt.u32.totalorder 512, 8
    %p76 = pneg %p75
    // Predicated region
    $region46: #{tpu_custom_call.1} parent=1 // pred_check
      _
    $region47: #{tpu_custom_call.1} parent=1 // pred_check_branch
      %78 = sbr.rel (%p75) target = $region49
    $region48: #{tpu_custom_call.1} parent=1 // pred_region
      %s94 = sand.u32 512, 7
      %p95 = scmp.eq.s32.totalorder %s94, 0
      // Predicated region
      $region61: #{tpu_custom_call.1} parent=48 // pred_check
        %p96 = pneg %p95
      $region62: #{tpu_custom_call.1} parent=48 // pred_check_branch
        %98 = sbr.rel (%p96) target = $region64
      $region63: #{tpu_custom_call.1} parent=48 // pred_region
        loop: start=0, step=1, limit=1
        $region65: #{tpu_custom_call.1} parent=63 // loop_pre_header
          _
        $region66: #{tpu_custom_call.1} parent=63 // loop_header
          %s100 = sphi 0, %s104
          %p101 = scmp.ge.s32.totalorder %s100, 1
          %s105 = sphi %s8, %s8
          %s106 = sphi [#allocation2], [#allocation2]
        $region67: #{tpu_custom_call.1} parent=63 // loop_header_branch
          %103 = sbr.rel (%p101) target = $region71
        $region68: #{tpu_custom_call.1} parent=63 // loop_body
          %v107 = vld [vmem:[%s105] sm:$0xff]
          %108 = vst [vmem:[%s106] sm:$0xff] %v107
          %v109 = vld [vmem:[%s105 + $0x8] sm:$0xff]
          %110 = vst [vmem:[%s106 + $0x8] sm:$0xff] %v109
          %v111 = vld [vmem:[%s105 + $0x10] sm:$0xff]
          %112 = vst [vmem:[%s106 + $0x10] sm:$0xff] %v111
          %v113 = vld [vmem:[%s105 + $0x18] sm:$0xff]
          %114 = vst [vmem:[%s106 + $0x18] sm:$0xff] %v113
          %v115 = vld [vmem:[%s105 + $0x20] sm:$0xff]
          %116 = vst [vmem:[%s106 + $0x20] sm:$0xff] %v115
          %v117 = vld [vmem:[%s105 + $0x28] sm:$0xff]
          %118 = vst [vmem:[%s106 + $0x28] sm:$0xff] %v117
          %v119 = vld [vmem:[%s105 + $0x30] sm:$0xff]
          %120 = vst [vmem:[%s106 + $0x30] sm:$0xff] %v119
          %v121 = vld [vmem:[%s105 + $0x38] sm:$0xff]
          %122 = vst [vmem:[%s106 + $0x38] sm:$0xff] %v121
          %v123 = vld [vmem:[%s105 + $0x40] sm:$0xff]
          %124 = vst [vmem:[%s106 + $0x40] sm:$0xff] %v123
          %v125 = vld [vmem:[%s105 + $0x48] sm:$0xff]
          %126 = vst [vmem:[%s106 + $0x48] sm:$0xff] %v125
          %v127 = vld [vmem:[%s105 + $0x50] sm:$0xff]
          %128 = vst [vmem:[%s106 + $0x50] sm:$0xff] %v127
          %v129 = vld [vmem:[%s105 + $0x58] sm:$0xff]
          %130 = vst [vmem:[%s106 + $0x58] sm:$0xff] %v129
          %v131 = vld [vmem:[%s105 + $0x60] sm:$0xff]
          %132 = vst [vmem:[%s106 + $0x60] sm:$0xff] %v131
          %v133 = vld [vmem:[%s105 + $0x68] sm:$0xff]
          %134 = vst [vmem:[%s106 + $0x68] sm:$0xff] %v133
          %v135 = vld [vmem:[%s105 + $0x70] sm:$0xff]
          %136 = vst [vmem:[%s106 + $0x70] sm:$0xff] %v135
          %v137 = vld [vmem:[%s105 + $0x78] sm:$0xff]
          %138 = vst [vmem:[%s106 + $0x78] sm:$0xff] %v137
          %v139 = vld [vmem:[%s105 + $0x80] sm:$0xff]
          %140 = vst [vmem:[%s106 + $0x80] sm:$0xff] %v139
          %v141 = vld [vmem:[%s105 + $0x88] sm:$0xff]
          %142 = vst [vmem:[%s106 + $0x88] sm:$0xff] %v141
          %v143 = vld [vmem:[%s105 + $0x90] sm:$0xff]
          %144 = vst [vmem:[%s106 + $0x90] sm:$0xff] %v143
          %v145 = vld [vmem:[%s105 + $0x98] sm:$0xff]
          %146 = vst [vmem:[%s106 + $0x98] sm:$0xff] %v145
          %v147 = vld [vmem:[%s105 + $0xa0] sm:$0xff]
          %148 = vst [vmem:[%s106 + $0xa0] sm:$0xff] %v147
          %v149 = vld [vmem:[%s105 + $0xa8] sm:$0xff]
          %150 = vst [vmem:[%s106 + $0xa8] sm:$0xff] %v149
          %v151 = vld [vmem:[%s105 + $0xb0] sm:$0xff]
          %152 = vst [vmem:[%s106 + $0xb0] sm:$0xff] %v151
          %v153 = vld [vmem:[%s105 + $0xb8] sm:$0xff]
          %154 = vst [vmem:[%s106 + $0xb8] sm:$0xff] %v153
          %v155 = vld [vmem:[%s105 + $0xc0] sm:$0xff]
          %156 = vst [vmem:[%s106 + $0xc0] sm:$0xff] %v155
          %v157 = vld [vmem:[%s105 + $0xc8] sm:$0xff]
          %158 = vst [vmem:[%s106 + $0xc8] sm:$0xff] %v157
          %v159 = vld [vmem:[%s105 + $0xd0] sm:$0xff]
          %160 = vst [vmem:[%s106 + $0xd0] sm:$0xff] %v159
          %v161 = vld [vmem:[%s105 + $0xd8] sm:$0xff]
          %162 = vst [vmem:[%s106 + $0xd8] sm:$0xff] %v161
          %v163 = vld [vmem:[%s105 + $0xe0] sm:$0xff]
          %164 = vst [vmem:[%s106 + $0xe0] sm:$0xff] %v163
          %v165 = vld [vmem:[%s105 + $0xe8] sm:$0xff]
          %166 = vst [vmem:[%s106 + $0xe8] sm:$0xff] %v165
          %v167 = vld [vmem:[%s105 + $0xf0] sm:$0xff]
          %168 = vst [vmem:[%s106 + $0xf0] sm:$0xff] %v167
          %v169 = vld [vmem:[%s105 + $0xf8] sm:$0xff]
          %170 = vst [vmem:[%s106 + $0xf8] sm:$0xff] %v169
          %v171 = vld [vmem:[%s105 + $0x100] sm:$0xff]
          %172 = vst [vmem:[%s106 + $0x100] sm:$0xff] %v171
          %v173 = vld [vmem:[%s105 + $0x108] sm:$0xff]
          %174 = vst [vmem:[%s106 + $0x108] sm:$0xff] %v173
          %v175 = vld [vmem:[%s105 + $0x110] sm:$0xff]
          %176 = vst [vmem:[%s106 + $0x110] sm:$0xff] %v175
          %v177 = vld [vmem:[%s105 + $0x118] sm:$0xff]
          %178 = vst [vmem:[%s106 + $0x118] sm:$0xff] %v177
          %v179 = vld [vmem:[%s105 + $0x120] sm:$0xff]
          %180 = vst [vmem:[%s106 + $0x120] sm:$0xff] %v179
          %v181 = vld [vmem:[%s105 + $0x128] sm:$0xff]
          %182 = vst [vmem:[%s106 + $0x128] sm:$0xff] %v181
          %v183 = vld [vmem:[%s105 + $0x130] sm:$0xff]
          %184 = vst [vmem:[%s106 + $0x130] sm:$0xff] %v183
          %v185 = vld [vmem:[%s105 + $0x138] sm:$0xff]
          %186 = vst [vmem:[%s106 + $0x138] sm:$0xff] %v185
          %v187 = vld [vmem:[%s105 + $0x140] sm:$0xff]
          %188 = vst [vmem:[%s106 + $0x140] sm:$0xff] %v187
          %v189 = vld [vmem:[%s105 + $0x148] sm:$0xff]
          %190 = vst [vmem:[%s106 + $0x148] sm:$0xff] %v189
          %v191 = vld [vmem:[%s105 + $0x150] sm:$0xff]
          %192 = vst [vmem:[%s106 + $0x150] sm:$0xff] %v191
          %v193 = vld [vmem:[%s105 + $0x158] sm:$0xff]
          %194 = vst [vmem:[%s106 + $0x158] sm:$0xff] %v193
          %v195 = vld [vmem:[%s105 + $0x160] sm:$0xff]
          %196 = vst [vmem:[%s106 + $0x160] sm:$0xff] %v195
          %v197 = vld [vmem:[%s105 + $0x168] sm:$0xff]
          %198 = vst [vmem:[%s106 + $0x168] sm:$0xff] %v197
          %v199 = vld [vmem:[%s105 + $0x170] sm:$0xff]
          %200 = vst [vmem:[%s106 + $0x170] sm:$0xff] %v199
          %v201 = vld [vmem:[%s105 + $0x178] sm:$0xff]
          %202 = vst [vmem:[%s106 + $0x178] sm:$0xff] %v201
          %v203 = vld [vmem:[%s105 + $0x180] sm:$0xff]
          %204 = vst [vmem:[%s106 + $0x180] sm:$0xff] %v203
          %v205 = vld [vmem:[%s105 + $0x188] sm:$0xff]
          %206 = vst [vmem:[%s106 + $0x188] sm:$0xff] %v205
          %v207 = vld [vmem:[%s105 + $0x190] sm:$0xff]
          %208 = vst [vmem:[%s106 + $0x190] sm:$0xff] %v207
          %v209 = vld [vmem:[%s105 + $0x198] sm:$0xff]
          %210 = vst [vmem:[%s106 + $0x198] sm:$0xff] %v209
          %v211 = vld [vmem:[%s105 + $0x1a0] sm:$0xff]
          %212 = vst [vmem:[%s106 + $0x1a0] sm:$0xff] %v211
          %v213 = vld [vmem:[%s105 + $0x1a8] sm:$0xff]
          %214 = vst [vmem:[%s106 + $0x1a8] sm:$0xff] %v213
          %v215 = vld [vmem:[%s105 + $0x1b0] sm:$0xff]
          %216 = vst [vmem:[%s106 + $0x1b0] sm:$0xff] %v215
          %v217 = vld [vmem:[%s105 + $0x1b8] sm:$0xff]
          %218 = vst [vmem:[%s106 + $0x1b8] sm:$0xff] %v217
          %v219 = vld [vmem:[%s105 + $0x1c0] sm:$0xff]
          %220 = vst [vmem:[%s106 + $0x1c0] sm:$0xff] %v219
          %v221 = vld [vmem:[%s105 + $0x1c8] sm:$0xff]
          %222 = vst [vmem:[%s106 + $0x1c8] sm:$0xff] %v221
          %v223 = vld [vmem:[%s105 + $0x1d0] sm:$0xff]
          %224 = vst [vmem:[%s106 + $0x1d0] sm:$0xff] %v223
          %v225 = vld [vmem:[%s105 + $0x1d8] sm:$0xff]
          %226 = vst [vmem:[%s106 + $0x1d8] sm:$0xff] %v225
          %v227 = vld [vmem:[%s105 + $0x1e0] sm:$0xff]
          %228 = vst [vmem:[%s106 + $0x1e0] sm:$0xff] %v227
          %v229 = vld [vmem:[%s105 + $0x1e8] sm:$0xff]
          %230 = vst [vmem:[%s106 + $0x1e8] sm:$0xff] %v229
          %v231 = vld [vmem:[%s105 + $0x1f0] sm:$0xff]
          %232 = vst [vmem:[%s106 + $0x1f0] sm:$0xff] %v231
          %v233 = vld [vmem:[%s105 + $0x1f8] sm:$0xff]
          %234 = vst [vmem:[%s106 + $0x1f8] sm:$0xff] %v233
        $region69: #{tpu_custom_call.1} parent=63 // loop_footer
          %s104 = sadd.s32 1, %s100
        $region70: #{tpu_custom_call.1} parent=63 // loop_footer_branch
          %99 = sbr.rel target = $region66
        $region71: #{tpu_custom_call.1} parent=63 // loop_exit
          _
      $region64: #{tpu_custom_call.1} parent=48 // pred_fallthru
        _
      %p235 = pneg %p95
      // Predicated region
      $region72: #{tpu_custom_call.1} parent=48 // pred_check
        _
      $region73: #{tpu_custom_call.1} parent=48 // pred_check_branch
        %237 = sbr.rel (%p95) target = $region75
      $region74: #{tpu_custom_call.1} parent=48 // pred_region
        %s238 = sand.u32 512, 7
      $region75: #{tpu_custom_call.1} parent=48 // pred_fallthru
        _
    $region49: #{tpu_custom_call.1} parent=1 // pred_fallthru
      _
    // Predicated region
    $region50: #{tpu_custom_call.1} parent=1 // pred_check
      %p79 = pneg %p75
    $region51: #{tpu_custom_call.1} parent=1 // pred_check_branch
      %81 = sbr.rel (%p79) target = $region53
    $region52: #{tpu_custom_call.1} parent=1 // pred_region
      %s82 = sshll.u32 1, 512
      %s83 = ssub.s32 %s82, 1
      loop: start=0, step=1, limit=1
      $region54: #{tpu_custom_call.1} parent=52 // loop_pre_header
        _
      $region55: #{tpu_custom_call.1} parent=52 // loop_header
        %s85 = sphi 0, %s89
        %p86 = scmp.ge.s32.totalorder %s85, 1
        %s90 = sphi %s8, %s8
        %s91 = sphi [#allocation2], [#allocation2]
      $region56: #{tpu_custom_call.1} parent=52 // loop_header_branch
        %88 = sbr.rel (%p86) target = $region60
      $region57: #{tpu_custom_call.1} parent=52 // loop_body
        %v92 = vld [vmem:[%s90] sm:%s83]
        %93 = vst [vmem:[%s91] sm:%s83] %v92
      $region58: #{tpu_custom_call.1} parent=52 // loop_footer
        %s89 = sadd.s32 1, %s85
      $region59: #{tpu_custom_call.1} parent=52 // loop_footer_branch
        %84 = sbr.rel target = $region55
      $region60: #{tpu_custom_call.1} parent=52 // loop_exit
        _
    $region53: #{tpu_custom_call.1} parent=1 // pred_fallthru
      _
    // Predicated region
    $region76: #{tpu_custom_call.1} parent=1 // pred_check
      _
    $region77: #{tpu_custom_call.1} parent=1 // pred_check_branch
      %241 = sbr.rel (0) target = $region79
    $region78: #{tpu_custom_call.1} parent=1 // pred_region
      %242 = vsyncadd [#allocation4], 8192
    $region79: #{tpu_custom_call.1} parent=1 // pred_fallthru
      _
    %s243 = scalar_lea.sflag [#allocation4], 1
    // Predicated region
    $region80: #{tpu_custom_call.1} parent=1 // pred_check
      _
    $region81: #{tpu_custom_call.1} parent=1 // pred_check_branch
      %245 = sbr.rel target = $region83
    $region82: #{tpu_custom_call.1} parent=1 // pred_region
      %246 = sst [smem:[#allocation15]] [#allocation14]
      %247 = sst [smem:[#allocation16]] [#allocation13]
    $region83: #{tpu_custom_call.1} parent=1 // pred_fallthru
      _
    %249 = shalt.err (0)
    %s251 = sshll.u32 [#allocation3], 4
    %s252 = int_to_ptr.vmem [resolvable:$true] %s251
    %254 = dma.hbm_to_vmem [thread:$0]  %s9, 2048, %s252, %s243
    %v255 = vld [vmem:[#allocation5] sm:$0xff]
    %v256 = vld [vmem:[#allocation5 + $0x8] sm:$0xff]
    %s257 = scalar_lea.vmem [#allocation5], 16
    %v258 = vld [vmem:[%s257] sm:$0xff]
    %v259 = vld [vmem:[%s257 + $0x8] sm:$0xff]
    %v260 = vld [vmem:[#allocation8] sm:$0xff]
    %v261 = vld [vmem:[#allocation8 + $0x8] sm:$0xff]
    %s262 = scalar_lea.vmem [#allocation8], 16
    %v263 = vld [vmem:[%s262] sm:$0xff]
    %v264 = vld [vmem:[%s262 + $0x8] sm:$0xff]
    %v265 = vld [vmem:[%s2] sm:$0xff]
    %v266 = vld [vmem:[%s4] sm:$0xff]
    %v267 = vld [vmem:[%s4 + $0x8] sm:$0xff]
    %v268 = vld [vmem:[%s4 + $0x10] sm:$0xff]
    %v269 = vld [vmem:[%s4 + $0x18] sm:$0xff]
    %v270 = vld [vmem:[%s4 + $0x20] sm:$0xff]
    %v271 = vld [vmem:[%s4 + $0x28] sm:$0xff]
    %v272 = vld [vmem:[%s4 + $0x30] sm:$0xff]
    %v273 = vld [vmem:[%s4 + $0x38] sm:$0xff]
    %v274 = vpack.c.bf16 %v256, %v255
    %v276 = vlaneseq
    %v277 = vshrl.u32 %v276, 7
    %v278 = vsub.s32 0, %v277
    %v279 = vrot.slane %v265, %v278
    %v280 = vlaneseq
    %v281 = vshrl.u32 %v280, 7
    %v282 = vsub.s32 4, %v281
    %v283 = vrot.slane %v265, %v282
    %v286 = vlaneseq
    %v287 = vshrl.u32 %v286, 7
    %v288 = vsub.s32 0, %v287
    %v289 = vrot.slane %v279, %v288
    %v290 = vlaneseq
    %v291 = vshrl.u32 %v290, 7
    %v292 = vsub.s32 0, %v291
    %v293 = vrot.slane %v283, %v292
    %v302 = vunpack.c.l.b16 %v266
    %v303 = vunpack.c.h.b16 %v266
    %v304 = vunpack.c.l.b16 %v267
    %v305 = vunpack.c.h.b16 %v267
    %v306 = vunpack.c.l.b16 %v268
    %v307 = vunpack.c.h.b16 %v268
    %v308 = vunpack.c.l.b16 %v269
    %v309 = vunpack.c.h.b16 %v269
    %v310 = vunpack.c.l.b16 %v270
    %v311 = vunpack.c.h.b16 %v270
    %v312 = vunpack.c.l.b16 %v271
    %v313 = vunpack.c.h.b16 %v271
    %v314 = vunpack.c.l.b16 %v272
    %v315 = vunpack.c.h.b16 %v272
    %v316 = vunpack.c.l.b16 %v273
    %v317 = vunpack.c.h.b16 %v273
    %v318 = vpack.c.b16 %v304, %v302
    %v319 = vpack.c.b16 %v305, %v303
    %v320 = vpack.c.b16 %v308, %v306
    %v321 = vpack.c.b16 %v309, %v307
    %v322 = vpack.c.b16 %v312, %v310
    %v323 = vpack.c.b16 %v313, %v311
    %v324 = vpack.c.b16 %v316, %v314
    %v325 = vpack.c.b16 %v317, %v315
    %vm334 = vcmask 523264
    %v336 = vsel %vm334, %v274, 0
    %338 = vmatprep.subr.bf16.mxu0 0
    %339 = vmatpush1.bf16.msra.mxu0 0
    %340 = vmatprep.subr.bf16.mxu0 0
    %341 = vmatpush1.bf16.msra.mxu0 0
    %342 = vmatprep.subr.bf16.mxu0 0
    %343 = vmatpush1.bf16.msra.mxu0 0
    %344 = vmatprep.subr.bf16.mxu0 0
    %345 = vmatpush1.bf16.msra.mxu0 0
    %346 = vmatprep.subr.bf16.mxu0 %v325
    %347 = vmatpush1.bf16.msra.mxu0 %v324
    %348 = vmatprep.subr.bf16.mxu0 %v323
    %349 = vmatpush1.bf16.msra.mxu0 %v322
    %350 = vmatprep.subr.bf16.mxu0 %v321
    %351 = vmatpush1.bf16.msra.mxu0 %v320
    %352 = vmatprep.subr.bf16.mxu0 %v319
    %353 = vmatpush1.bf16.msra.mxu0 %v318
    %354 = vmatprep.subr.bf16.mxu0 0
    %355 = vmatpush2.bf16.msra.mxu0 0
    %356 = vmatprep.subr.bf16.mxu0 0
    %357 = vmatpush2.bf16.msra.mxu0 0
    %358 = vmatprep.subr.bf16.mxu0 0
    %359 = vmatpush2.bf16.msra.mxu0 0
    %360 = vmatprep.subr.bf16.mxu0 0
    %361 = vmatpush2.bf16.msra.mxu0 0
    %362 = vmatprep.subr.bf16.mxu0 0
    %363 = vmatpush2.bf16.msra.mxu0 0
    %364 = vmatprep.subr.bf16.mxu0 0
    %365 = vmatpush2.bf16.msra.mxu0 0
    %366 = vmatprep.subr.bf16.mxu0 0
    %367 = vmatpush2.bf16.msra.mxu0 0
    %368 = vmatprep.subr.bf16.mxu0 0
    %369 = vmatpush2.bf16.msra.mxu0 0
    %370 = vmatprep.mubr.bf16.mxu0 0
    %371 = vmatmul.mubr.bf16.gmra.mxu0 %v336
    %v372 = vpop.f32.mrf.mxu0
    %v373 = vadd.f32 %v289, %v372
    %v374 = vpop.f32.mrf.mxu0
    %v375 = vadd.f32 %v293, %v374
    %v376 = vpop.f32.mrf.mxu0
    %v377 = vadd.f32 %v289, %v376
    %v378 = vpop.f32.mrf.mxu0
    %v379 = vadd.f32 %v293, %v378
    %380 = vdwg.mxu0
    %v381 = vmax.f32 %v373, 0.0
    %v382 = vmax.f32 %v375, 0.0
    %v383 = vmax.f32 %v377, 0.0
    %v384 = vmax.f32 %v379, 0.0
    %v385 = vld [vmem:[%s5] sm:$0xf]
    %v386 = vld [vmem:[%s5 + $0x4] sm:$0xf]
    %v387 = vld [vmem:[%s5 + $0x8] sm:$0xf]
    %v388 = vld [vmem:[%s5 + $0xc] sm:$0xf]
    %v389 = vld [vmem:[%s5 + $0x10] sm:$0xf]
    %v390 = vld [vmem:[%s5 + $0x14] sm:$0xf]
    %v391 = vld [vmem:[%s5 + $0x18] sm:$0xf]
    %v392 = vld [vmem:[%s5 + $0x1c] sm:$0xf]
    %v393 = vld [vmem:[%s5 + $0x20] sm:$0xf]
    %v394 = vld [vmem:[%s5 + $0x24] sm:$0xf]
    %v395 = vld [vmem:[%s5 + $0x28] sm:$0xf]
    %v396 = vld [vmem:[%s5 + $0x2c] sm:$0xf]
    %v397 = vld [vmem:[%s5 + $0x30] sm:$0xf]
    %v398 = vld [vmem:[%s5 + $0x34] sm:$0xf]
    %v399 = vld [vmem:[%s5 + $0x38] sm:$0xf]
    %v400 = vld [vmem:[%s5 + $0x3c] sm:$0xf]
    %v401 = vld [vmem:[%s5 + $0x40] sm:$0xf]
    %v402 = vld [vmem:[%s5 + $0x44] sm:$0xf]
    %v403 = vld [vmem:[%s5 + $0x48] sm:$0xf]
    %v404 = vld [vmem:[%s5 + $0x4c] sm:$0xf]
    %v405 = vld [vmem:[%s5 + $0x50] sm:$0xf]
    %v406 = vld [vmem:[%s5 + $0x54] sm:$0xf]
    %v407 = vld [vmem:[%s5 + $0x58] sm:$0xf]
    %v408 = vld [vmem:[%s5 + $0x5c] sm:$0xf]
    %v409 = vld [vmem:[%s5 + $0x60] sm:$0xf]
    %v410 = vld [vmem:[%s5 + $0x64] sm:$0xf]
    %v411 = vld [vmem:[%s5 + $0x68] sm:$0xf]
    %v412 = vld [vmem:[%s5 + $0x6c] sm:$0xf]
    %v413 = vld [vmem:[%s5 + $0x70] sm:$0xf]
    %v414 = vld [vmem:[%s5 + $0x74] sm:$0xf]
    %v415 = vld [vmem:[%s5 + $0x78] sm:$0xf]
    %v416 = vld [vmem:[%s5 + $0x7c] sm:$0xf]
    %v417 = vpack.c.bf16 %v383, %v381
    %v418 = vpack.c.bf16 %v384, %v382
    %v419 = vlaneseq
    %v420 = vshrl.u32 %v419, 7
    %v421 = vsub.s32 3, %v420
    %v422 = vrot.slane %v265, %v421
    %v455 = vunpack.c.l.b16 %v385
    %v456 = vunpack.c.l.b16 %v386
    %v457 = vunpack.c.l.b16 %v387
    %v458 = vunpack.c.l.b16 %v388
    %v459 = vunpack.c.l.b16 %v389
    %v460 = vunpack.c.l.b16 %v390
    %v461 = vunpack.c.l.b16 %v391
    %v462 = vunpack.c.l.b16 %v392
    %v463 = vunpack.c.l.b16 %v393
    %v464 = vunpack.c.l.b16 %v394
    %v465 = vunpack.c.l.b16 %v395
    %v466 = vunpack.c.l.b16 %v396
    %v467 = vunpack.c.l.b16 %v397
    %v468 = vunpack.c.l.b16 %v398
    %v469 = vunpack.c.l.b16 %v399
    %v470 = vunpack.c.l.b16 %v400
    %v471 = vunpack.c.l.b16 %v401
    %v472 = vunpack.c.l.b16 %v402
    %v473 = vunpack.c.l.b16 %v403
    %v474 = vunpack.c.l.b16 %v404
    %v475 = vunpack.c.l.b16 %v405
    %v476 = vunpack.c.l.b16 %v406
    %v477 = vunpack.c.l.b16 %v407
    %v478 = vunpack.c.l.b16 %v408
    %v479 = vunpack.c.l.b16 %v409
    %v480 = vunpack.c.l.b16 %v410
    %v481 = vunpack.c.l.b16 %v411
    %v482 = vunpack.c.l.b16 %v412
    %v483 = vunpack.c.l.b16 %v413
    %v484 = vunpack.c.l.b16 %v414
    %v485 = vunpack.c.l.b16 %v415
    %v486 = vunpack.c.l.b16 %v416
    %v487 = vpack.c.b16 %v456, %v455
    %v488 = vpack.c.b16 %v458, %v457
    %v489 = vpack.c.b16 %v460, %v459
    %v490 = vpack.c.b16 %v462, %v461
    %v491 = vpack.c.b16 %v464, %v463
    %v492 = vpack.c.b16 %v466, %v465
    %v493 = vpack.c.b16 %v468, %v467
    %v494 = vpack.c.b16 %v470, %v469
    %v495 = vpack.c.b16 %v472, %v471
    %v496 = vpack.c.b16 %v474, %v473
    %v497 = vpack.c.b16 %v476, %v475
    %v498 = vpack.c.b16 %v478, %v477
    %v499 = vpack.c.b16 %v480, %v479
    %v500 = vpack.c.b16 %v482, %v481
    %v501 = vpack.c.b16 %v484, %v483
    %v502 = vpack.c.b16 %v486, %v485
    %519 = vmatprep.subr.bf16.mxu0 0
    %520 = vmatpush1.bf16.msra.mxu0 %v494
    %521 = vmatprep.subr.bf16.mxu0 0
    %522 = vmatpush1.bf16.msra.mxu0 %v493
    %523 = vmatprep.subr.bf16.mxu0 0
    %524 = vmatpush1.bf16.msra.mxu0 %v492
    %525 = vmatprep.subr.bf16.mxu0 0
    %526 = vmatpush1.bf16.msra.mxu0 %v491
    %527 = vmatprep.subr.bf16.mxu0 0
    %528 = vmatpush1.bf16.msra.mxu0 %v490
    %529 = vmatprep.subr.bf16.mxu0 0
    %530 = vmatpush1.bf16.msra.mxu0 %v489
    %531 = vmatprep.subr.bf16.mxu0 0
    %532 = vmatpush1.bf16.msra.mxu0 %v488
    %533 = vmatprep.subr.bf16.mxu0 0
    %534 = vmatpush1.bf16.msra.mxu0 %v487
    %535 = vmatprep.subr.bf16.mxu0 0
    %536 = vmatpush2.bf16.msra.mxu0 %v502
    %537 = vmatprep.subr.bf16.mxu0 0
    %538 = vmatpush2.bf16.msra.mxu0 %v501
    %539 = vmatprep.subr.bf16.mxu0 0
    %540 = vmatpush2.bf16.msra.mxu0 %v500
    %541 = vmatprep.subr.bf16.mxu0 0
    %542 = vmatpush2.bf16.msra.mxu0 %v499
    %543 = vmatprep.subr.bf16.mxu0 0
    %544 = vmatpush2.bf16.msra.mxu0 %v498
    %545 = vmatprep.subr.bf16.mxu0 0
    %546 = vmatpush2.bf16.msra.mxu0 %v497
    %547 = vmatprep.subr.bf16.mxu0 0
    %548 = vmatpush2.bf16.msra.mxu0 %v496
    %549 = vmatprep.subr.bf16.mxu0 0
    %550 = vmatpush2.bf16.msra.mxu0 %v495
    %551 = vmatprep.mubr.bf16.mxu0 %v418
    %552 = vmatmul.mubr.bf16.gmra.mxu0 %v417
    %v553 = vpop.f32.mrf.mxu0
    %v554 = vadd.f32 %v422, %v553
    %v555 = vpop.f32.mrf.mxu0
    %v556 = vpop.f32.mrf.mxu0
    %v557 = vadd.f32 %v422, %v556
    %v558 = vpop.f32.mrf.mxu0
    %559 = vdwg.mxu0
    %v560 = vmax.f32 %v554, 0.0
    %v561 = vmax.f32 %v557, 0.0
    %v562 = vadd.f32 %v560, %v258
    %v563 = vadd.f32 %v561, %v259
    %v564 = vld [vmem:[%s6] sm:$0xff]
    %v565 = vld [vmem:[%s6 + $0x8] sm:$0xff]
    %v566 = vld [vmem:[%s6 + $0x10] sm:$0xff]
    %v567 = vld [vmem:[%s6 + $0x18] sm:$0xff]
    %v568 = vld [vmem:[%s6 + $0x20] sm:$0xff]
    %v569 = vld [vmem:[%s6 + $0x28] sm:$0xff]
    %v570 = vld [vmem:[%s6 + $0x30] sm:$0xff]
    %v571 = vld [vmem:[%s6 + $0x38] sm:$0xff]
    %v572 = vld [vmem:[%s7] sm:$0xf]
    %v573 = vld [vmem:[%s7 + $0x4] sm:$0xf]
    %v574 = vld [vmem:[%s7 + $0x8] sm:$0xf]
    %v575 = vld [vmem:[%s7 + $0xc] sm:$0xf]
    %v576 = vld [vmem:[%s7 + $0x10] sm:$0xf]
    %v577 = vld [vmem:[%s7 + $0x14] sm:$0xf]
    %v578 = vld [vmem:[%s7 + $0x18] sm:$0xf]
    %v579 = vld [vmem:[%s7 + $0x1c] sm:$0xf]
    %v580 = vld [vmem:[%s7 + $0x20] sm:$0xf]
    %v581 = vld [vmem:[%s7 + $0x24] sm:$0xf]
    %v582 = vld [vmem:[%s7 + $0x28] sm:$0xf]
    %v583 = vld [vmem:[%s7 + $0x2c] sm:$0xf]
    %v584 = vld [vmem:[%s7 + $0x30] sm:$0xf]
    %v585 = vld [vmem:[%s7 + $0x34] sm:$0xf]
    %v586 = vld [vmem:[%s7 + $0x38] sm:$0xf]
    %v587 = vld [vmem:[%s7 + $0x3c] sm:$0xf]
    %v588 = vld [vmem:[%s7 + $0x40] sm:$0xf]
    %v589 = vld [vmem:[%s7 + $0x44] sm:$0xf]
    %v590 = vld [vmem:[%s7 + $0x48] sm:$0xf]
    %v591 = vld [vmem:[%s7 + $0x4c] sm:$0xf]
    %v592 = vld [vmem:[%s7 + $0x50] sm:$0xf]
    %v593 = vld [vmem:[%s7 + $0x54] sm:$0xf]
    %v594 = vld [vmem:[%s7 + $0x58] sm:$0xf]
    %v595 = vld [vmem:[%s7 + $0x5c] sm:$0xf]
    %v596 = vld [vmem:[#allocation10] sm:$0xff]
    %v597 = vpack.c.bf16 %v563, %v562
    %v606 = vunpack.c.l.b16 %v564
    %v607 = vunpack.c.h.b16 %v564
    %v608 = vunpack.c.l.b16 %v565
    %v609 = vunpack.c.h.b16 %v565
    %v610 = vunpack.c.l.b16 %v566
    %v611 = vunpack.c.h.b16 %v566
    %v612 = vunpack.c.l.b16 %v567
    %v613 = vunpack.c.h.b16 %v567
    %v614 = vunpack.c.l.b16 %v568
    %v615 = vunpack.c.h.b16 %v568
    %v616 = vunpack.c.l.b16 %v569
    %v617 = vunpack.c.h.b16 %v569
    %v618 = vunpack.c.l.b16 %v570
    %v619 = vunpack.c.h.b16 %v570
    %v620 = vunpack.c.l.b16 %v571
    %v621 = vunpack.c.h.b16 %v571
    %v622 = vpack.c.b16 %v608, %v606
    %v623 = vpack.c.b16 %v609, %v607
    %v624 = vpack.c.b16 %v612, %v610
    %v625 = vpack.c.b16 %v613, %v611
    %v626 = vpack.c.b16 %v616, %v614
    %v627 = vpack.c.b16 %v617, %v615
    %v628 = vpack.c.b16 %v620, %v618
    %v629 = vpack.c.b16 %v621, %v619
    %v639 = vsel %vm334, %v597, 0
    %641 = vmatprep.subr.bf16.mxu0 0
    %642 = vmatpush1.bf16.msra.mxu0 0
    %643 = vmatprep.subr.bf16.mxu0 0
    %644 = vmatpush1.bf16.msra.mxu0 0
    %645 = vmatprep.subr.bf16.mxu0 0
    %646 = vmatpush1.bf16.msra.mxu0 0
    %647 = vmatprep.subr.bf16.mxu0 0
    %648 = vmatpush1.bf16.msra.mxu0 0
    %649 = vmatprep.subr.bf16.mxu0 %v629
    %650 = vmatpush1.bf16.msra.mxu0 %v628
    %651 = vmatprep.subr.bf16.mxu0 %v627
    %652 = vmatpush1.bf16.msra.mxu0 %v626
    %653 = vmatprep.subr.bf16.mxu0 %v625
    %654 = vmatpush1.bf16.msra.mxu0 %v624
    %655 = vmatprep.subr.bf16.mxu0 %v623
    %656 = vmatpush1.bf16.msra.mxu0 %v622
    %657 = vmatprep.subr.bf16.mxu0 0
    %658 = vmatpush2.bf16.msra.mxu0 0
    %659 = vmatprep.subr.bf16.mxu0 0
    %660 = vmatpush2.bf16.msra.mxu0 0
    %661 = vmatprep.subr.bf16.mxu0 0
    %662 = vmatpush2.bf16.msra.mxu0 0
    %663 = vmatprep.subr.bf16.mxu0 0
    %664 = vmatpush2.bf16.msra.mxu0 0
    %665 = vmatprep.subr.bf16.mxu0 0
    %666 = vmatpush2.bf16.msra.mxu0 0
    %667 = vmatprep.subr.bf16.mxu0 0
    %668 = vmatpush2.bf16.msra.mxu0 0
    %669 = vmatprep.subr.bf16.mxu0 0
    %670 = vmatpush2.bf16.msra.mxu0 0
    %671 = vmatprep.subr.bf16.mxu0 0
    %672 = vmatpush2.bf16.msra.mxu0 0
    %673 = vmatprep.mubr.bf16.mxu0 0
    %674 = vmatmul.mubr.bf16.gmra.mxu0 %v639
    %v675 = vpop.f32.mrf.mxu0
    %v676 = vadd.f32 0.0, %v675
    %v677 = vpop.f32.mrf.mxu0
    %v678 = vadd.f32 0.0, %v677
    %v679 = vpop.f32.mrf.mxu0
    %v680 = vadd.f32 0.0, %v679
    %v681 = vpop.f32.mrf.mxu0
    %v682 = vadd.f32 0.0, %v681
    %683 = vdwg.mxu0
    %v684 = vpack.c.bf16 %v680, %v676
    %v685 = vpack.c.bf16 %v682, %v678
    %687 = vrot.lane.b32.xlu0 %v684, 64
    %v688 = vpop.permute.xlu0 %687
    %vm689 = vcmask 130048
    %v691 = vsel %vm689, %v684, 0
    %v694 = vsel %vm689, %v688, 0
    %696 = vmatprep.subr.bf16.mxu0 0
    %697 = vmatpush1.bf16.xpose.msra.mxu0 0
    %698 = vmatprep.subr.bf16.mxu0 0
    %699 = vmatpush1.bf16.xpose.msra.mxu0 0
    %700 = vmatprep.subr.bf16.mxu0 0
    %701 = vmatpush1.bf16.xpose.msra.mxu0 0
    %702 = vmatprep.subr.bf16.mxu0 0
    %703 = vmatpush1.bf16.xpose.msra.mxu0 0
    %704 = vmatprep.subr.bf16.mxu0 0
    %705 = vmatpush1.bf16.xpose.msra.mxu0 0
    %706 = vmatprep.subr.bf16.mxu0 0
    %707 = vmatpush1.bf16.xpose.msra.mxu0 0
    %708 = vmatprep.subr.bf16.mxu0 0
    %709 = vmatpush1.bf16.xpose.msra.mxu0 0
    %710 = vmatprep.subr.bf16.mxu0 0
    %711 = vmatpush1.bf16.xpose.msra.mxu0 %v694
    %712 = vmatprep.subr.bf16.mxu0 0
    %713 = vmatpush2.bf16.xpose.msra.mxu0 0
    %714 = vmatprep.subr.bf16.mxu0 0
    %715 = vmatpush2.bf16.xpose.msra.mxu0 0
    %716 = vmatprep.subr.bf16.mxu0 0
    %717 = vmatpush2.bf16.xpose.msra.mxu0 0
    %718 = vmatprep.subr.bf16.mxu0 0
    %719 = vmatpush2.bf16.xpose.msra.mxu0 0
    %720 = vmatprep.subr.bf16.mxu0 0
    %721 = vmatpush2.bf16.xpose.msra.mxu0 0
    %722 = vmatprep.subr.bf16.mxu0 0
    %723 = vmatpush2.bf16.xpose.msra.mxu0 0
    %724 = vmatprep.subr.bf16.mxu0 0
    %725 = vmatpush2.bf16.xpose.msra.mxu0 0
    %726 = vmatprep.subr.bf16.mxu0 0
    %727 = vmatpush2.bf16.xpose.msra.mxu0 0
    %728 = vmatprep.mubr.bf16.mxu0 0
    %729 = vmatmul.mubr.bf16.gmra.mxu0 %v691
    %v730 = vpop.f32.mrf.mxu0
    %v731 = vadd.f32 %v260, %v730
    %v732 = vpop.f32.mrf.mxu0
    %v733 = vpop.f32.mrf.mxu0
    %v734 = vadd.f32 %v261, %v733
    %v735 = vpop.f32.mrf.mxu0
    %736 = vdwg.mxu0
    %v737 = vsel %vm689, %v731, -inf
    %738 = vmax.xlane.f32.xlu0 %v737
    %v739 = vpop.xlane.xlu0 %738
    %v740 = vsel %vm689, %v734, -inf
    %741 = vmax.xlane.f32.xlu0 %v740
    %v742 = vpop.xlane.xlu0 %741
    %v743 = vsub.f32 %v731, %v739
    %v744 = vsub.f32 %v734, %v742
    %v745 = vmul.f32 %v743, 1.442695
    %v746 = vpow.pop %v745
    %v747 = vmul.f32 %v744, 1.442695
    %v748 = vpow.pop %v747
    %v749 = vsel %vm689, %v746, 0.0
    %750 = vadd.xlane.f32.xlu0 %v749
    %v751 = vpop.xlane.xlu0 %750
    %v752 = vsel %vm689, %v748, 0.0
    %753 = vadd.xlane.f32.xlu0 %v752
    %v754 = vpop.xlane.xlu0 %753
    %v755 = vrcp.pop %v751
    %v756 = vrcp.pop %v754
    %v757 = vmul.f32 %v746, %v755
    %v758 = vmul.f32 %v748, %v756
    %v759 = vpack.c.bf16 %v758, %v757
    %v761 = vsel %vm689, %v759, 0
    %763 = vmatprep.subr.bf16.mxu0 0
    %764 = vmatpush1.bf16.msra.mxu0 0
    %765 = vmatprep.subr.bf16.mxu0 0
    %766 = vmatpush1.bf16.msra.mxu0 0
    %767 = vmatprep.subr.bf16.mxu0 0
    %768 = vmatpush1.bf16.msra.mxu0 0
    %769 = vmatprep.subr.bf16.mxu0 0
    %770 = vmatpush1.bf16.msra.mxu0 0
    %771 = vmatprep.subr.bf16.mxu0 0
    %772 = vmatpush1.bf16.msra.mxu0 0
    %773 = vmatprep.subr.bf16.mxu0 0
    %774 = vmatpush1.bf16.msra.mxu0 0
    %775 = vmatprep.subr.bf16.mxu0 0
    %776 = vmatpush1.bf16.msra.mxu0 0
    %777 = vmatprep.subr.bf16.mxu0 0
    %778 = vmatpush1.bf16.msra.mxu0 %v685
    %779 = vmatprep.subr.bf16.mxu0 0
    %780 = vmatpush2.bf16.msra.mxu0 0
    %781 = vmatprep.subr.bf16.mxu0 0
    %782 = vmatpush2.bf16.msra.mxu0 0
    %783 = vmatprep.subr.bf16.mxu0 0
    %784 = vmatpush2.bf16.msra.mxu0 0
    %785 = vmatprep.subr.bf16.mxu0 0
    %786 = vmatpush2.bf16.msra.mxu0 0
    %787 = vmatprep.subr.bf16.mxu0 0
    %788 = vmatpush2.bf16.msra.mxu0 0
    %789 = vmatprep.subr.bf16.mxu0 0
    %790 = vmatpush2.bf16.msra.mxu0 0
    %791 = vmatprep.subr.bf16.mxu0 0
    %792 = vmatpush2.bf16.msra.mxu0 0
    %793 = vmatprep.subr.bf16.mxu0 0
    %794 = vmatpush2.bf16.msra.mxu0 0
    %795 = vmatprep.mubr.bf16.mxu0 0
    %796 = vmatmul.mubr.bf16.gmra.mxu0 %v761
    %v797 = vpop.f32.mrf.mxu0
    %v798 = vadd.f32 0.0, %v797
    %v799 = vpop.f32.mrf.mxu0
    %v800 = vpop.f32.mrf.mxu0
    %v801 = vadd.f32 0.0, %v800
    %v802 = vpop.f32.mrf.mxu0
    %803 = vdwg.mxu0
    %804 = vrot.lane.b32.xlu0 %v684, 112
    %v805 = vpop.permute.xlu0 %804
    %806 = vrot.lane.b32.xlu0 %v684, 48
    %v807 = vpop.permute.xlu0 %806
    %v809 = vsel %vm689, %v805, 0
    %v812 = vsel %vm689, %v807, 0
    %814 = vmatprep.subr.bf16.mxu0 0
    %815 = vmatpush1.bf16.xpose.msra.mxu0 0
    %816 = vmatprep.subr.bf16.mxu0 0
    %817 = vmatpush1.bf16.xpose.msra.mxu0 0
    %818 = vmatprep.subr.bf16.mxu0 0
    %819 = vmatpush1.bf16.xpose.msra.mxu0 0
    %820 = vmatprep.subr.bf16.mxu0 0
    %821 = vmatpush1.bf16.xpose.msra.mxu0 0
    %822 = vmatprep.subr.bf16.mxu0 0
    %823 = vmatpush1.bf16.xpose.msra.mxu0 0
    %824 = vmatprep.subr.bf16.mxu0 0
    %825 = vmatpush1.bf16.xpose.msra.mxu0 0
    %826 = vmatprep.subr.bf16.mxu0 0
    %827 = vmatpush1.bf16.xpose.msra.mxu0 0
    %828 = vmatprep.subr.bf16.mxu0 0
    %829 = vmatpush1.bf16.xpose.msra.mxu0 %v812
    %830 = vmatprep.subr.bf16.mxu0 0
    %831 = vmatpush2.bf16.xpose.msra.mxu0 0
    %832 = vmatprep.subr.bf16.mxu0 0
    %833 = vmatpush2.bf16.xpose.msra.mxu0 0
    %834 = vmatprep.subr.bf16.mxu0 0
    %835 = vmatpush2.bf16.xpose.msra.mxu0 0
    %836 = vmatprep.subr.bf16.mxu0 0
    %837 = vmatpush2.bf16.xpose.msra.mxu0 0
    %838 = vmatprep.subr.bf16.mxu0 0
    %839 = vmatpush2.bf16.xpose.msra.mxu0 0
    %840 = vmatprep.subr.bf16.mxu0 0
    %841 = vmatpush2.bf16.xpose.msra.mxu0 0
    %842 = vmatprep.subr.bf16.mxu0 0
    %843 = vmatpush2.bf16.xpose.msra.mxu0 0
    %844 = vmatprep.subr.bf16.mxu0 0
    %845 = vmatpush2.bf16.xpose.msra.mxu0 0
    %846 = vmatprep.mubr.bf16.mxu0 0
    %847 = vmatmul.mubr.bf16.gmra.mxu0 %v809
    %v848 = vpop.f32.mrf.mxu0
    %v849 = vadd.f32 %v260, %v848
    %v850 = vpop.f32.mrf.mxu0
    %v851 = vpop.f32.mrf.mxu0
    %v852 = vadd.f32 %v261, %v851
    %v853 = vpop.f32.mrf.mxu0
    %854 = vdwg.mxu0
    %v855 = vsel %vm689, %v849, -inf
    %856 = vmax.xlane.f32.xlu0 %v855
    %v857 = vpop.xlane.xlu0 %856
    %v858 = vsel %vm689, %v852, -inf
    %859 = vmax.xlane.f32.xlu0 %v858
    %v860 = vpop.xlane.xlu0 %859
    %v861 = vsub.f32 %v849, %v857
    %v862 = vsub.f32 %v852, %v860
    %v863 = vmul.f32 %v861, 1.442695
    %v864 = vpow.pop %v863
    %v865 = vmul.f32 %v862, 1.442695
    %v866 = vpow.pop %v865
    %v867 = vsel %vm689, %v864, 0.0
    %868 = vadd.xlane.f32.xlu0 %v867
    %v869 = vpop.xlane.xlu0 %868
    %v870 = vsel %vm689, %v866, 0.0
    %871 = vadd.xlane.f32.xlu0 %v870
    %v872 = vpop.xlane.xlu0 %871
    %v873 = vrcp.pop %v869
    %v874 = vrcp.pop %v872
    %v875 = vmul.f32 %v864, %v873
    %v876 = vmul.f32 %v866, %v874
    %v877 = vpack.c.bf16 %v876, %v875
    %879 = vrot.lane.b32.xlu0 %v685, 112
    %v880 = vpop.permute.xlu0 %879
    %v883 = vsel %vm689, %v877, 0
    %885 = vmatprep.subr.bf16.mxu0 0
    %886 = vmatpush1.bf16.msra.mxu0 0
    %887 = vmatprep.subr.bf16.mxu0 0
    %888 = vmatpush1.bf16.msra.mxu0 0
    %889 = vmatprep.subr.bf16.mxu0 0
    %890 = vmatpush1.bf16.msra.mxu0 0
    %891 = vmatprep.subr.bf16.mxu0 0
    %892 = vmatpush1.bf16.msra.mxu0 0
    %893 = vmatprep.subr.bf16.mxu0 0
    %894 = vmatpush1.bf16.msra.mxu0 0
    %895 = vmatprep.subr.bf16.mxu0 0
    %896 = vmatpush1.bf16.msra.mxu0 0
    %897 = vmatprep.subr.bf16.mxu0 0
    %898 = vmatpush1.bf16.msra.mxu0 0
    %899 = vmatprep.subr.bf16.mxu0 0
    %900 = vmatpush1.bf16.msra.mxu0 %v880
    %901 = vmatprep.subr.bf16.mxu0 0
    %902 = vmatpush2.bf16.msra.mxu0 0
    %903 = vmatprep.subr.bf16.mxu0 0
    %904 = vmatpush2.bf16.msra.mxu0 0
    %905 = vmatprep.subr.bf16.mxu0 0
    %906 = vmatpush2.bf16.msra.mxu0 0
    %907 = vmatprep.subr.bf16.mxu0 0
    %908 = vmatpush2.bf16.msra.mxu0 0
    %909 = vmatprep.subr.bf16.mxu0 0
    %910 = vmatpush2.bf16.msra.mxu0 0
    %911 = vmatprep.subr.bf16.mxu0 0
    %912 = vmatpush2.bf16.msra.mxu0 0
    %913 = vmatprep.subr.bf16.mxu0 0
    %914 = vmatpush2.bf16.msra.mxu0 0
    %915 = vmatprep.subr.bf16.mxu0 0
    %916 = vmatpush2.bf16.msra.mxu0 0
    %917 = vmatprep.mubr.bf16.mxu0 0
    %918 = vmatmul.mubr.bf16.gmra.mxu0 %v883
    %v919 = vpop.f32.mrf.mxu0
    %v920 = vadd.f32 0.0, %v919
    %v921 = vpop.f32.mrf.mxu0
    %v922 = vpop.f32.mrf.mxu0
    %v923 = vadd.f32 0.0, %v922
    %v924 = vpop.f32.mrf.mxu0
    %925 = vdwg.mxu0
    %926 = vrot.lane.b32.xlu0 %v684, 96
    %v927 = vpop.permute.xlu0 %926
    %928 = vrot.lane.b32.xlu0 %v684, 32
    %v929 = vpop.permute.xlu0 %928
    %v931 = vsel %vm689, %v927, 0
    %v934 = vsel %vm689, %v929, 0
    %936 = vmatprep.subr.bf16.mxu0 0
    %937 = vmatpush1.bf16.xpose.msra.mxu0 0
    %938 = vmatprep.subr.bf16.mxu0 0
    %939 = vmatpush1.bf16.xpose.msra.mxu0 0
    %940 = vmatprep.subr.bf16.mxu0 0
    %941 = vmatpush1.bf16.xpose.msra.mxu0 0
    %942 = vmatprep.subr.bf16.mxu0 0
    %943 = vmatpush1.bf16.xpose.msra.mxu0 0
    %944 = vmatprep.subr.bf16.mxu0 0
    %945 = vmatpush1.bf16.xpose.msra.mxu0 0
    %946 = vmatprep.subr.bf16.mxu0 0
    %947 = vmatpush1.bf16.xpose.msra.mxu0 0
    %948 = vmatprep.subr.bf16.mxu0 0
    %949 = vmatpush1.bf16.xpose.msra.mxu0 0
    %950 = vmatprep.subr.bf16.mxu0 0
    %951 = vmatpush1.bf16.xpose.msra.mxu0 %v934
    %952 = vmatprep.subr.bf16.mxu0 0
    %953 = vmatpush2.bf16.xpose.msra.mxu0 0
    %954 = vmatprep.subr.bf16.mxu0 0
    %955 = vmatpush2.bf16.xpose.msra.mxu0 0
    %956 = vmatprep.subr.bf16.mxu0 0
    %957 = vmatpush2.bf16.xpose.msra.mxu0 0
    %958 = vmatprep.subr.bf16.mxu0 0
    %959 = vmatpush2.bf16.xpose.msra.mxu0 0
    %960 = vmatprep.subr.bf16.mxu0 0
    %961 = vmatpush2.bf16.xpose.msra.mxu0 0
    %962 = vmatprep.subr.bf16.mxu0 0
    %963 = vmatpush2.bf16.xpose.msra.mxu0 0
    %964 = vmatprep.subr.bf16.mxu0 0
    %965 = vmatpush2.bf16.xpose.msra.mxu0 0
    %966 = vmatprep.subr.bf16.mxu0 0
    %967 = vmatpush2.bf16.xpose.msra.mxu0 0
    %968 = vmatprep.mubr.bf16.mxu0 0
    %969 = vmatmul.mubr.bf16.gmra.mxu0 %v931
    %v970 = vpop.f32.mrf.mxu0
    %v971 = vadd.f32 %v260, %v970
    %v972 = vpop.f32.mrf.mxu0
    %v973 = vpop.f32.mrf.mxu0
    %v974 = vadd.f32 %v261, %v973
    %v975 = vpop.f32.mrf.mxu0
    %976 = vdwg.mxu0
    %v977 = vsel %vm689, %v971, -inf
    %978 = vmax.xlane.f32.xlu0 %v977
    %v979 = vpop.xlane.xlu0 %978
    %v980 = vsel %vm689, %v974, -inf
    %981 = vmax.xlane.f32.xlu0 %v980
    %v982 = vpop.xlane.xlu0 %981
    %v983 = vsub.f32 %v971, %v979
    %v984 = vsub.f32 %v974, %v982
    %v985 = vmul.f32 %v983, 1.442695
    %v986 = vpow.pop %v985
    %v987 = vmul.f32 %v984, 1.442695
    %v988 = vpow.pop %v987
    %v989 = vsel %vm689, %v986, 0.0
    %990 = vadd.xlane.f32.xlu0 %v989
    %v991 = vpop.xlane.xlu0 %990
    %v992 = vsel %vm689, %v988, 0.0
    %993 = vadd.xlane.f32.xlu0 %v992
    %v994 = vpop.xlane.xlu0 %993
    %v995 = vrcp.pop %v991
    %v996 = vrcp.pop %v994
    %v997 = vmul.f32 %v986, %v995
    %v998 = vmul.f32 %v988, %v996
    %v999 = vpack.c.bf16 %v998, %v997
    %1000 = vrot.lane.b32.xlu0 %v685, 96
    %v1001 = vpop.permute.xlu0 %1000
    %v1004 = vsel %vm689, %v999, 0
    %1006 = vmatprep.subr.bf16.mxu0 0
    %1007 = vmatpush1.bf16.msra.mxu0 0
    %1008 = vmatprep.subr.bf16.mxu0 0
    %1009 = vmatpush1.bf16.msra.mxu0 0
    %1010 = vmatprep.subr.bf16.mxu0 0
    %1011 = vmatpush1.bf16.msra.mxu0 0
    %1012 = vmatprep.subr.bf16.mxu0 0
    %1013 = vmatpush1.bf16.msra.mxu0 0
    %1014 = vmatprep.subr.bf16.mxu0 0
    %1015 = vmatpush1.bf16.msra.mxu0 0
    %1016 = vmatprep.subr.bf16.mxu0 0
    %1017 = vmatpush1.bf16.msra.mxu0 0
    %1018 = vmatprep.subr.bf16.mxu0 0
    %1019 = vmatpush1.bf16.msra.mxu0 0
    %1020 = vmatprep.subr.bf16.mxu0 0
    %1021 = vmatpush1.bf16.msra.mxu0 %v1001
    %1022 = vmatprep.subr.bf16.mxu0 0
    %1023 = vmatpush2.bf16.msra.mxu0 0
    %1024 = vmatprep.subr.bf16.mxu0 0
    %1025 = vmatpush2.bf16.msra.mxu0 0
    %1026 = vmatprep.subr.bf16.mxu0 0
    %1027 = vmatpush2.bf16.msra.mxu0 0
    %1028 = vmatprep.subr.bf16.mxu0 0
    %1029 = vmatpush2.bf16.msra.mxu0 0
    %1030 = vmatprep.subr.bf16.mxu0 0
    %1031 = vmatpush2.bf16.msra.mxu0 0
    %1032 = vmatprep.subr.bf16.mxu0 0
    %1033 = vmatpush2.bf16.msra.mxu0 0
    %1034 = vmatprep.subr.bf16.mxu0 0
    %1035 = vmatpush2.bf16.msra.mxu0 0
    %1036 = vmatprep.subr.bf16.mxu0 0
    %1037 = vmatpush2.bf16.msra.mxu0 0
    %1038 = vmatprep.mubr.bf16.mxu0 0
    %1039 = vmatmul.mubr.bf16.gmra.mxu0 %v1004
    %v1040 = vpop.f32.mrf.mxu0
    %v1041 = vadd.f32 0.0, %v1040
    %v1042 = vpop.f32.mrf.mxu0
    %v1043 = vpop.f32.mrf.mxu0
    %v1044 = vadd.f32 0.0, %v1043
    %v1045 = vpop.f32.mrf.mxu0
    %1046 = vdwg.mxu0
    %1047 = vrot.lane.b32.xlu0 %v684, 80
    %v1048 = vpop.permute.xlu0 %1047
    %1049 = vrot.lane.b32.xlu0 %v684, 16
    %v1050 = vpop.permute.xlu0 %1049
    %v1052 = vsel %vm689, %v1048, 0
    %v1055 = vsel %vm689, %v1050, 0
    %1057 = vmatprep.subr.bf16.mxu0 0
    %1058 = vmatpush1.bf16.xpose.msra.mxu0 0
    %1059 = vmatprep.subr.bf16.mxu0 0
    %1060 = vmatpush1.bf16.xpose.msra.mxu0 0
    %1061 = vmatprep.subr.bf16.mxu0 0
    %1062 = vmatpush1.bf16.xpose.msra.mxu0 0
    %1063 = vmatprep.subr.bf16.mxu0 0
    %1064 = vmatpush1.bf16.xpose.msra.mxu0 0
    %1065 = vmatprep.subr.bf16.mxu0 0
    %1066 = vmatpush1.bf16.xpose.msra.mxu0 0
    %1067 = vmatprep.subr.bf16.mxu0 0
    %1068 = vmatpush1.bf16.xpose.msra.mxu0 0
    %1069 = vmatprep.subr.bf16.mxu0 0
    %1070 = vmatpush1.bf16.xpose.msra.mxu0 0
    %1071 = vmatprep.subr.bf16.mxu0 0
    %1072 = vmatpush1.bf16.xpose.msra.mxu0 %v1055
    %1073 = vmatprep.subr.bf16.mxu0 0
    %1074 = vmatpush2.bf16.xpose.msra.mxu0 0
    %1075 = vmatprep.subr.bf16.mxu0 0
    %1076 = vmatpush2.bf16.xpose.msra.mxu0 0
    %1077 = vmatprep.subr.bf16.mxu0 0
    %1078 = vmatpush2.bf16.xpose.msra.mxu0 0
    %1079 = vmatprep.subr.bf16.mxu0 0
    %1080 = vmatpush2.bf16.xpose.msra.mxu0 0
    %1081 = vmatprep.subr.bf16.mxu0 0
    %1082 = vmatpush2.bf16.xpose.msra.mxu0 0
    %1083 = vmatprep.subr.bf16.mxu0 0
    %1084 = vmatpush2.bf16.xpose.msra.mxu0 0
    %1085 = vmatprep.subr.bf16.mxu0 0
    %1086 = vmatpush2.bf16.xpose.msra.mxu0 0
    %1087 = vmatprep.subr.bf16.mxu0 0
    %1088 = vmatpush2.bf16.xpose.msra.mxu0 0
    %1089 = vmatprep.mubr.bf16.mxu0 0
    %1090 = vmatmul.mubr.bf16.gmra.mxu0 %v1052
    %v1091 = vpop.f32.mrf.mxu0
    %v1092 = vadd.f32 %v260, %v1091
    %v1093 = vpop.f32.mrf.mxu0
    %v1094 = vpop.f32.mrf.mxu0
    %v1095 = vadd.f32 %v261, %v1094
    %v1096 = vpop.f32.mrf.mxu0
    %1097 = vdwg.mxu0
    %v1098 = vsel %vm689, %v1092, -inf
    %1099 = vmax.xlane.f32.xlu0 %v1098
    %v1100 = vpop.xlane.xlu0 %1099
    %v1101 = vsel %vm689, %v1095, -inf
    %1102 = vmax.xlane.f32.xlu0 %v1101
    %v1103 = vpop.xlane.xlu0 %1102
    %v1104 = vsub.f32 %v1092, %v1100
    %v1105 = vsub.f32 %v1095, %v1103
    %v1106 = vmul.f32 %v1104, 1.442695
    %v1107 = vpow.pop %v1106
    %v1108 = vmul.f32 %v1105, 1.442695
    %v1109 = vpow.pop %v1108
    %v1110 = vsel %vm689, %v1107, 0.0
    %1111 = vadd.xlane.f32.xlu0 %v1110
    %v1112 = vpop.xlane.xlu0 %1111
    %v1113 = vsel %vm689, %v1109, 0.0
    %1114 = vadd.xlane.f32.xlu0 %v1113
    %v1115 = vpop.xlane.xlu0 %1114
    %v1116 = vrcp.pop %v1112
    %v1117 = vrcp.pop %v1115
    %v1118 = vmul.f32 %v1107, %v1116
    %v1119 = vmul.f32 %v1109, %v1117
    %v1120 = vpack.c.bf16 %v1119, %v1118
    %1121 = vrot.lane.b32.xlu0 %v685, 80
    %v1122 = vpop.permute.xlu0 %1121
    %v1125 = vsel %vm689, %v1120, 0
    %1127 = vmatprep.subr.bf16.mxu0 0
    %1128 = vmatpush1.bf16.msra.mxu0 0
    %1129 = vmatprep.subr.bf16.mxu0 0
    %1130 = vmatpush1.bf16.msra.mxu0 0
    %1131 = vmatprep.subr.bf16.mxu0 0
    %1132 = vmatpush1.bf16.msra.mxu0 0
    %1133 = vmatprep.subr.bf16.mxu0 0
    %1134 = vmatpush1.bf16.msra.mxu0 0
    %1135 = vmatprep.subr.bf16.mxu0 0
    %1136 = vmatpush1.bf16.msra.mxu0 0
    %1137 = vmatprep.subr.bf16.mxu0 0
    %1138 = vmatpush1.bf16.msra.mxu0 0
    %1139 = vmatprep.subr.bf16.mxu0 0
    %1140 = vmatpush1.bf16.msra.mxu0 0
    %1141 = vmatprep.subr.bf16.mxu0 0
    %1142 = vmatpush1.bf16.msra.mxu0 %v1122
    %1143 = vmatprep.subr.bf16.mxu0 0
    %1144 = vmatpush2.bf16.msra.mxu0 0
    %1145 = vmatprep.subr.bf16.mxu0 0
    %1146 = vmatpush2.bf16.msra.mxu0 0
    %1147 = vmatprep.subr.bf16.mxu0 0
    %1148 = vmatpush2.bf16.msra.mxu0 0
    %1149 = vmatprep.subr.bf16.mxu0 0
    %1150 = vmatpush2.bf16.msra.mxu0 0
    %1151 = vmatprep.subr.bf16.mxu0 0
    %1152 = vmatpush2.bf16.msra.mxu0 0
    %1153 = vmatprep.subr.bf16.mxu0 0
    %1154 = vmatpush2.bf16.msra.mxu0 0
    %1155 = vmatprep.subr.bf16.mxu0 0
    %1156 = vmatpush2.bf16.msra.mxu0 0
    %1157 = vmatprep.subr.bf16.mxu0 0
    %1158 = vmatpush2.bf16.msra.mxu0 0
    %1159 = vmatprep.mubr.bf16.mxu0 0
    %1160 = vmatmul.mubr.bf16.gmra.mxu0 %v1125
    %v1161 = vpop.f32.mrf.mxu0
    %v1162 = vadd.f32 0.0, %v1161
    %v1163 = vpop.f32.mrf.mxu0
    %v1164 = vpop.f32.mrf.mxu0
    %v1165 = vadd.f32 0.0, %v1164
    %v1166 = vpop.f32.mrf.mxu0
    %1167 = vdwg.mxu0
    %1170 = vrot.lane.b32.xlu0 %v920, 16
    %v1171 = vpop.permute.xlu0 %1170
    %1172 = vrot.lane.b32.xlu0 %v923, 16
    %v1173 = vpop.permute.xlu0 %1172
    %1178 = vrot.lane.b32.xlu0 %v1041, 32
    %v1179 = vpop.permute.xlu0 %1178
    %1180 = vrot.lane.b32.xlu0 %v1044, 32
    %v1181 = vpop.permute.xlu0 %1180
    %1186 = vrot.lane.b32.xlu0 %v1162, 48
    %v1187 = vpop.permute.xlu0 %1186
    %1188 = vrot.lane.b32.xlu0 %v1165, 48
    %v1189 = vpop.permute.xlu0 %1188
    %v1192 = vsel %vm689, %v798, %v1171
    %v1193 = vsel %vm689, %v801, %v1173
    %vm1194 = vcmask 261120
    %v1195 = vsel %vm1194, %v1192, %v1179
    %v1196 = vsel %vm1194, %v1193, %v1181
    %vm1197 = vcmask 392192
    %v1198 = vsel %vm1197, %v1195, %v1187
    %v1199 = vsel %vm1197, %v1196, %v1189
    %v1200 = vpack.c.bf16 %v1199, %v1198
    %v1201 = vlaneseq
    %v1202 = vshrl.u32 %v1201, 7
    %v1203 = vsub.s32 0, %v1202
    %v1204 = vrot.slane %v596, %v1203
    %v1213 = vunpack.c.l.b16 %v572
    %v1214 = vunpack.c.l.b16 %v573
    %v1215 = vunpack.c.l.b16 %v574
    %v1216 = vunpack.c.l.b16 %v575
    %v1217 = vunpack.c.l.b16 %v576
    %v1218 = vunpack.c.l.b16 %v577
    %v1219 = vunpack.c.l.b16 %v578
    %v1220 = vunpack.c.l.b16 %v579
    %v1221 = vpack.c.b16 %v1214, %v1213
    %v1222 = vpack.c.b16 %v1216, %v1215
    %v1223 = vpack.c.b16 %v1218, %v1217
    %v1224 = vpack.c.b16 %v1220, %v1219
    %v1230 = vsel %vm334, %v1200, 0
    %1232 = vmatprep.subr.bf16.mxu0 0
    %1233 = vmatpush1.bf16.msra.mxu0 0
    %1234 = vmatprep.subr.bf16.mxu0 0
    %1235 = vmatpush1.bf16.msra.mxu0 0
    %1236 = vmatprep.subr.bf16.mxu0 0
    %1237 = vmatpush1.bf16.msra.mxu0 0
    %1238 = vmatprep.subr.bf16.mxu0 0
    %1239 = vmatpush1.bf16.msra.mxu0 0
    %1240 = vmatprep.subr.bf16.mxu0 0
    %1241 = vmatpush1.bf16.msra.mxu0 %v1224
    %1242 = vmatprep.subr.bf16.mxu0 0
    %1243 = vmatpush1.bf16.msra.mxu0 %v1223
    %1244 = vmatprep.subr.bf16.mxu0 0
    %1245 = vmatpush1.bf16.msra.mxu0 %v1222
    %1246 = vmatprep.subr.bf16.mxu0 0
    %1247 = vmatpush1.bf16.msra.mxu0 %v1221
    %1248 = vmatprep.subr.bf16.mxu0 0
    %1249 = vmatpush2.bf16.msra.mxu0 0
    %1250 = vmatprep.subr.bf16.mxu0 0
    %1251 = vmatpush2.bf16.msra.mxu0 0
    %1252 = vmatprep.subr.bf16.mxu0 0
    %1253 = vmatpush2.bf16.msra.mxu0 0
    %1254 = vmatprep.subr.bf16.mxu0 0
    %1255 = vmatpush2.bf16.msra.mxu0 0
    %1256 = vmatprep.subr.bf16.mxu0 0
    %1257 = vmatpush2.bf16.msra.mxu0 0
    %1258 = vmatprep.subr.bf16.mxu0 0
    %1259 = vmatpush2.bf16.msra.mxu0 0
    %1260 = vmatprep.subr.bf16.mxu0 0
    %1261 = vmatpush2.bf16.msra.mxu0 0
    %1262 = vmatprep.subr.bf16.mxu0 0
    %1263 = vmatpush2.bf16.msra.mxu0 0
    %1264 = vmatprep.mubr.bf16.mxu0 0
    %1265 = vmatmul.mubr.bf16.gmra.mxu0 %v1230
    %v1266 = vpop.f32.mrf.mxu0
    %v1267 = vadd.f32 %v1204, %v1266
    %v1268 = vpop.f32.mrf.mxu0
    %v1269 = vpop.f32.mrf.mxu0
    %v1270 = vadd.f32 %v1204, %v1269
    %v1271 = vpop.f32.mrf.mxu0
    %1272 = vdwg.mxu0
    %v1273 = vadd.f32 %v1267, %v562
    %v1274 = vadd.f32 %v1270, %v563
    %v1275 = vsel %vm334, %v1273, 0.0
    %1276 = vadd.xlane.f32.xlu0 %v1275
    %v1277 = vpop.xlane.xlu0 %1276
    %v1278 = vsel %vm334, %v1274, 0.0
    %1279 = vadd.xlane.f32.xlu0 %v1278
    %v1280 = vpop.xlane.xlu0 %1279
    %v1281 = vrcp.pop 64.0
    %v1282 = vmul.f32 %v1277, %v1281
    %v1283 = vmul.f32 %v1280, %v1281
    %v1284 = vsub.f32 %v1273, %v1282
    %v1285 = vsub.f32 %v1274, %v1283
    %v1286 = vmul.f32 %v1284, %v1284
    %v1287 = vmul.f32 %v1285, %v1285
    %v1288 = vsel %vm334, %v1286, 0.0
    %1289 = vadd.xlane.f32.xlu0 %v1288
    %v1290 = vpop.xlane.xlu0 %1289
    %v1291 = vsel %vm334, %v1287, 0.0
    %1292 = vadd.xlane.f32.xlu0 %v1291
    %v1293 = vpop.xlane.xlu0 %1292
    %v1294 = vmul.f32 %v1290, %v1281
    %v1295 = vmul.f32 %v1293, %v1281
    %v1296 = vadd.f32 %v1294, 1e-05
    %v1297 = vadd.f32 %v1295, 1e-05
    %v1298 = vrsqrt.pop %v1296
    %v1299 = vrsqrt.pop %v1297
    %v1300 = vmul.f32 %v1284, %v1298
    %v1301 = vmul.f32 %v1285, %v1299
    %v1302 = vlaneseq
    %v1303 = vshrl.u32 %v1302, 7
    %v1304 = vsub.s32 1, %v1303
    %v1305 = vrot.slane %v596, %v1304
    %v1306 = vmul.f32 %v1300, %v1305
    %v1307 = vmul.f32 %v1301, %v1305
    %v1308 = vlaneseq
    %v1309 = vshrl.u32 %v1308, 7
    %v1310 = vsub.s32 2, %v1309
    %v1311 = vrot.slane %v596, %v1310
    %v1312 = vadd.f32 %v1306, %v1311
    %v1313 = vadd.f32 %v1307, %v1311
    %v1314 = vpack.c.bf16 %v1313, %v1312
    %v1315 = vlaneseq
    %v1316 = vshrl.u32 %v1315, 7
    %v1317 = vsub.s32 3, %v1316
    %v1318 = vrot.slane %v596, %v1317
    %v1327 = vunpack.c.l.b16 %v580
    %v1328 = vunpack.c.l.b16 %v581
    %v1329 = vunpack.c.l.b16 %v582
    %v1330 = vunpack.c.l.b16 %v583
    %v1331 = vunpack.c.l.b16 %v584
    %v1332 = vunpack.c.l.b16 %v585
    %v1333 = vunpack.c.l.b16 %v586
    %v1334 = vunpack.c.l.b16 %v587
    %v1335 = vpack.c.b16 %v1328, %v1327
    %v1336 = vpack.c.b16 %v1330, %v1329
    %v1337 = vpack.c.b16 %v1332, %v1331
    %v1338 = vpack.c.b16 %v1334, %v1333
    %v1344 = vsel %vm334, %v1314, 0
    %1346 = vmatprep.subr.bf16.mxu0 0
    %1347 = vmatpush1.bf16.msra.mxu0 0
    %1348 = vmatprep.subr.bf16.mxu0 0
    %1349 = vmatpush1.bf16.msra.mxu0 0
    %1350 = vmatprep.subr.bf16.mxu0 0
    %1351 = vmatpush1.bf16.msra.mxu0 0
    %1352 = vmatprep.subr.bf16.mxu0 0
    %1353 = vmatpush1.bf16.msra.mxu0 0
    %1354 = vmatprep.subr.bf16.mxu0 0
    %1355 = vmatpush1.bf16.msra.mxu0 %v1338
    %1356 = vmatprep.subr.bf16.mxu0 0
    %1357 = vmatpush1.bf16.msra.mxu0 %v1337
    %1358 = vmatprep.subr.bf16.mxu0 0
    %1359 = vmatpush1.bf16.msra.mxu0 %v1336
    %1360 = vmatprep.subr.bf16.mxu0 0
    %1361 = vmatpush1.bf16.msra.mxu0 %v1335
    %1362 = vmatprep.subr.bf16.mxu0 0
    %1363 = vmatpush2.bf16.msra.mxu0 0
    %1364 = vmatprep.subr.bf16.mxu0 0
    %1365 = vmatpush2.bf16.msra.mxu0 0
    %1366 = vmatprep.subr.bf16.mxu0 0
    %1367 = vmatpush2.bf16.msra.mxu0 0
    %1368 = vmatprep.subr.bf16.mxu0 0
    %1369 = vmatpush2.bf16.msra.mxu0 0
    %1370 = vmatprep.subr.bf16.mxu0 0
    %1371 = vmatpush2.bf16.msra.mxu0 0
    %1372 = vmatprep.subr.bf16.mxu0 0
    %1373 = vmatpush2.bf16.msra.mxu0 0
    %1374 = vmatprep.subr.bf16.mxu0 0
    %1375 = vmatpush2.bf16.msra.mxu0 0
    %1376 = vmatprep.subr.bf16.mxu0 0
    %1377 = vmatpush2.bf16.msra.mxu0 0
    %1378 = vmatprep.mubr.bf16.mxu0 0
    %1379 = vmatmul.mubr.bf16.gmra.mxu0 %v1344
    %v1380 = vpop.f32.mrf.mxu0
    %v1381 = vadd.f32 %v1318, %v1380
    %v1382 = vpop.f32.mrf.mxu0
    %v1383 = vpop.f32.mrf.mxu0
    %v1384 = vadd.f32 %v1318, %v1383
    %v1385 = vpop.f32.mrf.mxu0
    %1386 = vdwg.mxu0
    %v1387 = vmax.f32 %v1381, 0.0
    %v1388 = vmax.f32 %v1384, 0.0
    %v1389 = vpack.c.bf16 %v1388, %v1387
    %v1390 = vlaneseq
    %v1391 = vshrl.u32 %v1390, 7
    %v1392 = vsub.s32 4, %v1391
    %v1393 = vrot.slane %v596, %v1392
    %v1402 = vunpack.c.l.b16 %v588
    %v1403 = vunpack.c.l.b16 %v589
    %v1404 = vunpack.c.l.b16 %v590
    %v1405 = vunpack.c.l.b16 %v591
    %v1406 = vunpack.c.l.b16 %v592
    %v1407 = vunpack.c.l.b16 %v593
    %v1408 = vunpack.c.l.b16 %v594
    %v1409 = vunpack.c.l.b16 %v595
    %v1410 = vpack.c.b16 %v1403, %v1402
    %v1411 = vpack.c.b16 %v1405, %v1404
    %v1412 = vpack.c.b16 %v1407, %v1406
    %v1413 = vpack.c.b16 %v1409, %v1408
    %v1419 = vsel %vm334, %v1389, 0
    %1421 = vmatprep.subr.bf16.mxu0 0
    %1422 = vmatpush1.bf16.msra.mxu0 0
    %1423 = vmatprep.subr.bf16.mxu0 0
    %1424 = vmatpush1.bf16.msra.mxu0 0
    %1425 = vmatprep.subr.bf16.mxu0 0
    %1426 = vmatpush1.bf16.msra.mxu0 0
    %1427 = vmatprep.subr.bf16.mxu0 0
    %1428 = vmatpush1.bf16.msra.mxu0 0
    %1429 = vmatprep.subr.bf16.mxu0 0
    %1430 = vmatpush1.bf16.msra.mxu0 %v1413
    %1431 = vmatprep.subr.bf16.mxu0 0
    %1432 = vmatpush1.bf16.msra.mxu0 %v1412
    %1433 = vmatprep.subr.bf16.mxu0 0
    %1434 = vmatpush1.bf16.msra.mxu0 %v1411
    %1435 = vmatprep.subr.bf16.mxu0 0
    %1436 = vmatpush1.bf16.msra.mxu0 %v1410
    %1437 = vmatprep.subr.bf16.mxu0 0
    %1438 = vmatpush2.bf16.msra.mxu0 0
    %1439 = vmatprep.subr.bf16.mxu0 0
    %1440 = vmatpush2.bf16.msra.mxu0 0
    %1441 = vmatprep.subr.bf16.mxu0 0
    %1442 = vmatpush2.bf16.msra.mxu0 0
    %1443 = vmatprep.subr.bf16.mxu0 0
    %1444 = vmatpush2.bf16.msra.mxu0 0
    %1445 = vmatprep.subr.bf16.mxu0 0
    %1446 = vmatpush2.bf16.msra.mxu0 0
    %1447 = vmatprep.subr.bf16.mxu0 0
    %1448 = vmatpush2.bf16.msra.mxu0 0
    %1449 = vmatprep.subr.bf16.mxu0 0
    %1450 = vmatpush2.bf16.msra.mxu0 0
    %1451 = vmatprep.subr.bf16.mxu0 0
    %1452 = vmatpush2.bf16.msra.mxu0 0
    %1453 = vmatprep.mubr.bf16.mxu0 0
    %1454 = vmatmul.mubr.bf16.gmra.mxu0 %v1419
    %v1455 = vpop.f32.mrf.mxu0
    %v1456 = vadd.f32 %v1393, %v1455
    %v1457 = vpop.f32.mrf.mxu0
    %v1458 = vpop.f32.mrf.mxu0
    %v1459 = vadd.f32 %v1393, %v1458
    %v1460 = vpop.f32.mrf.mxu0
    %1461 = vdwg.mxu0
    %v1462 = vadd.f32 %v1456, %v1312
    %v1463 = vadd.f32 %v1459, %v1313
    %v1464 = vsel %vm334, %v1462, 0.0
    %1465 = vadd.xlane.f32.xlu0 %v1464
    %v1466 = vpop.xlane.xlu0 %1465
    %v1467 = vsel %vm334, %v1463, 0.0
    %1468 = vadd.xlane.f32.xlu0 %v1467
    %v1469 = vpop.xlane.xlu0 %1468
    %v1470 = vmul.f32 %v1466, %v1281
    %v1471 = vmul.f32 %v1469, %v1281
    %v1472 = vsub.f32 %v1462, %v1470
    %v1473 = vsub.f32 %v1463, %v1471
    %v1474 = vmul.f32 %v1472, %v1472
    %v1475 = vmul.f32 %v1473, %v1473
    %v1476 = vsel %vm334, %v1474, 0.0
    %1477 = vadd.xlane.f32.xlu0 %v1476
    %v1478 = vpop.xlane.xlu0 %1477
    %v1479 = vsel %vm334, %v1475, 0.0
    %1480 = vadd.xlane.f32.xlu0 %v1479
    %v1481 = vpop.xlane.xlu0 %1480
    %v1482 = vmul.f32 %v1478, %v1281
    %v1483 = vmul.f32 %v1481, %v1281
    %v1484 = vadd.f32 %v1482, 1e-05
    %v1485 = vadd.f32 %v1483, 1e-05
    %v1486 = vrsqrt.pop %v1484
    %v1487 = vrsqrt.pop %v1485
    %v1488 = vmul.f32 %v1472, %v1486
    %v1489 = vmul.f32 %v1473, %v1487
    %v1490 = vlaneseq
    %v1491 = vshrl.u32 %v1490, 7
    %v1492 = vsub.s32 5, %v1491
    %v1493 = vrot.slane %v596, %v1492
    %v1494 = vmul.f32 %v1488, %v1493
    %v1495 = vmul.f32 %v1489, %v1493
    %v1496 = vlaneseq
    %v1497 = vshrl.u32 %v1496, 7
    %v1498 = vsub.s32 6, %v1497
    %v1499 = vrot.slane %v596, %v1498
    %v1500 = vadd.f32 %v1494, %v1499
    %v1501 = vadd.f32 %v1495, %v1499
    %s1502 = scalar_lea.vmem %s6, 64
    %v1503 = vld [vmem:[%s1502] sm:$0xff]
    %v1504 = vld [vmem:[%s1502 + $0x8] sm:$0xff]
    %v1505 = vld [vmem:[%s1502 + $0x10] sm:$0xff]
    %v1506 = vld [vmem:[%s1502 + $0x18] sm:$0xff]
    %v1507 = vld [vmem:[%s1502 + $0x20] sm:$0xff]
    %v1508 = vld [vmem:[%s1502 + $0x28] sm:$0xff]
    %v1509 = vld [vmem:[%s1502 + $0x30] sm:$0xff]
    %v1510 = vld [vmem:[%s1502 + $0x38] sm:$0xff]
    %s1511 = scalar_lea.vmem %s7, 96
    %v1512 = vld [vmem:[%s1511] sm:$0xf]
    %v1513 = vld [vmem:[%s1511 + $0x4] sm:$0xf]
    %v1514 = vld [vmem:[%s1511 + $0x8] sm:$0xf]
    %v1515 = vld [vmem:[%s1511 + $0xc] sm:$0xf]
    %v1516 = vld [vmem:[%s1511 + $0x10] sm:$0xf]
    %v1517 = vld [vmem:[%s1511 + $0x14] sm:$0xf]
    %v1518 = vld [vmem:[%s1511 + $0x18] sm:$0xf]
    %v1519 = vld [vmem:[%s1511 + $0x1c] sm:$0xf]
    %v1520 = vld [vmem:[%s1511 + $0x20] sm:$0xf]
    %v1521 = vld [vmem:[%s1511 + $0x24] sm:$0xf]
    %v1522 = vld [vmem:[%s1511 + $0x28] sm:$0xf]
    %v1523 = vld [vmem:[%s1511 + $0x2c] sm:$0xf]
    %v1524 = vld [vmem:[%s1511 + $0x30] sm:$0xf]
    %v1525 = vld [vmem:[%s1511 + $0x34] sm:$0xf]
    %v1526 = vld [vmem:[%s1511 + $0x38] sm:$0xf]
    %v1527 = vld [vmem:[%s1511 + $0x3c] sm:$0xf]
    %v1528 = vld [vmem:[%s1511 + $0x40] sm:$0xf]
    %v1529 = vld [vmem:[%s1511 + $0x44] sm:$0xf]
    %v1530 = vld [vmem:[%s1511 + $0x48] sm:$0xf]
    %v1531 = vld [vmem:[%s1511 + $0x4c] sm:$0xf]
    %v1532 = vld [vmem:[%s1511 + $0x50] sm:$0xf]
    %v1533 = vld [vmem:[%s1511 + $0x54] sm:$0xf]
    %v1534 = vld [vmem:[%s1511 + $0x58] sm:$0xf]
    %v1535 = vld [vmem:[%s1511 + $0x5c] sm:$0xf]
    %s1536 = scalar_lea.vmem [#allocation10], 8
    %v1537 = vld [vmem:[%s1536] sm:$0xff]
    %v1538 = vpack.c.bf16 %v1501, %v1500
    %v1547 = vunpack.c.l.b16 %v1503
    %v1548 = vunpack.c.h.b16 %v1503
    %v1549 = vunpack.c.l.b16 %v1504
    %v1550 = vunpack.c.h.b16 %v1504
    %v1551 = vunpack.c.l.b16 %v1505
    %v1552 = vunpack.c.h.b16 %v1505
    %v1553 = vunpack.c.l.b16 %v1506
    %v1554 = vunpack.c.h.b16 %v1506
    %v1555 = vunpack.c.l.b16 %v1507
    %v1556 = vunpack.c.h.b16 %v1507
    %v1557 = vunpack.c.l.b16 %v1508
    %v1558 = vunpack.c.h.b16 %v1508
    %v1559 = vunpack.c.l.b16 %v1509
    %v1560 = vunpack.c.h.b16 %v1509
    %v1561 = vunpack.c.l.b16 %v1510
    %v1562 = vunpack.c.h.b16 %v1510
    %v1563 = vpack.c.b16 %v1549, %v1547
    %v1564 = vpack.c.b16 %v1550, %v1548
    %v1565 = vpack.c.b16 %v1553, %v1551
    %v1566 = vpack.c.b16 %v1554, %v1552
    %v1567 = vpack.c.b16 %v1557, %v1555
    %v1568 = vpack.c.b16 %v1558, %v1556
    %v1569 = vpack.c.b16 %v1561, %v1559
    %v1570 = vpack.c.b16 %v1562, %v1560
    %v1580 = vsel %vm334, %v1538, 0
    %1582 = vmatprep.subr.bf16.mxu0 0
    %1583 = vmatpush1.bf16.msra.mxu0 0
    %1584 = vmatprep.subr.bf16.mxu0 0
    %1585 = vmatpush1.bf16.msra.mxu0 0
    %1586 = vmatprep.subr.bf16.mxu0 0
    %1587 = vmatpush1.bf16.msra.mxu0 0
    %1588 = vmatprep.subr.bf16.mxu0 0
    %1589 = vmatpush1.bf16.msra.mxu0 0
    %1590 = vmatprep.subr.bf16.mxu0 %v1570
    %1591 = vmatpush1.bf16.msra.mxu0 %v1569
    %1592 = vmatprep.subr.bf16.mxu0 %v1568
    %1593 = vmatpush1.bf16.msra.mxu0 %v1567
    %1594 = vmatprep.subr.bf16.mxu0 %v1566
    %1595 = vmatpush1.bf16.msra.mxu0 %v1565
    %1596 = vmatprep.subr.bf16.mxu0 %v1564
    %1597 = vmatpush1.bf16.msra.mxu0 %v1563
    %1598 = vmatprep.subr.bf16.mxu0 0
    %1599 = vmatpush2.bf16.msra.mxu0 0
    %1600 = vmatprep.subr.bf16.mxu0 0
    %1601 = vmatpush2.bf16.msra.mxu0 0
    %1602 = vmatprep.subr.bf16.mxu0 0
    %1603 = vmatpush2.bf16.msra.mxu0 0
    %1604 = vmatprep.subr.bf16.mxu0 0
    %1605 = vmatpush2.bf16.msra.mxu0 0
    %1606 = vmatprep.subr.bf16.mxu0 0
    %1607 = vmatpush2.bf16.msra.mxu0 0
    %1608 = vmatprep.subr.bf16.mxu0 0
    %1609 = vmatpush2.bf16.msra.mxu0 0
    %1610 = vmatprep.subr.bf16.mxu0 0
    %1611 = vmatpush2.bf16.msra.mxu0 0
    %1612 = vmatprep.subr.bf16.mxu0 0
    %1613 = vmatpush2.bf16.msra.mxu0 0
    %1614 = vmatprep.mubr.bf16.mxu0 0
    %1615 = vmatmul.mubr.bf16.gmra.mxu0 %v1580
    %v1616 = vpop.f32.mrf.mxu0
    %v1617 = vadd.f32 0.0, %v1616
    %v1618 = vpop.f32.mrf.mxu0
    %v1619 = vadd.f32 0.0, %v1618
    %v1620 = vpop.f32.mrf.mxu0
    %v1621 = vadd.f32 0.0, %v1620
    %v1622 = vpop.f32.mrf.mxu0
    %v1623 = vadd.f32 0.0, %v1622
    %1624 = vdwg.mxu0
    %v1625 = vpack.c.bf16 %v1621, %v1617
    %v1626 = vpack.c.bf16 %v1623, %v1619
    %1628 = vrot.lane.b32.xlu0 %v1625, 64
    %v1629 = vpop.permute.xlu0 %1628
    %v1631 = vsel %vm689, %v1625, 0
    %v1634 = vsel %vm689, %v1629, 0
    %1636 = vmatprep.subr.bf16.mxu0 0
    %1637 = vmatpush1.bf16.xpose.msra.mxu0 0
    %1638 = vmatprep.subr.bf16.mxu0 0
    %1639 = vmatpush1.bf16.xpose.msra.mxu0 0
    %1640 = vmatprep.subr.bf16.mxu0 0
    %1641 = vmatpush1.bf16.xpose.msra.mxu0 0
    %1642 = vmatprep.subr.bf16.mxu0 0
    %1643 = vmatpush1.bf16.xpose.msra.mxu0 0
    %1644 = vmatprep.subr.bf16.mxu0 0
    %1645 = vmatpush1.bf16.xpose.msra.mxu0 0
    %1646 = vmatprep.subr.bf16.mxu0 0
    %1647 = vmatpush1.bf16.xpose.msra.mxu0 0
    %1648 = vmatprep.subr.bf16.mxu0 0
    %1649 = vmatpush1.bf16.xpose.msra.mxu0 0
    %1650 = vmatprep.subr.bf16.mxu0 0
    %1651 = vmatpush1.bf16.xpose.msra.mxu0 %v1634
    %1652 = vmatprep.subr.bf16.mxu0 0
    %1653 = vmatpush2.bf16.xpose.msra.mxu0 0
    %1654 = vmatprep.subr.bf16.mxu0 0
    %1655 = vmatpush2.bf16.xpose.msra.mxu0 0
    %1656 = vmatprep.subr.bf16.mxu0 0
    %1657 = vmatpush2.bf16.xpose.msra.mxu0 0
    %1658 = vmatprep.subr.bf16.mxu0 0
    %1659 = vmatpush2.bf16.xpose.msra.mxu0 0
    %1660 = vmatprep.subr.bf16.mxu0 0
    %1661 = vmatpush2.bf16.xpose.msra.mxu0 0
    %1662 = vmatprep.subr.bf16.mxu0 0
    %1663 = vmatpush2.bf16.xpose.msra.mxu0 0
    %1664 = vmatprep.subr.bf16.mxu0 0
    %1665 = vmatpush2.bf16.xpose.msra.mxu0 0
    %1666 = vmatprep.subr.bf16.mxu0 0
    %1667 = vmatpush2.bf16.xpose.msra.mxu0 0
    %1668 = vmatprep.mubr.bf16.mxu0 0
    %1669 = vmatmul.mubr.bf16.gmra.mxu0 %v1631
    %v1670 = vpop.f32.mrf.mxu0
    %v1671 = vadd.f32 %v260, %v1670
    %v1672 = vpop.f32.mrf.mxu0
    %v1673 = vpop.f32.mrf.mxu0
    %v1674 = vadd.f32 %v261, %v1673
    %v1675 = vpop.f32.mrf.mxu0
    %1676 = vdwg.mxu0
    %v1677 = vsel %vm689, %v1671, -inf
    %1678 = vmax.xlane.f32.xlu0 %v1677
    %v1679 = vpop.xlane.xlu0 %1678
    %v1680 = vsel %vm689, %v1674, -inf
    %1681 = vmax.xlane.f32.xlu0 %v1680
    %v1682 = vpop.xlane.xlu0 %1681
    %v1683 = vsub.f32 %v1671, %v1679
    %v1684 = vsub.f32 %v1674, %v1682
    %v1685 = vmul.f32 %v1683, 1.442695
    %v1686 = vpow.pop %v1685
    %v1687 = vmul.f32 %v1684, 1.442695
    %v1688 = vpow.pop %v1687
    %v1689 = vsel %vm689, %v1686, 0.0
    %1690 = vadd.xlane.f32.xlu0 %v1689
    %v1691 = vpop.xlane.xlu0 %1690
    %v1692 = vsel %vm689, %v1688, 0.0
    %1693 = vadd.xlane.f32.xlu0 %v1692
    %v1694 = vpop.xlane.xlu0 %1693
    %v1695 = vrcp.pop %v1691
    %v1696 = vrcp.pop %v1694
    %v1697 = vmul.f32 %v1686, %v1695
    %v1698 = vmul.f32 %v1688, %v1696
    %v1699 = vpack.c.bf16 %v1698, %v1697
    %v1701 = vsel %vm689, %v1699, 0
    %1703 = vmatprep.subr.bf16.mxu0 0
    %1704 = vmatpush1.bf16.msra.mxu0 0
    %1705 = vmatprep.subr.bf16.mxu0 0
    %1706 = vmatpush1.bf16.msra.mxu0 0
    %1707 = vmatprep.subr.bf16.mxu0 0
    %1708 = vmatpush1.bf16.msra.mxu0 0
    %1709 = vmatprep.subr.bf16.mxu0 0
    %1710 = vmatpush1.bf16.msra.mxu0 0
    %1711 = vmatprep.subr.bf16.mxu0 0
    %1712 = vmatpush1.bf16.msra.mxu0 0
    %1713 = vmatprep.subr.bf16.mxu0 0
    %1714 = vmatpush1.bf16.msra.mxu0 0
    %1715 = vmatprep.subr.bf16.mxu0 0
    %1716 = vmatpush1.bf16.msra.mxu0 0
    %1717 = vmatprep.subr.bf16.mxu0 0
    %1718 = vmatpush1.bf16.msra.mxu0 %v1626
    %1719 = vmatprep.subr.bf16.mxu0 0
    %1720 = vmatpush2.bf16.msra.mxu0 0
    %1721 = vmatprep.subr.bf16.mxu0 0
    %1722 = vmatpush2.bf16.msra.mxu0 0
    %1723 = vmatprep.subr.bf16.mxu0 0
    %1724 = vmatpush2.bf16.msra.mxu0 0
    %1725 = vmatprep.subr.bf16.mxu0 0
    %1726 = vmatpush2.bf16.msra.mxu0 0
    %1727 = vmatprep.subr.bf16.mxu0 0
    %1728 = vmatpush2.bf16.msra.mxu0 0
    %1729 = vmatprep.subr.bf16.mxu0 0
    %1730 = vmatpush2.bf16.msra.mxu0 0
    %1731 = vmatprep.subr.bf16.mxu0 0
    %1732 = vmatpush2.bf16.msra.mxu0 0
    %1733 = vmatprep.subr.bf16.mxu0 0
    %1734 = vmatpush2.bf16.msra.mxu0 0
    %1735 = vmatprep.mubr.bf16.mxu0 0
    %1736 = vmatmul.mubr.bf16.gmra.mxu0 %v1701
    %v1737 = vpop.f32.mrf.mxu0
    %v1738 = vadd.f32 0.0, %v1737
    %v1739 = vpop.f32.mrf.mxu0
    %v1740 = vpop.f32.mrf.mxu0
    %v1741 = vadd.f32 0.0, %v1740
    %v1742 = vpop.f32.mrf.mxu0
    %1743 = vdwg.mxu0
    %1744 = vrot.lane.b32.xlu0 %v1625, 112
    %v1745 = vpop.permute.xlu0 %1744
    %1746 = vrot.lane.b32.xlu0 %v1625, 48
    %v1747 = vpop.permute.xlu0 %1746
    %v1749 = vsel %vm689, %v1745, 0
    %v1752 = vsel %vm689, %v1747, 0
    %1754 = vmatprep.subr.bf16.mxu0 0
    %1755 = vmatpush1.bf16.xpose.msra.mxu0 0
    %1756 = vmatprep.subr.bf16.mxu0 0
    %1757 = vmatpush1.bf16.xpose.msra.mxu0 0
    %1758 = vmatprep.subr.bf16.mxu0 0
    %1759 = vmatpush1.bf16.xpose.msra.mxu0 0
    %1760 = vmatprep.subr.bf16.mxu0 0
    %1761 = vmatpush1.bf16.xpose.msra.mxu0 0
    %1762 = vmatprep.subr.bf16.mxu0 0
    %1763 = vmatpush1.bf16.xpose.msra.mxu0 0
    %1764 = vmatprep.subr.bf16.mxu0 0
    %1765 = vmatpush1.bf16.xpose.msra.mxu0 0
    %1766 = vmatprep.subr.bf16.mxu0 0
    %1767 = vmatpush1.bf16.xpose.msra.mxu0 0
    %1768 = vmatprep.subr.bf16.mxu0 0
    %1769 = vmatpush1.bf16.xpose.msra.mxu0 %v1752
    %1770 = vmatprep.subr.bf16.mxu0 0
    %1771 = vmatpush2.bf16.xpose.msra.mxu0 0
    %1772 = vmatprep.subr.bf16.mxu0 0
    %1773 = vmatpush2.bf16.xpose.msra.mxu0 0
    %1774 = vmatprep.subr.bf16.mxu0 0
    %1775 = vmatpush2.bf16.xpose.msra.mxu0 0
    %1776 = vmatprep.subr.bf16.mxu0 0
    %1777 = vmatpush2.bf16.xpose.msra.mxu0 0
    %1778 = vmatprep.subr.bf16.mxu0 0
    %1779 = vmatpush2.bf16.xpose.msra.mxu0 0
    %1780 = vmatprep.subr.bf16.mxu0 0
    %1781 = vmatpush2.bf16.xpose.msra.mxu0 0
    %1782 = vmatprep.subr.bf16.mxu0 0
    %1783 = vmatpush2.bf16.xpose.msra.mxu0 0
    %1784 = vmatprep.subr.bf16.mxu0 0
    %1785 = vmatpush2.bf16.xpose.msra.mxu0 0
    %1786 = vmatprep.mubr.bf16.mxu0 0
    %1787 = vmatmul.mubr.bf16.gmra.mxu0 %v1749
    %v1788 = vpop.f32.mrf.mxu0
    %v1789 = vadd.f32 %v260, %v1788
    %v1790 = vpop.f32.mrf.mxu0
    %v1791 = vpop.f32.mrf.mxu0
    %v1792 = vadd.f32 %v261, %v1791
    %v1793 = vpop.f32.mrf.mxu0
    %1794 = vdwg.mxu0
    %v1795 = vsel %vm689, %v1789, -inf
    %1796 = vmax.xlane.f32.xlu0 %v1795
    %v1797 = vpop.xlane.xlu0 %1796
    %v1798 = vsel %vm689, %v1792, -inf
    %1799 = vmax.xlane.f32.xlu0 %v1798
    %v1800 = vpop.xlane.xlu0 %1799
    %v1801 = vsub.f32 %v1789, %v1797
    %v1802 = vsub.f32 %v1792, %v1800
    %v1803 = vmul.f32 %v1801, 1.442695
    %v1804 = vpow.pop %v1803
    %v1805 = vmul.f32 %v1802, 1.442695
    %v1806 = vpow.pop %v1805
    %v1807 = vsel %vm689, %v1804, 0.0
    %1808 = vadd.xlane.f32.xlu0 %v1807
    %v1809 = vpop.xlane.xlu0 %1808
    %v1810 = vsel %vm689, %v1806, 0.0
    %1811 = vadd.xlane.f32.xlu0 %v1810
    %v1812 = vpop.xlane.xlu0 %1811
    %v1813 = vrcp.pop %v1809
    %v1814 = vrcp.pop %v1812
    %v1815 = vmul.f32 %v1804, %v1813
    %v1816 = vmul.f32 %v1806, %v1814
    %v1817 = vpack.c.bf16 %v1816, %v1815
    %1819 = vrot.lane.b32.xlu0 %v1626, 112
    %v1820 = vpop.permute.xlu0 %1819
    %v1823 = vsel %vm689, %v1817, 0
    %1825 = vmatprep.subr.bf16.mxu0 0
    %1826 = vmatpush1.bf16.msra.mxu0 0
    %1827 = vmatprep.subr.bf16.mxu0 0
    %1828 = vmatpush1.bf16.msra.mxu0 0
    %1829 = vmatprep.subr.bf16.mxu0 0
    %1830 = vmatpush1.bf16.msra.mxu0 0
    %1831 = vmatprep.subr.bf16.mxu0 0
    %1832 = vmatpush1.bf16.msra.mxu0 0
    %1833 = vmatprep.subr.bf16.mxu0 0
    %1834 = vmatpush1.bf16.msra.mxu0 0
    %1835 = vmatprep.subr.bf16.mxu0 0
    %1836 = vmatpush1.bf16.msra.mxu0 0
    %1837 = vmatprep.subr.bf16.mxu0 0
    %1838 = vmatpush1.bf16.msra.mxu0 0
    %1839 = vmatprep.subr.bf16.mxu0 0
    %1840 = vmatpush1.bf16.msra.mxu0 %v1820
    %1841 = vmatprep.subr.bf16.mxu0 0
    %1842 = vmatpush2.bf16.msra.mxu0 0
    %1843 = vmatprep.subr.bf16.mxu0 0
    %1844 = vmatpush2.bf16.msra.mxu0 0
    %1845 = vmatprep.subr.bf16.mxu0 0
    %1846 = vmatpush2.bf16.msra.mxu0 0
    %1847 = vmatprep.subr.bf16.mxu0 0
    %1848 = vmatpush2.bf16.msra.mxu0 0
    %1849 = vmatprep.subr.bf16.mxu0 0
    %1850 = vmatpush2.bf16.msra.mxu0 0
    %1851 = vmatprep.subr.bf16.mxu0 0
    %1852 = vmatpush2.bf16.msra.mxu0 0
    %1853 = vmatprep.subr.bf16.mxu0 0
    %1854 = vmatpush2.bf16.msra.mxu0 0
    %1855 = vmatprep.subr.bf16.mxu0 0
    %1856 = vmatpush2.bf16.msra.mxu0 0
    %1857 = vmatprep.mubr.bf16.mxu0 0
    %1858 = vmatmul.mubr.bf16.gmra.mxu0 %v1823
    %v1859 = vpop.f32.mrf.mxu0
    %v1860 = vadd.f32 0.0, %v1859
    %v1861 = vpop.f32.mrf.mxu0
    %v1862 = vpop.f32.mrf.mxu0
    %v1863 = vadd.f32 0.0, %v1862
    %v1864 = vpop.f32.mrf.mxu0
    %1865 = vdwg.mxu0
    %1866 = vrot.lane.b32.xlu0 %v1625, 96
    %v1867 = vpop.permute.xlu0 %1866
    %1868 = vrot.lane.b32.xlu0 %v1625, 32
    %v1869 = vpop.permute.xlu0 %1868
    %v1871 = vsel %vm689, %v1867, 0
    %v1874 = vsel %vm689, %v1869, 0
    %1876 = vmatprep.subr.bf16.mxu0 0
    %1877 = vmatpush1.bf16.xpose.msra.mxu0 0
    %1878 = vmatprep.subr.bf16.mxu0 0
    %1879 = vmatpush1.bf16.xpose.msra.mxu0 0
    %1880 = vmatprep.subr.bf16.mxu0 0
    %1881 = vmatpush1.bf16.xpose.msra.mxu0 0
    %1882 = vmatprep.subr.bf16.mxu0 0
    %1883 = vmatpush1.bf16.xpose.msra.mxu0 0
    %1884 = vmatprep.subr.bf16.mxu0 0
    %1885 = vmatpush1.bf16.xpose.msra.mxu0 0
    %1886 = vmatprep.subr.bf16.mxu0 0
    %1887 = vmatpush1.bf16.xpose.msra.mxu0 0
    %1888 = vmatprep.subr.bf16.mxu0 0
    %1889 = vmatpush1.bf16.xpose.msra.mxu0 0
    %1890 = vmatprep.subr.bf16.mxu0 0
    %1891 = vmatpush1.bf16.xpose.msra.mxu0 %v1874
    %1892 = vmatprep.subr.bf16.mxu0 0
    %1893 = vmatpush2.bf16.xpose.msra.mxu0 0
    %1894 = vmatprep.subr.bf16.mxu0 0
    %1895 = vmatpush2.bf16.xpose.msra.mxu0 0
    %1896 = vmatprep.subr.bf16.mxu0 0
    %1897 = vmatpush2.bf16.xpose.msra.mxu0 0
    %1898 = vmatprep.subr.bf16.mxu0 0
    %1899 = vmatpush2.bf16.xpose.msra.mxu0 0
    %1900 = vmatprep.subr.bf16.mxu0 0
    %1901 = vmatpush2.bf16.xpose.msra.mxu0 0
    %1902 = vmatprep.subr.bf16.mxu0 0
    %1903 = vmatpush2.bf16.xpose.msra.mxu0 0
    %1904 = vmatprep.subr.bf16.mxu0 0
    %1905 = vmatpush2.bf16.xpose.msra.mxu0 0
    %1906 = vmatprep.subr.bf16.mxu0 0
    %1907 = vmatpush2.bf16.xpose.msra.mxu0 0
    %1908 = vmatprep.mubr.bf16.mxu0 0
    %1909 = vmatmul.mubr.bf16.gmra.mxu0 %v1871
    %v1910 = vpop.f32.mrf.mxu0
    %v1911 = vadd.f32 %v260, %v1910
    %v1912 = vpop.f32.mrf.mxu0
    %v1913 = vpop.f32.mrf.mxu0
    %v1914 = vadd.f32 %v261, %v1913
    %v1915 = vpop.f32.mrf.mxu0
    %1916 = vdwg.mxu0
    %v1917 = vsel %vm689, %v1911, -inf
    %1918 = vmax.xlane.f32.xlu0 %v1917
    %v1919 = vpop.xlane.xlu0 %1918
    %v1920 = vsel %vm689, %v1914, -inf
    %1921 = vmax.xlane.f32.xlu0 %v1920
    %v1922 = vpop.xlane.xlu0 %1921
    %v1923 = vsub.f32 %v1911, %v1919
    %v1924 = vsub.f32 %v1914, %v1922
    %v1925 = vmul.f32 %v1923, 1.442695
    %v1926 = vpow.pop %v1925
    %v1927 = vmul.f32 %v1924, 1.442695
    %v1928 = vpow.pop %v1927
    %v1929 = vsel %vm689, %v1926, 0.0
    %1930 = vadd.xlane.f32.xlu0 %v1929
    %v1931 = vpop.xlane.xlu0 %1930
    %v1932 = vsel %vm689, %v1928, 0.0
    %1933 = vadd.xlane.f32.xlu0 %v1932
    %v1934 = vpop.xlane.xlu0 %1933
    %v1935 = vrcp.pop %v1931
    %v1936 = vrcp.pop %v1934
    %v1937 = vmul.f32 %v1926, %v1935
    %v1938 = vmul.f32 %v1928, %v1936
    %v1939 = vpack.c.bf16 %v1938, %v1937
    %1940 = vrot.lane.b32.xlu0 %v1626, 96
    %v1941 = vpop.permute.xlu0 %1940
    %v1944 = vsel %vm689, %v1939, 0
    %1946 = vmatprep.subr.bf16.mxu0 0
    %1947 = vmatpush1.bf16.msra.mxu0 0
    %1948 = vmatprep.subr.bf16.mxu0 0
    %1949 = vmatpush1.bf16.msra.mxu0 0
    %1950 = vmatprep.subr.bf16.mxu0 0
    %1951 = vmatpush1.bf16.msra.mxu0 0
    %1952 = vmatprep.subr.bf16.mxu0 0
    %1953 = vmatpush1.bf16.msra.mxu0 0
    %1954 = vmatprep.subr.bf16.mxu0 0
    %1955 = vmatpush1.bf16.msra.mxu0 0
    %1956 = vmatprep.subr.bf16.mxu0 0
    %1957 = vmatpush1.bf16.msra.mxu0 0
    %1958 = vmatprep.subr.bf16.mxu0 0
    %1959 = vmatpush1.bf16.msra.mxu0 0
    %1960 = vmatprep.subr.bf16.mxu0 0
    %1961 = vmatpush1.bf16.msra.mxu0 %v1941
    %1962 = vmatprep.subr.bf16.mxu0 0
    %1963 = vmatpush2.bf16.msra.mxu0 0
    %1964 = vmatprep.subr.bf16.mxu0 0
    %1965 = vmatpush2.bf16.msra.mxu0 0
    %1966 = vmatprep.subr.bf16.mxu0 0
    %1967 = vmatpush2.bf16.msra.mxu0 0
    %1968 = vmatprep.subr.bf16.mxu0 0
    %1969 = vmatpush2.bf16.msra.mxu0 0
    %1970 = vmatprep.subr.bf16.mxu0 0
    %1971 = vmatpush2.bf16.msra.mxu0 0
    %1972 = vmatprep.subr.bf16.mxu0 0
    %1973 = vmatpush2.bf16.msra.mxu0 0
    %1974 = vmatprep.subr.bf16.mxu0 0
    %1975 = vmatpush2.bf16.msra.mxu0 0
    %1976 = vmatprep.subr.bf16.mxu0 0
    %1977 = vmatpush2.bf16.msra.mxu0 0
    %1978 = vmatprep.mubr.bf16.mxu0 0
    %1979 = vmatmul.mubr.bf16.gmra.mxu0 %v1944
    %v1980 = vpop.f32.mrf.mxu0
    %v1981 = vadd.f32 0.0, %v1980
    %v1982 = vpop.f32.mrf.mxu0
    %v1983 = vpop.f32.mrf.mxu0
    %v1984 = vadd.f32 0.0, %v1983
    %v1985 = vpop.f32.mrf.mxu0
    %1986 = vdwg.mxu0
    %1987 = vrot.lane.b32.xlu0 %v1625, 80
    %v1988 = vpop.permute.xlu0 %1987
    %1989 = vrot.lane.b32.xlu0 %v1625, 16
    %v1990 = vpop.permute.xlu0 %1989
    %v1992 = vsel %vm689, %v1988, 0
    %v1995 = vsel %vm689, %v1990, 0
    %1997 = vmatprep.subr.bf16.mxu0 0
    %1998 = vmatpush1.bf16.xpose.msra.mxu0 0
    %1999 = vmatprep.subr.bf16.mxu0 0
    %2000 = vmatpush1.bf16.xpose.msra.mxu0 0
    %2001 = vmatprep.subr.bf16.mxu0 0
    %2002 = vmatpush1.bf16.xpose.msra.mxu0 0
    %2003 = vmatprep.subr.bf16.mxu0 0
    %2004 = vmatpush1.bf16.xpose.msra.mxu0 0
    %2005 = vmatprep.subr.bf16.mxu0 0
    %2006 = vmatpush1.bf16.xpose.msra.mxu0 0
    %2007 = vmatprep.subr.bf16.mxu0 0
    %2008 = vmatpush1.bf16.xpose.msra.mxu0 0
    %2009 = vmatprep.subr.bf16.mxu0 0
    %2010 = vmatpush1.bf16.xpose.msra.mxu0 0
    %2011 = vmatprep.subr.bf16.mxu0 0
    %2012 = vmatpush1.bf16.xpose.msra.mxu0 %v1995
    %2013 = vmatprep.subr.bf16.mxu0 0
    %2014 = vmatpush2.bf16.xpose.msra.mxu0 0
    %2015 = vmatprep.subr.bf16.mxu0 0
    %2016 = vmatpush2.bf16.xpose.msra.mxu0 0
    %2017 = vmatprep.subr.bf16.mxu0 0
    %2018 = vmatpush2.bf16.xpose.msra.mxu0 0
    %2019 = vmatprep.subr.bf16.mxu0 0
    %2020 = vmatpush2.bf16.xpose.msra.mxu0 0
    %2021 = vmatprep.subr.bf16.mxu0 0
    %2022 = vmatpush2.bf16.xpose.msra.mxu0 0
    %2023 = vmatprep.subr.bf16.mxu0 0
    %2024 = vmatpush2.bf16.xpose.msra.mxu0 0
    %2025 = vmatprep.subr.bf16.mxu0 0
    %2026 = vmatpush2.bf16.xpose.msra.mxu0 0
    %2027 = vmatprep.subr.bf16.mxu0 0
    %2028 = vmatpush2.bf16.xpose.msra.mxu0 0
    %2029 = vmatprep.mubr.bf16.mxu0 0
    %2030 = vmatmul.mubr.bf16.gmra.mxu0 %v1992
    %v2031 = vpop.f32.mrf.mxu0
    %v2032 = vadd.f32 %v260, %v2031
    %v2033 = vpop.f32.mrf.mxu0
    %v2034 = vpop.f32.mrf.mxu0
    %v2035 = vadd.f32 %v261, %v2034
    %v2036 = vpop.f32.mrf.mxu0
    %2037 = vdwg.mxu0
    %v2038 = vsel %vm689, %v2032, -inf
    %2039 = vmax.xlane.f32.xlu0 %v2038
    %v2040 = vpop.xlane.xlu0 %2039
    %v2041 = vsel %vm689, %v2035, -inf
    %2042 = vmax.xlane.f32.xlu0 %v2041
    %v2043 = vpop.xlane.xlu0 %2042
    %v2044 = vsub.f32 %v2032, %v2040
    %v2045 = vsub.f32 %v2035, %v2043
    %v2046 = vmul.f32 %v2044, 1.442695
    %v2047 = vpow.pop %v2046
    %v2048 = vmul.f32 %v2045, 1.442695
    %v2049 = vpow.pop %v2048
    %v2050 = vsel %vm689, %v2047, 0.0
    %2051 = vadd.xlane.f32.xlu0 %v2050
    %v2052 = vpop.xlane.xlu0 %2051
    %v2053 = vsel %vm689, %v2049, 0.0
    %2054 = vadd.xlane.f32.xlu0 %v2053
    %v2055 = vpop.xlane.xlu0 %2054
    %v2056 = vrcp.pop %v2052
    %v2057 = vrcp.pop %v2055
    %v2058 = vmul.f32 %v2047, %v2056
    %v2059 = vmul.f32 %v2049, %v2057
    %v2060 = vpack.c.bf16 %v2059, %v2058
    %2061 = vrot.lane.b32.xlu0 %v1626, 80
    %v2062 = vpop.permute.xlu0 %2061
    %v2065 = vsel %vm689, %v2060, 0
    %2067 = vmatprep.subr.bf16.mxu0 0
    %2068 = vmatpush1.bf16.msra.mxu0 0
    %2069 = vmatprep.subr.bf16.mxu0 0
    %2070 = vmatpush1.bf16.msra.mxu0 0
    %2071 = vmatprep.subr.bf16.mxu0 0
    %2072 = vmatpush1.bf16.msra.mxu0 0
    %2073 = vmatprep.subr.bf16.mxu0 0
    %2074 = vmatpush1.bf16.msra.mxu0 0
    %2075 = vmatprep.subr.bf16.mxu0 0
    %2076 = vmatpush1.bf16.msra.mxu0 0
    %2077 = vmatprep.subr.bf16.mxu0 0
    %2078 = vmatpush1.bf16.msra.mxu0 0
    %2079 = vmatprep.subr.bf16.mxu0 0
    %2080 = vmatpush1.bf16.msra.mxu0 0
    %2081 = vmatprep.subr.bf16.mxu0 0
    %2082 = vmatpush1.bf16.msra.mxu0 %v2062
    %2083 = vmatprep.subr.bf16.mxu0 0
    %2084 = vmatpush2.bf16.msra.mxu0 0
    %2085 = vmatprep.subr.bf16.mxu0 0
    %2086 = vmatpush2.bf16.msra.mxu0 0
    %2087 = vmatprep.subr.bf16.mxu0 0
    %2088 = vmatpush2.bf16.msra.mxu0 0
    %2089 = vmatprep.subr.bf16.mxu0 0
    %2090 = vmatpush2.bf16.msra.mxu0 0
    %2091 = vmatprep.subr.bf16.mxu0 0
    %2092 = vmatpush2.bf16.msra.mxu0 0
    %2093 = vmatprep.subr.bf16.mxu0 0
    %2094 = vmatpush2.bf16.msra.mxu0 0
    %2095 = vmatprep.subr.bf16.mxu0 0
    %2096 = vmatpush2.bf16.msra.mxu0 0
    %2097 = vmatprep.subr.bf16.mxu0 0
    %2098 = vmatpush2.bf16.msra.mxu0 0
    %2099 = vmatprep.mubr.bf16.mxu0 0
    %2100 = vmatmul.mubr.bf16.gmra.mxu0 %v2065
    %v2101 = vpop.f32.mrf.mxu0
    %v2102 = vadd.f32 0.0, %v2101
    %v2103 = vpop.f32.mrf.mxu0
    %v2104 = vpop.f32.mrf.mxu0
    %v2105 = vadd.f32 0.0, %v2104
    %v2106 = vpop.f32.mrf.mxu0
    %2107 = vdwg.mxu0
    %2110 = vrot.lane.b32.xlu0 %v1860, 16
    %v2111 = vpop.permute.xlu0 %2110
    %2112 = vrot.lane.b32.xlu0 %v1863, 16
    %v2113 = vpop.permute.xlu0 %2112
    %2118 = vrot.lane.b32.xlu0 %v1981, 32
    %v2119 = vpop.permute.xlu0 %2118
    %2120 = vrot.lane.b32.xlu0 %v1984, 32
    %v2121 = vpop.permute.xlu0 %2120
    %2126 = vrot.lane.b32.xlu0 %v2102, 48
    %v2127 = vpop.permute.xlu0 %2126
    %2128 = vrot.lane.b32.xlu0 %v2105, 48
    %v2129 = vpop.permute.xlu0 %2128
    %v2132 = vsel %vm689, %v1738, %v2111
    %v2133 = vsel %vm689, %v1741, %v2113
    %v2134 = vsel %vm1194, %v2132, %v2119
    %v2135 = vsel %vm1194, %v2133, %v2121
    %v2136 = vsel %vm1197, %v2134, %v2127
    %v2137 = vsel %vm1197, %v2135, %v2129
    %v2138 = vpack.c.bf16 %v2137, %v2136
    %v2139 = vlaneseq
    %v2140 = vshrl.u32 %v2139, 7
    %v2141 = vsub.s32 0, %v2140
    %v2142 = vrot.slane %v1537, %v2141
    %v2151 = vunpack.c.l.b16 %v1512
    %v2152 = vunpack.c.l.b16 %v1513
    %v2153 = vunpack.c.l.b16 %v1514
    %v2154 = vunpack.c.l.b16 %v1515
    %v2155 = vunpack.c.l.b16 %v1516
    %v2156 = vunpack.c.l.b16 %v1517
    %v2157 = vunpack.c.l.b16 %v1518
    %v2158 = vunpack.c.l.b16 %v1519
    %v2159 = vpack.c.b16 %v2152, %v2151
    %v2160 = vpack.c.b16 %v2154, %v2153
    %v2161 = vpack.c.b16 %v2156, %v2155
    %v2162 = vpack.c.b16 %v2158, %v2157
    %v2168 = vsel %vm334, %v2138, 0
    %2170 = vmatprep.subr.bf16.mxu0 0
    %2171 = vmatpush1.bf16.msra.mxu0 0
    %2172 = vmatprep.subr.bf16.mxu0 0
    %2173 = vmatpush1.bf16.msra.mxu0 0
    %2174 = vmatprep.subr.bf16.mxu0 0
    %2175 = vmatpush1.bf16.msra.mxu0 0
    %2176 = vmatprep.subr.bf16.mxu0 0
    %2177 = vmatpush1.bf16.msra.mxu0 0
    %2178 = vmatprep.subr.bf16.mxu0 0
    %2179 = vmatpush1.bf16.msra.mxu0 %v2162
    %2180 = vmatprep.subr.bf16.mxu0 0
    %2181 = vmatpush1.bf16.msra.mxu0 %v2161
    %2182 = vmatprep.subr.bf16.mxu0 0
    %2183 = vmatpush1.bf16.msra.mxu0 %v2160
    %2184 = vmatprep.subr.bf16.mxu0 0
    %2185 = vmatpush1.bf16.msra.mxu0 %v2159
    %2186 = vmatprep.subr.bf16.mxu0 0
    %2187 = vmatpush2.bf16.msra.mxu0 0
    %2188 = vmatprep.subr.bf16.mxu0 0
    %2189 = vmatpush2.bf16.msra.mxu0 0
    %2190 = vmatprep.subr.bf16.mxu0 0
    %2191 = vmatpush2.bf16.msra.mxu0 0
    %2192 = vmatprep.subr.bf16.mxu0 0
    %2193 = vmatpush2.bf16.msra.mxu0 0
    %2194 = vmatprep.subr.bf16.mxu0 0
    %2195 = vmatpush2.bf16.msra.mxu0 0
    %2196 = vmatprep.subr.bf16.mxu0 0
    %2197 = vmatpush2.bf16.msra.mxu0 0
    %2198 = vmatprep.subr.bf16.mxu0 0
    %2199 = vmatpush2.bf16.msra.mxu0 0
    %2200 = vmatprep.subr.bf16.mxu0 0
    %2201 = vmatpush2.bf16.msra.mxu0 0
    %2202 = vmatprep.mubr.bf16.mxu0 0
    %2203 = vmatmul.mubr.bf16.gmra.mxu0 %v2168
    %v2204 = vpop.f32.mrf.mxu0
    %v2205 = vadd.f32 %v2142, %v2204
    %v2206 = vpop.f32.mrf.mxu0
    %v2207 = vpop.f32.mrf.mxu0
    %v2208 = vadd.f32 %v2142, %v2207
    %v2209 = vpop.f32.mrf.mxu0
    %2210 = vdwg.mxu0
    %v2211 = vadd.f32 %v2205, %v1500
    %v2212 = vadd.f32 %v2208, %v1501
    %v2213 = vsel %vm334, %v2211, 0.0
    %2214 = vadd.xlane.f32.xlu0 %v2213
    %v2215 = vpop.xlane.xlu0 %2214
    %v2216 = vsel %vm334, %v2212, 0.0
    %2217 = vadd.xlane.f32.xlu0 %v2216
    %v2218 = vpop.xlane.xlu0 %2217
    %v2219 = vmul.f32 %v2215, %v1281
    %v2220 = vmul.f32 %v2218, %v1281
    %v2221 = vsub.f32 %v2211, %v2219
    %v2222 = vsub.f32 %v2212, %v2220
    %v2223 = vmul.f32 %v2221, %v2221
    %v2224 = vmul.f32 %v2222, %v2222
    %v2225 = vsel %vm334, %v2223, 0.0
    %2226 = vadd.xlane.f32.xlu0 %v2225
    %v2227 = vpop.xlane.xlu0 %2226
    %v2228 = vsel %vm334, %v2224, 0.0
    %2229 = vadd.xlane.f32.xlu0 %v2228
    %v2230 = vpop.xlane.xlu0 %2229
    %v2231 = vmul.f32 %v2227, %v1281
    %v2232 = vmul.f32 %v2230, %v1281
    %v2233 = vadd.f32 %v2231, 1e-05
    %v2234 = vadd.f32 %v2232, 1e-05
    %v2235 = vrsqrt.pop %v2233
    %v2236 = vrsqrt.pop %v2234
    %v2237 = vmul.f32 %v2221, %v2235
    %v2238 = vmul.f32 %v2222, %v2236
    %v2239 = vlaneseq
    %v2240 = vshrl.u32 %v2239, 7
    %v2241 = vsub.s32 1, %v2240
    %v2242 = vrot.slane %v1537, %v2241
    %v2243 = vmul.f32 %v2237, %v2242
    %v2244 = vmul.f32 %v2238, %v2242
    %v2245 = vlaneseq
    %v2246 = vshrl.u32 %v2245, 7
    %v2247 = vsub.s32 2, %v2246
    %v2248 = vrot.slane %v1537, %v2247
    %v2249 = vadd.f32 %v2243, %v2248
    %v2250 = vadd.f32 %v2244, %v2248
    %v2251 = vpack.c.bf16 %v2250, %v2249
    %v2252 = vlaneseq
    %v2253 = vshrl.u32 %v2252, 7
    %v2254 = vsub.s32 3, %v2253
    %v2255 = vrot.slane %v1537, %v2254
    %v2264 = vunpack.c.l.b16 %v1520
    %v2265 = vunpack.c.l.b16 %v1521
    %v2266 = vunpack.c.l.b16 %v1522
    %v2267 = vunpack.c.l.b16 %v1523
    %v2268 = vunpack.c.l.b16 %v1524
    %v2269 = vunpack.c.l.b16 %v1525
    %v2270 = vunpack.c.l.b16 %v1526
    %v2271 = vunpack.c.l.b16 %v1527
    %v2272 = vpack.c.b16 %v2265, %v2264
    %v2273 = vpack.c.b16 %v2267, %v2266
    %v2274 = vpack.c.b16 %v2269, %v2268
    %v2275 = vpack.c.b16 %v2271, %v2270
    %v2281 = vsel %vm334, %v2251, 0
    %2283 = vmatprep.subr.bf16.mxu0 0
    %2284 = vmatpush1.bf16.msra.mxu0 0
    %2285 = vmatprep.subr.bf16.mxu0 0
    %2286 = vmatpush1.bf16.msra.mxu0 0
    %2287 = vmatprep.subr.bf16.mxu0 0
    %2288 = vmatpush1.bf16.msra.mxu0 0
    %2289 = vmatprep.subr.bf16.mxu0 0
    %2290 = vmatpush1.bf16.msra.mxu0 0
    %2291 = vmatprep.subr.bf16.mxu0 0
    %2292 = vmatpush1.bf16.msra.mxu0 %v2275
    %2293 = vmatprep.subr.bf16.mxu0 0
    %2294 = vmatpush1.bf16.msra.mxu0 %v2274
    %2295 = vmatprep.subr.bf16.mxu0 0
    %2296 = vmatpush1.bf16.msra.mxu0 %v2273
    %2297 = vmatprep.subr.bf16.mxu0 0
    %2298 = vmatpush1.bf16.msra.mxu0 %v2272
    %2299 = vmatprep.subr.bf16.mxu0 0
    %2300 = vmatpush2.bf16.msra.mxu0 0
    %2301 = vmatprep.subr.bf16.mxu0 0
    %2302 = vmatpush2.bf16.msra.mxu0 0
    %2303 = vmatprep.subr.bf16.mxu0 0
    %2304 = vmatpush2.bf16.msra.mxu0 0
    %2305 = vmatprep.subr.bf16.mxu0 0
    %2306 = vmatpush2.bf16.msra.mxu0 0
    %2307 = vmatprep.subr.bf16.mxu0 0
    %2308 = vmatpush2.bf16.msra.mxu0 0
    %2309 = vmatprep.subr.bf16.mxu0 0
    %2310 = vmatpush2.bf16.msra.mxu0 0
    %2311 = vmatprep.subr.bf16.mxu0 0
    %2312 = vmatpush2.bf16.msra.mxu0 0
    %2313 = vmatprep.subr.bf16.mxu0 0
    %2314 = vmatpush2.bf16.msra.mxu0 0
    %2315 = vmatprep.mubr.bf16.mxu0 0
    %2316 = vmatmul.mubr.bf16.gmra.mxu0 %v2281
    %v2317 = vpop.f32.mrf.mxu0
    %v2318 = vadd.f32 %v2255, %v2317
    %v2319 = vpop.f32.mrf.mxu0
    %v2320 = vpop.f32.mrf.mxu0
    %v2321 = vadd.f32 %v2255, %v2320
    %v2322 = vpop.f32.mrf.mxu0
    %2323 = vdwg.mxu0
    %v2324 = vmax.f32 %v2318, 0.0
    %v2325 = vmax.f32 %v2321, 0.0
    %v2326 = vpack.c.bf16 %v2325, %v2324
    %v2327 = vlaneseq
    %v2328 = vshrl.u32 %v2327, 7
    %v2329 = vsub.s32 4, %v2328
    %v2330 = vrot.slane %v1537, %v2329
    %v2339 = vunpack.c.l.b16 %v1528
    %v2340 = vunpack.c.l.b16 %v1529
    %v2341 = vunpack.c.l.b16 %v1530
    %v2342 = vunpack.c.l.b16 %v1531
    %v2343 = vunpack.c.l.b16 %v1532
    %v2344 = vunpack.c.l.b16 %v1533
    %v2345 = vunpack.c.l.b16 %v1534
    %v2346 = vunpack.c.l.b16 %v1535
    %v2347 = vpack.c.b16 %v2340, %v2339
    %v2348 = vpack.c.b16 %v2342, %v2341
    %v2349 = vpack.c.b16 %v2344, %v2343
    %v2350 = vpack.c.b16 %v2346, %v2345
    %v2356 = vsel %vm334, %v2326, 0
    %2358 = vmatprep.subr.bf16.mxu0 0
    %2359 = vmatpush1.bf16.msra.mxu0 0
    %2360 = vmatprep.subr.bf16.mxu0 0
    %2361 = vmatpush1.bf16.msra.mxu0 0
    %2362 = vmatprep.subr.bf16.mxu0 0
    %2363 = vmatpush1.bf16.msra.mxu0 0
    %2364 = vmatprep.subr.bf16.mxu0 0
    %2365 = vmatpush1.bf16.msra.mxu0 0
    %2366 = vmatprep.subr.bf16.mxu0 0
    %2367 = vmatpush1.bf16.msra.mxu0 %v2350
    %2368 = vmatprep.subr.bf16.mxu0 0
    %2369 = vmatpush1.bf16.msra.mxu0 %v2349
    %2370 = vmatprep.subr.bf16.mxu0 0
    %2371 = vmatpush1.bf16.msra.mxu0 %v2348
    %2372 = vmatprep.subr.bf16.mxu0 0
    %2373 = vmatpush1.bf16.msra.mxu0 %v2347
    %2374 = vmatprep.subr.bf16.mxu0 0
    %2375 = vmatpush2.bf16.msra.mxu0 0
    %2376 = vmatprep.subr.bf16.mxu0 0
    %2377 = vmatpush2.bf16.msra.mxu0 0
    %2378 = vmatprep.subr.bf16.mxu0 0
    %2379 = vmatpush2.bf16.msra.mxu0 0
    %2380 = vmatprep.subr.bf16.mxu0 0
    %2381 = vmatpush2.bf16.msra.mxu0 0
    %2382 = vmatprep.subr.bf16.mxu0 0
    %2383 = vmatpush2.bf16.msra.mxu0 0
    %2384 = vmatprep.subr.bf16.mxu0 0
    %2385 = vmatpush2.bf16.msra.mxu0 0
    %2386 = vmatprep.subr.bf16.mxu0 0
    %2387 = vmatpush2.bf16.msra.mxu0 0
    %2388 = vmatprep.subr.bf16.mxu0 0
    %2389 = vmatpush2.bf16.msra.mxu0 0
    %2390 = vmatprep.mubr.bf16.mxu0 0
    %2391 = vmatmul.mubr.bf16.gmra.mxu0 %v2356
    %v2392 = vpop.f32.mrf.mxu0
    %v2393 = vadd.f32 %v2330, %v2392
    %v2394 = vpop.f32.mrf.mxu0
    %v2395 = vpop.f32.mrf.mxu0
    %v2396 = vadd.f32 %v2330, %v2395
    %v2397 = vpop.f32.mrf.mxu0
    %2398 = vdwg.mxu0
    %v2399 = vadd.f32 %v2393, %v2249
    %v2400 = vadd.f32 %v2396, %v2250
    %v2401 = vsel %vm334, %v2399, 0.0
    %2402 = vadd.xlane.f32.xlu0 %v2401
    %v2403 = vpop.xlane.xlu0 %2402
    %v2404 = vsel %vm334, %v2400, 0.0
    %2405 = vadd.xlane.f32.xlu0 %v2404
    %v2406 = vpop.xlane.xlu0 %2405
    %v2407 = vmul.f32 %v2403, %v1281
    %v2408 = vmul.f32 %v2406, %v1281
    %v2409 = vsub.f32 %v2399, %v2407
    %v2410 = vsub.f32 %v2400, %v2408
    %v2411 = vmul.f32 %v2409, %v2409
    %v2412 = vmul.f32 %v2410, %v2410
    %v2413 = vsel %vm334, %v2411, 0.0
    %2414 = vadd.xlane.f32.xlu0 %v2413
    %v2415 = vpop.xlane.xlu0 %2414
    %v2416 = vsel %vm334, %v2412, 0.0
    %2417 = vadd.xlane.f32.xlu0 %v2416
    %v2418 = vpop.xlane.xlu0 %2417
    %v2419 = vmul.f32 %v2415, %v1281
    %v2420 = vmul.f32 %v2418, %v1281
    %v2421 = vadd.f32 %v2419, 1e-05
    %v2422 = vadd.f32 %v2420, 1e-05
    %v2423 = vrsqrt.pop %v2421
    %v2424 = vrsqrt.pop %v2422
    %v2425 = vmul.f32 %v2409, %v2423
    %v2426 = vmul.f32 %v2410, %v2424
    %v2427 = vlaneseq
    %v2428 = vshrl.u32 %v2427, 7
    %v2429 = vsub.s32 5, %v2428
    %v2430 = vrot.slane %v1537, %v2429
    %v2431 = vmul.f32 %v2425, %v2430
    %v2432 = vmul.f32 %v2426, %v2430
    %v2433 = vlaneseq
    %v2434 = vshrl.u32 %v2433, 7
    %v2435 = vsub.s32 6, %v2434
    %v2436 = vrot.slane %v1537, %v2435
    %v2437 = vadd.f32 %v2431, %v2436
    %v2438 = vadd.f32 %v2432, %v2436
    %s2439 = scalar_lea.vmem %s6, 128
    %v2440 = vld [vmem:[%s2439] sm:$0xff]
    %v2441 = vld [vmem:[%s2439 + $0x8] sm:$0xff]
    %v2442 = vld [vmem:[%s2439 + $0x10] sm:$0xff]
    %v2443 = vld [vmem:[%s2439 + $0x18] sm:$0xff]
    %v2444 = vld [vmem:[%s2439 + $0x20] sm:$0xff]
    %v2445 = vld [vmem:[%s2439 + $0x28] sm:$0xff]
    %v2446 = vld [vmem:[%s2439 + $0x30] sm:$0xff]
    %v2447 = vld [vmem:[%s2439 + $0x38] sm:$0xff]
    %s2448 = scalar_lea.vmem %s7, 192
    %v2449 = vld [vmem:[%s2448] sm:$0xf]
    %v2450 = vld [vmem:[%s2448 + $0x4] sm:$0xf]
    %v2451 = vld [vmem:[%s2448 + $0x8] sm:$0xf]
    %v2452 = vld [vmem:[%s2448 + $0xc] sm:$0xf]
    %v2453 = vld [vmem:[%s2448 + $0x10] sm:$0xf]
    %v2454 = vld [vmem:[%s2448 + $0x14] sm:$0xf]
    %v2455 = vld [vmem:[%s2448 + $0x18] sm:$0xf]
    %v2456 = vld [vmem:[%s2448 + $0x1c] sm:$0xf]
    %v2457 = vld [vmem:[%s2448 + $0x20] sm:$0xf]
    %v2458 = vld [vmem:[%s2448 + $0x24] sm:$0xf]
    %v2459 = vld [vmem:[%s2448 + $0x28] sm:$0xf]
    %v2460 = vld [vmem:[%s2448 + $0x2c] sm:$0xf]
    %v2461 = vld [vmem:[%s2448 + $0x30] sm:$0xf]
    %v2462 = vld [vmem:[%s2448 + $0x34] sm:$0xf]
    %v2463 = vld [vmem:[%s2448 + $0x38] sm:$0xf]
    %v2464 = vld [vmem:[%s2448 + $0x3c] sm:$0xf]
    %v2465 = vld [vmem:[%s2448 + $0x40] sm:$0xf]
    %v2466 = vld [vmem:[%s2448 + $0x44] sm:$0xf]
    %v2467 = vld [vmem:[%s2448 + $0x48] sm:$0xf]
    %v2468 = vld [vmem:[%s2448 + $0x4c] sm:$0xf]
    %v2469 = vld [vmem:[%s2448 + $0x50] sm:$0xf]
    %v2470 = vld [vmem:[%s2448 + $0x54] sm:$0xf]
    %v2471 = vld [vmem:[%s2448 + $0x58] sm:$0xf]
    %v2472 = vld [vmem:[%s2448 + $0x5c] sm:$0xf]
    %s2473 = scalar_lea.vmem [#allocation10], 16
    %v2474 = vld [vmem:[%s2473] sm:$0xff]
    %v2475 = vpack.c.bf16 %v2438, %v2437
    %v2484 = vunpack.c.l.b16 %v2440
    %v2485 = vunpack.c.h.b16 %v2440
    %v2486 = vunpack.c.l.b16 %v2441
    %v2487 = vunpack.c.h.b16 %v2441
    %v2488 = vunpack.c.l.b16 %v2442
    %v2489 = vunpack.c.h.b16 %v2442
    %v2490 = vunpack.c.l.b16 %v2443
    %v2491 = vunpack.c.h.b16 %v2443
    %v2492 = vunpack.c.l.b16 %v2444
    %v2493 = vunpack.c.h.b16 %v2444
    %v2494 = vunpack.c.l.b16 %v2445
    %v2495 = vunpack.c.h.b16 %v2445
    %v2496 = vunpack.c.l.b16 %v2446
    %v2497 = vunpack.c.h.b16 %v2446
    %v2498 = vunpack.c.l.b16 %v2447
    %v2499 = vunpack.c.h.b16 %v2447
    %v2500 = vpack.c.b16 %v2486, %v2484
    %v2501 = vpack.c.b16 %v2487, %v2485
    %v2502 = vpack.c.b16 %v2490, %v2488
    %v2503 = vpack.c.b16 %v2491, %v2489
    %v2504 = vpack.c.b16 %v2494, %v2492
    %v2505 = vpack.c.b16 %v2495, %v2493
    %v2506 = vpack.c.b16 %v2498, %v2496
    %v2507 = vpack.c.b16 %v2499, %v2497
    %v2517 = vsel %vm334, %v2475, 0
    %2519 = vmatprep.subr.bf16.mxu0 0
    %2520 = vmatpush1.bf16.msra.mxu0 0
    %2521 = vmatprep.subr.bf16.mxu0 0
    %2522 = vmatpush1.bf16.msra.mxu0 0
    %2523 = vmatprep.subr.bf16.mxu0 0
    %2524 = vmatpush1.bf16.msra.mxu0 0
    %2525 = vmatprep.subr.bf16.mxu0 0
    %2526 = vmatpush1.bf16.msra.mxu0 0
    %2527 = vmatprep.subr.bf16.mxu0 %v2507
    %2528 = vmatpush1.bf16.msra.mxu0 %v2506
    %2529 = vmatprep.subr.bf16.mxu0 %v2505
    %2530 = vmatpush1.bf16.msra.mxu0 %v2504
    %2531 = vmatprep.subr.bf16.mxu0 %v2503
    %2532 = vmatpush1.bf16.msra.mxu0 %v2502
    %2533 = vmatprep.subr.bf16.mxu0 %v2501
    %2534 = vmatpush1.bf16.msra.mxu0 %v2500
    %2535 = vmatprep.subr.bf16.mxu0 0
    %2536 = vmatpush2.bf16.msra.mxu0 0
    %2537 = vmatprep.subr.bf16.mxu0 0
    %2538 = vmatpush2.bf16.msra.mxu0 0
    %2539 = vmatprep.subr.bf16.mxu0 0
    %2540 = vmatpush2.bf16.msra.mxu0 0
    %2541 = vmatprep.subr.bf16.mxu0 0
    %2542 = vmatpush2.bf16.msra.mxu0 0
    %2543 = vmatprep.subr.bf16.mxu0 0
    %2544 = vmatpush2.bf16.msra.mxu0 0
    %2545 = vmatprep.subr.bf16.mxu0 0
    %2546 = vmatpush2.bf16.msra.mxu0 0
    %2547 = vmatprep.subr.bf16.mxu0 0
    %2548 = vmatpush2.bf16.msra.mxu0 0
    %2549 = vmatprep.subr.bf16.mxu0 0
    %2550 = vmatpush2.bf16.msra.mxu0 0
    %2551 = vmatprep.mubr.bf16.mxu0 0
    %2552 = vmatmul.mubr.bf16.gmra.mxu0 %v2517
    %v2553 = vpop.f32.mrf.mxu0
    %v2554 = vadd.f32 0.0, %v2553
    %v2555 = vpop.f32.mrf.mxu0
    %v2556 = vadd.f32 0.0, %v2555
    %v2557 = vpop.f32.mrf.mxu0
    %v2558 = vadd.f32 0.0, %v2557
    %v2559 = vpop.f32.mrf.mxu0
    %v2560 = vadd.f32 0.0, %v2559
    %2561 = vdwg.mxu0
    %v2562 = vpack.c.bf16 %v2558, %v2554
    %v2563 = vpack.c.bf16 %v2560, %v2556
    %2565 = vrot.lane.b32.xlu0 %v2562, 64
    %v2566 = vpop.permute.xlu0 %2565
    %v2568 = vsel %vm689, %v2562, 0
    %v2571 = vsel %vm689, %v2566, 0
    %2573 = vmatprep.subr.bf16.mxu0 0
    %2574 = vmatpush1.bf16.xpose.msra.mxu0 0
    %2575 = vmatprep.subr.bf16.mxu0 0
    %2576 = vmatpush1.bf16.xpose.msra.mxu0 0
    %2577 = vmatprep.subr.bf16.mxu0 0
    %2578 = vmatpush1.bf16.xpose.msra.mxu0 0
    %2579 = vmatprep.subr.bf16.mxu0 0
    %2580 = vmatpush1.bf16.xpose.msra.mxu0 0
    %2581 = vmatprep.subr.bf16.mxu0 0
    %2582 = vmatpush1.bf16.xpose.msra.mxu0 0
    %2583 = vmatprep.subr.bf16.mxu0 0
    %2584 = vmatpush1.bf16.xpose.msra.mxu0 0
    %2585 = vmatprep.subr.bf16.mxu0 0
    %2586 = vmatpush1.bf16.xpose.msra.mxu0 0
    %2587 = vmatprep.subr.bf16.mxu0 0
    %2588 = vmatpush1.bf16.xpose.msra.mxu0 %v2571
    %2589 = vmatprep.subr.bf16.mxu0 0
    %2590 = vmatpush2.bf16.xpose.msra.mxu0 0
    %2591 = vmatprep.subr.bf16.mxu0 0
    %2592 = vmatpush2.bf16.xpose.msra.mxu0 0
    %2593 = vmatprep.subr.bf16.mxu0 0
    %2594 = vmatpush2.bf16.xpose.msra.mxu0 0
    %2595 = vmatprep.subr.bf16.mxu0 0
    %2596 = vmatpush2.bf16.xpose.msra.mxu0 0
    %2597 = vmatprep.subr.bf16.mxu0 0
    %2598 = vmatpush2.bf16.xpose.msra.mxu0 0
    %2599 = vmatprep.subr.bf16.mxu0 0
    %2600 = vmatpush2.bf16.xpose.msra.mxu0 0
    %2601 = vmatprep.subr.bf16.mxu0 0
    %2602 = vmatpush2.bf16.xpose.msra.mxu0 0
    %2603 = vmatprep.subr.bf16.mxu0 0
    %2604 = vmatpush2.bf16.xpose.msra.mxu0 0
    %2605 = vmatprep.mubr.bf16.mxu0 0
    %2606 = vmatmul.mubr.bf16.gmra.mxu0 %v2568
    %v2607 = vpop.f32.mrf.mxu0
    %v2608 = vadd.f32 %v260, %v2607
    %v2609 = vpop.f32.mrf.mxu0
    %v2610 = vpop.f32.mrf.mxu0
    %v2611 = vadd.f32 %v261, %v2610
    %v2612 = vpop.f32.mrf.mxu0
    %2613 = vdwg.mxu0
    %v2614 = vsel %vm689, %v2608, -inf
    %2615 = vmax.xlane.f32.xlu0 %v2614
    %v2616 = vpop.xlane.xlu0 %2615
    %v2617 = vsel %vm689, %v2611, -inf
    %2618 = vmax.xlane.f32.xlu0 %v2617
    %v2619 = vpop.xlane.xlu0 %2618
    %v2620 = vsub.f32 %v2608, %v2616
    %v2621 = vsub.f32 %v2611, %v2619
    %v2622 = vmul.f32 %v2620, 1.442695
    %v2623 = vpow.pop %v2622
    %v2624 = vmul.f32 %v2621, 1.442695
    %v2625 = vpow.pop %v2624
    %v2626 = vsel %vm689, %v2623, 0.0
    %2627 = vadd.xlane.f32.xlu0 %v2626
    %v2628 = vpop.xlane.xlu0 %2627
    %v2629 = vsel %vm689, %v2625, 0.0
    %2630 = vadd.xlane.f32.xlu0 %v2629
    %v2631 = vpop.xlane.xlu0 %2630
    %v2632 = vrcp.pop %v2628
    %v2633 = vrcp.pop %v2631
    %v2634 = vmul.f32 %v2623, %v2632
    %v2635 = vmul.f32 %v2625, %v2633
    %v2636 = vpack.c.bf16 %v2635, %v2634
    %v2638 = vsel %vm689, %v2636, 0
    %2640 = vmatprep.subr.bf16.mxu0 0
    %2641 = vmatpush1.bf16.msra.mxu0 0
    %2642 = vmatprep.subr.bf16.mxu0 0
    %2643 = vmatpush1.bf16.msra.mxu0 0
    %2644 = vmatprep.subr.bf16.mxu0 0
    %2645 = vmatpush1.bf16.msra.mxu0 0
    %2646 = vmatprep.subr.bf16.mxu0 0
    %2647 = vmatpush1.bf16.msra.mxu0 0
    %2648 = vmatprep.subr.bf16.mxu0 0
    %2649 = vmatpush1.bf16.msra.mxu0 0
    %2650 = vmatprep.subr.bf16.mxu0 0
    %2651 = vmatpush1.bf16.msra.mxu0 0
    %2652 = vmatprep.subr.bf16.mxu0 0
    %2653 = vmatpush1.bf16.msra.mxu0 0
    %2654 = vmatprep.subr.bf16.mxu0 0
    %2655 = vmatpush1.bf16.msra.mxu0 %v2563
    %2656 = vmatprep.subr.bf16.mxu0 0
    %2657 = vmatpush2.bf16.msra.mxu0 0
    %2658 = vmatprep.subr.bf16.mxu0 0
    %2659 = vmatpush2.bf16.msra.mxu0 0
    %2660 = vmatprep.subr.bf16.mxu0 0
    %2661 = vmatpush2.bf16.msra.mxu0 0
    %2662 = vmatprep.subr.bf16.mxu0 0
    %2663 = vmatpush2.bf16.msra.mxu0 0
    %2664 = vmatprep.subr.bf16.mxu0 0
    %2665 = vmatpush2.bf16.msra.mxu0 0
    %2666 = vmatprep.subr.bf16.mxu0 0
    %2667 = vmatpush2.bf16.msra.mxu0 0
    %2668 = vmatprep.subr.bf16.mxu0 0
    %2669 = vmatpush2.bf16.msra.mxu0 0
    %2670 = vmatprep.subr.bf16.mxu0 0
    %2671 = vmatpush2.bf16.msra.mxu0 0
    %2672 = vmatprep.mubr.bf16.mxu0 0
    %2673 = vmatmul.mubr.bf16.gmra.mxu0 %v2638
    %v2674 = vpop.f32.mrf.mxu0
    %v2675 = vadd.f32 0.0, %v2674
    %v2676 = vpop.f32.mrf.mxu0
    %v2677 = vpop.f32.mrf.mxu0
    %v2678 = vadd.f32 0.0, %v2677
    %v2679 = vpop.f32.mrf.mxu0
    %2680 = vdwg.mxu0
    %2681 = vrot.lane.b32.xlu0 %v2562, 112
    %v2682 = vpop.permute.xlu0 %2681
    %2683 = vrot.lane.b32.xlu0 %v2562, 48
    %v2684 = vpop.permute.xlu0 %2683
    %v2686 = vsel %vm689, %v2682, 0
    %v2689 = vsel %vm689, %v2684, 0
    %2691 = vmatprep.subr.bf16.mxu0 0
    %2692 = vmatpush1.bf16.xpose.msra.mxu0 0
    %2693 = vmatprep.subr.bf16.mxu0 0
    %2694 = vmatpush1.bf16.xpose.msra.mxu0 0
    %2695 = vmatprep.subr.bf16.mxu0 0
    %2696 = vmatpush1.bf16.xpose.msra.mxu0 0
    %2697 = vmatprep.subr.bf16.mxu0 0
    %2698 = vmatpush1.bf16.xpose.msra.mxu0 0
    %2699 = vmatprep.subr.bf16.mxu0 0
    %2700 = vmatpush1.bf16.xpose.msra.mxu0 0
    %2701 = vmatprep.subr.bf16.mxu0 0
    %2702 = vmatpush1.bf16.xpose.msra.mxu0 0
    %2703 = vmatprep.subr.bf16.mxu0 0
    %2704 = vmatpush1.bf16.xpose.msra.mxu0 0
    %2705 = vmatprep.subr.bf16.mxu0 0
    %2706 = vmatpush1.bf16.xpose.msra.mxu0 %v2689
    %2707 = vmatprep.subr.bf16.mxu0 0
    %2708 = vmatpush2.bf16.xpose.msra.mxu0 0
    %2709 = vmatprep.subr.bf16.mxu0 0
    %2710 = vmatpush2.bf16.xpose.msra.mxu0 0
    %2711 = vmatprep.subr.bf16.mxu0 0
    %2712 = vmatpush2.bf16.xpose.msra.mxu0 0
    %2713 = vmatprep.subr.bf16.mxu0 0
    %2714 = vmatpush2.bf16.xpose.msra.mxu0 0
    %2715 = vmatprep.subr.bf16.mxu0 0
    %2716 = vmatpush2.bf16.xpose.msra.mxu0 0
    %2717 = vmatprep.subr.bf16.mxu0 0
    %2718 = vmatpush2.bf16.xpose.msra.mxu0 0
    %2719 = vmatprep.subr.bf16.mxu0 0
    %2720 = vmatpush2.bf16.xpose.msra.mxu0 0
    %2721 = vmatprep.subr.bf16.mxu0 0
    %2722 = vmatpush2.bf16.xpose.msra.mxu0 0
    %2723 = vmatprep.mubr.bf16.mxu0 0
    %2724 = vmatmul.mubr.bf16.gmra.mxu0 %v2686
    %v2725 = vpop.f32.mrf.mxu0
    %v2726 = vadd.f32 %v260, %v2725
    %v2727 = vpop.f32.mrf.mxu0
    %v2728 = vpop.f32.mrf.mxu0
    %v2729 = vadd.f32 %v261, %v2728
    %v2730 = vpop.f32.mrf.mxu0
    %2731 = vdwg.mxu0
    %v2732 = vsel %vm689, %v2726, -inf
    %2733 = vmax.xlane.f32.xlu0 %v2732
    %v2734 = vpop.xlane.xlu0 %2733
    %v2735 = vsel %vm689, %v2729, -inf
    %2736 = vmax.xlane.f32.xlu0 %v2735
    %v2737 = vpop.xlane.xlu0 %2736
    %v2738 = vsub.f32 %v2726, %v2734
    %v2739 = vsub.f32 %v2729, %v2737
    %v2740 = vmul.f32 %v2738, 1.442695
    %v2741 = vpow.pop %v2740
    %v2742 = vmul.f32 %v2739, 1.442695
    %v2743 = vpow.pop %v2742
    %v2744 = vsel %vm689, %v2741, 0.0
    %2745 = vadd.xlane.f32.xlu0 %v2744
    %v2746 = vpop.xlane.xlu0 %2745
    %v2747 = vsel %vm689, %v2743, 0.0
    %2748 = vadd.xlane.f32.xlu0 %v2747
    %v2749 = vpop.xlane.xlu0 %2748
    %v2750 = vrcp.pop %v2746
    %v2751 = vrcp.pop %v2749
    %v2752 = vmul.f32 %v2741, %v2750
    %v2753 = vmul.f32 %v2743, %v2751
    %v2754 = vpack.c.bf16 %v2753, %v2752
    %2756 = vrot.lane.b32.xlu0 %v2563, 112
    %v2757 = vpop.permute.xlu0 %2756
    %v2760 = vsel %vm689, %v2754, 0
    %2762 = vmatprep.subr.bf16.mxu0 0
    %2763 = vmatpush1.bf16.msra.mxu0 0
    %2764 = vmatprep.subr.bf16.mxu0 0
    %2765 = vmatpush1.bf16.msra.mxu0 0
    %2766 = vmatprep.subr.bf16.mxu0 0
    %2767 = vmatpush1.bf16.msra.mxu0 0
    %2768 = vmatprep.subr.bf16.mxu0 0
    %2769 = vmatpush1.bf16.msra.mxu0 0
    %2770 = vmatprep.subr.bf16.mxu0 0
    %2771 = vmatpush1.bf16.msra.mxu0 0
    %2772 = vmatprep.subr.bf16.mxu0 0
    %2773 = vmatpush1.bf16.msra.mxu0 0
    %2774 = vmatprep.subr.bf16.mxu0 0
    %2775 = vmatpush1.bf16.msra.mxu0 0
    %2776 = vmatprep.subr.bf16.mxu0 0
    %2777 = vmatpush1.bf16.msra.mxu0 %v2757
    %2778 = vmatprep.subr.bf16.mxu0 0
    %2779 = vmatpush2.bf16.msra.mxu0 0
    %2780 = vmatprep.subr.bf16.mxu0 0
    %2781 = vmatpush2.bf16.msra.mxu0 0
    %2782 = vmatprep.subr.bf16.mxu0 0
    %2783 = vmatpush2.bf16.msra.mxu0 0
    %2784 = vmatprep.subr.bf16.mxu0 0
    %2785 = vmatpush2.bf16.msra.mxu0 0
    %2786 = vmatprep.subr.bf16.mxu0 0
    %2787 = vmatpush2.bf16.msra.mxu0 0
    %2788 = vmatprep.subr.bf16.mxu0 0
    %2789 = vmatpush2.bf16.msra.mxu0 0
    %2790 = vmatprep.subr.bf16.mxu0 0
    %2791 = vmatpush2.bf16.msra.mxu0 0
    %2792 = vmatprep.subr.bf16.mxu0 0
    %2793 = vmatpush2.bf16.msra.mxu0 0
    %2794 = vmatprep.mubr.bf16.mxu0 0
    %2795 = vmatmul.mubr.bf16.gmra.mxu0 %v2760
    %v2796 = vpop.f32.mrf.mxu0
    %v2797 = vadd.f32 0.0, %v2796
    %v2798 = vpop.f32.mrf.mxu0
    %v2799 = vpop.f32.mrf.mxu0
    %v2800 = vadd.f32 0.0, %v2799
    %v2801 = vpop.f32.mrf.mxu0
    %2802 = vdwg.mxu0
    %2803 = vrot.lane.b32.xlu0 %v2562, 96
    %v2804 = vpop.permute.xlu0 %2803
    %2805 = vrot.lane.b32.xlu0 %v2562, 32
    %v2806 = vpop.permute.xlu0 %2805
    %v2808 = vsel %vm689, %v2804, 0
    %v2811 = vsel %vm689, %v2806, 0
    %2813 = vmatprep.subr.bf16.mxu0 0
    %2814 = vmatpush1.bf16.xpose.msra.mxu0 0
    %2815 = vmatprep.subr.bf16.mxu0 0
    %2816 = vmatpush1.bf16.xpose.msra.mxu0 0
    %2817 = vmatprep.subr.bf16.mxu0 0
    %2818 = vmatpush1.bf16.xpose.msra.mxu0 0
    %2819 = vmatprep.subr.bf16.mxu0 0
    %2820 = vmatpush1.bf16.xpose.msra.mxu0 0
    %2821 = vmatprep.subr.bf16.mxu0 0
    %2822 = vmatpush1.bf16.xpose.msra.mxu0 0
    %2823 = vmatprep.subr.bf16.mxu0 0
    %2824 = vmatpush1.bf16.xpose.msra.mxu0 0
    %2825 = vmatprep.subr.bf16.mxu0 0
    %2826 = vmatpush1.bf16.xpose.msra.mxu0 0
    %2827 = vmatprep.subr.bf16.mxu0 0
    %2828 = vmatpush1.bf16.xpose.msra.mxu0 %v2811
    %2829 = vmatprep.subr.bf16.mxu0 0
    %2830 = vmatpush2.bf16.xpose.msra.mxu0 0
    %2831 = vmatprep.subr.bf16.mxu0 0
    %2832 = vmatpush2.bf16.xpose.msra.mxu0 0
    %2833 = vmatprep.subr.bf16.mxu0 0
    %2834 = vmatpush2.bf16.xpose.msra.mxu0 0
    %2835 = vmatprep.subr.bf16.mxu0 0
    %2836 = vmatpush2.bf16.xpose.msra.mxu0 0
    %2837 = vmatprep.subr.bf16.mxu0 0
    %2838 = vmatpush2.bf16.xpose.msra.mxu0 0
    %2839 = vmatprep.subr.bf16.mxu0 0
    %2840 = vmatpush2.bf16.xpose.msra.mxu0 0
    %2841 = vmatprep.subr.bf16.mxu0 0
    %2842 = vmatpush2.bf16.xpose.msra.mxu0 0
    %2843 = vmatprep.subr.bf16.mxu0 0
    %2844 = vmatpush2.bf16.xpose.msra.mxu0 0
    %2845 = vmatprep.mubr.bf16.mxu0 0
    %2846 = vmatmul.mubr.bf16.gmra.mxu0 %v2808
    %v2847 = vpop.f32.mrf.mxu0
    %v2848 = vadd.f32 %v260, %v2847
    %v2849 = vpop.f32.mrf.mxu0
    %v2850 = vpop.f32.mrf.mxu0
    %v2851 = vadd.f32 %v261, %v2850
    %v2852 = vpop.f32.mrf.mxu0
    %2853 = vdwg.mxu0
    %v2854 = vsel %vm689, %v2848, -inf
    %2855 = vmax.xlane.f32.xlu0 %v2854
    %v2856 = vpop.xlane.xlu0 %2855
    %v2857 = vsel %vm689, %v2851, -inf
    %2858 = vmax.xlane.f32.xlu0 %v2857
    %v2859 = vpop.xlane.xlu0 %2858
    %v2860 = vsub.f32 %v2848, %v2856
    %v2861 = vsub.f32 %v2851, %v2859
    %v2862 = vmul.f32 %v2860, 1.442695
    %v2863 = vpow.pop %v2862
    %v2864 = vmul.f32 %v2861, 1.442695
    %v2865 = vpow.pop %v2864
    %v2866 = vsel %vm689, %v2863, 0.0
    %2867 = vadd.xlane.f32.xlu0 %v2866
    %v2868 = vpop.xlane.xlu0 %2867
    %v2869 = vsel %vm689, %v2865, 0.0
    %2870 = vadd.xlane.f32.xlu0 %v2869
    %v2871 = vpop.xlane.xlu0 %2870
    %v2872 = vrcp.pop %v2868
    %v2873 = vrcp.pop %v2871
    %v2874 = vmul.f32 %v2863, %v2872
    %v2875 = vmul.f32 %v2865, %v2873
    %v2876 = vpack.c.bf16 %v2875, %v2874
    %2877 = vrot.lane.b32.xlu0 %v2563, 96
    %v2878 = vpop.permute.xlu0 %2877
    %v2881 = vsel %vm689, %v2876, 0
    %2883 = vmatprep.subr.bf16.mxu0 0
    %2884 = vmatpush1.bf16.msra.mxu0 0
    %2885 = vmatprep.subr.bf16.mxu0 0
    %2886 = vmatpush1.bf16.msra.mxu0 0
    %2887 = vmatprep.subr.bf16.mxu0 0
    %2888 = vmatpush1.bf16.msra.mxu0 0
    %2889 = vmatprep.subr.bf16.mxu0 0
    %2890 = vmatpush1.bf16.msra.mxu0 0
    %2891 = vmatprep.subr.bf16.mxu0 0
    %2892 = vmatpush1.bf16.msra.mxu0 0
    %2893 = vmatprep.subr.bf16.mxu0 0
    %2894 = vmatpush1.bf16.msra.mxu0 0
    %2895 = vmatprep.subr.bf16.mxu0 0
    %2896 = vmatpush1.bf16.msra.mxu0 0
    %2897 = vmatprep.subr.bf16.mxu0 0
    %2898 = vmatpush1.bf16.msra.mxu0 %v2878
    %2899 = vmatprep.subr.bf16.mxu0 0
    %2900 = vmatpush2.bf16.msra.mxu0 0
    %2901 = vmatprep.subr.bf16.mxu0 0
    %2902 = vmatpush2.bf16.msra.mxu0 0
    %2903 = vmatprep.subr.bf16.mxu0 0
    %2904 = vmatpush2.bf16.msra.mxu0 0
    %2905 = vmatprep.subr.bf16.mxu0 0
    %2906 = vmatpush2.bf16.msra.mxu0 0
    %2907 = vmatprep.subr.bf16.mxu0 0
    %2908 = vmatpush2.bf16.msra.mxu0 0
    %2909 = vmatprep.subr.bf16.mxu0 0
    %2910 = vmatpush2.bf16.msra.mxu0 0
    %2911 = vmatprep.subr.bf16.mxu0 0
    %2912 = vmatpush2.bf16.msra.mxu0 0
    %2913 = vmatprep.subr.bf16.mxu0 0
    %2914 = vmatpush2.bf16.msra.mxu0 0
    %2915 = vmatprep.mubr.bf16.mxu0 0
    %2916 = vmatmul.mubr.bf16.gmra.mxu0 %v2881
    %v2917 = vpop.f32.mrf.mxu0
    %v2918 = vadd.f32 0.0, %v2917
    %v2919 = vpop.f32.mrf.mxu0
    %v2920 = vpop.f32.mrf.mxu0
    %v2921 = vadd.f32 0.0, %v2920
    %v2922 = vpop.f32.mrf.mxu0
    %2923 = vdwg.mxu0
    %2924 = vrot.lane.b32.xlu0 %v2562, 80
    %v2925 = vpop.permute.xlu0 %2924
    %2926 = vrot.lane.b32.xlu0 %v2562, 16
    %v2927 = vpop.permute.xlu0 %2926
    %v2929 = vsel %vm689, %v2925, 0
    %v2932 = vsel %vm689, %v2927, 0
    %2934 = vmatprep.subr.bf16.mxu0 0
    %2935 = vmatpush1.bf16.xpose.msra.mxu0 0
    %2936 = vmatprep.subr.bf16.mxu0 0
    %2937 = vmatpush1.bf16.xpose.msra.mxu0 0
    %2938 = vmatprep.subr.bf16.mxu0 0
    %2939 = vmatpush1.bf16.xpose.msra.mxu0 0
    %2940 = vmatprep.subr.bf16.mxu0 0
    %2941 = vmatpush1.bf16.xpose.msra.mxu0 0
    %2942 = vmatprep.subr.bf16.mxu0 0
    %2943 = vmatpush1.bf16.xpose.msra.mxu0 0
    %2944 = vmatprep.subr.bf16.mxu0 0
    %2945 = vmatpush1.bf16.xpose.msra.mxu0 0
    %2946 = vmatprep.subr.bf16.mxu0 0
    %2947 = vmatpush1.bf16.xpose.msra.mxu0 0
    %2948 = vmatprep.subr.bf16.mxu0 0
    %2949 = vmatpush1.bf16.xpose.msra.mxu0 %v2932
    %2950 = vmatprep.subr.bf16.mxu0 0
    %2951 = vmatpush2.bf16.xpose.msra.mxu0 0
    %2952 = vmatprep.subr.bf16.mxu0 0
    %2953 = vmatpush2.bf16.xpose.msra.mxu0 0
    %2954 = vmatprep.subr.bf16.mxu0 0
    %2955 = vmatpush2.bf16.xpose.msra.mxu0 0
    %2956 = vmatprep.subr.bf16.mxu0 0
    %2957 = vmatpush2.bf16.xpose.msra.mxu0 0
    %2958 = vmatprep.subr.bf16.mxu0 0
    %2959 = vmatpush2.bf16.xpose.msra.mxu0 0
    %2960 = vmatprep.subr.bf16.mxu0 0
    %2961 = vmatpush2.bf16.xpose.msra.mxu0 0
    %2962 = vmatprep.subr.bf16.mxu0 0
    %2963 = vmatpush2.bf16.xpose.msra.mxu0 0
    %2964 = vmatprep.subr.bf16.mxu0 0
    %2965 = vmatpush2.bf16.xpose.msra.mxu0 0
    %2966 = vmatprep.mubr.bf16.mxu0 0
    %2967 = vmatmul.mubr.bf16.gmra.mxu0 %v2929
    %v2968 = vpop.f32.mrf.mxu0
    %v2969 = vadd.f32 %v260, %v2968
    %v2970 = vpop.f32.mrf.mxu0
    %v2971 = vpop.f32.mrf.mxu0
    %v2972 = vadd.f32 %v261, %v2971
    %v2973 = vpop.f32.mrf.mxu0
    %2974 = vdwg.mxu0
    %v2975 = vsel %vm689, %v2969, -inf
    %2976 = vmax.xlane.f32.xlu0 %v2975
    %v2977 = vpop.xlane.xlu0 %2976
    %v2978 = vsel %vm689, %v2972, -inf
    %2979 = vmax.xlane.f32.xlu0 %v2978
    %v2980 = vpop.xlane.xlu0 %2979
    %v2981 = vsub.f32 %v2969, %v2977
    %v2982 = vsub.f32 %v2972, %v2980
    %v2983 = vmul.f32 %v2981, 1.442695
    %v2984 = vpow.pop %v2983
    %v2985 = vmul.f32 %v2982, 1.442695
    %v2986 = vpow.pop %v2985
    %v2987 = vsel %vm689, %v2984, 0.0
    %2988 = vadd.xlane.f32.xlu0 %v2987
    %v2989 = vpop.xlane.xlu0 %2988
    %v2990 = vsel %vm689, %v2986, 0.0
    %2991 = vadd.xlane.f32.xlu0 %v2990
    %v2992 = vpop.xlane.xlu0 %2991
    %v2993 = vrcp.pop %v2989
    %v2994 = vrcp.pop %v2992
    %v2995 = vmul.f32 %v2984, %v2993
    %v2996 = vmul.f32 %v2986, %v2994
    %v2997 = vpack.c.bf16 %v2996, %v2995
    %2998 = vrot.lane.b32.xlu0 %v2563, 80
    %v2999 = vpop.permute.xlu0 %2998
    %v3002 = vsel %vm689, %v2997, 0
    %3004 = vmatprep.subr.bf16.mxu0 0
    %3005 = vmatpush1.bf16.msra.mxu0 0
    %3006 = vmatprep.subr.bf16.mxu0 0
    %3007 = vmatpush1.bf16.msra.mxu0 0
    %3008 = vmatprep.subr.bf16.mxu0 0
    %3009 = vmatpush1.bf16.msra.mxu0 0
    %3010 = vmatprep.subr.bf16.mxu0 0
    %3011 = vmatpush1.bf16.msra.mxu0 0
    %3012 = vmatprep.subr.bf16.mxu0 0
    %3013 = vmatpush1.bf16.msra.mxu0 0
    %3014 = vmatprep.subr.bf16.mxu0 0
    %3015 = vmatpush1.bf16.msra.mxu0 0
    %3016 = vmatprep.subr.bf16.mxu0 0
    %3017 = vmatpush1.bf16.msra.mxu0 0
    %3018 = vmatprep.subr.bf16.mxu0 0
    %3019 = vmatpush1.bf16.msra.mxu0 %v2999
    %3020 = vmatprep.subr.bf16.mxu0 0
    %3021 = vmatpush2.bf16.msra.mxu0 0
    %3022 = vmatprep.subr.bf16.mxu0 0
    %3023 = vmatpush2.bf16.msra.mxu0 0
    %3024 = vmatprep.subr.bf16.mxu0 0
    %3025 = vmatpush2.bf16.msra.mxu0 0
    %3026 = vmatprep.subr.bf16.mxu0 0
    %3027 = vmatpush2.bf16.msra.mxu0 0
    %3028 = vmatprep.subr.bf16.mxu0 0
    %3029 = vmatpush2.bf16.msra.mxu0 0
    %3030 = vmatprep.subr.bf16.mxu0 0
    %3031 = vmatpush2.bf16.msra.mxu0 0
    %3032 = vmatprep.subr.bf16.mxu0 0
    %3033 = vmatpush2.bf16.msra.mxu0 0
    %3034 = vmatprep.subr.bf16.mxu0 0
    %3035 = vmatpush2.bf16.msra.mxu0 0
    %3036 = vmatprep.mubr.bf16.mxu0 0
    %3037 = vmatmul.mubr.bf16.gmra.mxu0 %v3002
    %v3038 = vpop.f32.mrf.mxu0
    %v3039 = vadd.f32 0.0, %v3038
    %v3040 = vpop.f32.mrf.mxu0
    %v3041 = vpop.f32.mrf.mxu0
    %v3042 = vadd.f32 0.0, %v3041
    %v3043 = vpop.f32.mrf.mxu0
    %3044 = vdwg.mxu0
    %3047 = vrot.lane.b32.xlu0 %v2797, 16
    %v3048 = vpop.permute.xlu0 %3047
    %3049 = vrot.lane.b32.xlu0 %v2800, 16
    %v3050 = vpop.permute.xlu0 %3049
    %3055 = vrot.lane.b32.xlu0 %v2918, 32
    %v3056 = vpop.permute.xlu0 %3055
    %3057 = vrot.lane.b32.xlu0 %v2921, 32
    %v3058 = vpop.permute.xlu0 %3057
    %3063 = vrot.lane.b32.xlu0 %v3039, 48
    %v3064 = vpop.permute.xlu0 %3063
    %3065 = vrot.lane.b32.xlu0 %v3042, 48
    %v3066 = vpop.permute.xlu0 %3065
    %v3069 = vsel %vm689, %v2675, %v3048
    %v3070 = vsel %vm689, %v2678, %v3050
    %v3071 = vsel %vm1194, %v3069, %v3056
    %v3072 = vsel %vm1194, %v3070, %v3058
    %v3073 = vsel %vm1197, %v3071, %v3064
    %v3074 = vsel %vm1197, %v3072, %v3066
    %v3075 = vpack.c.bf16 %v3074, %v3073
    %v3076 = vlaneseq
    %v3077 = vshrl.u32 %v3076, 7
    %v3078 = vsub.s32 0, %v3077
    %v3079 = vrot.slane %v2474, %v3078
    %v3088 = vunpack.c.l.b16 %v2449
    %v3089 = vunpack.c.l.b16 %v2450
    %v3090 = vunpack.c.l.b16 %v2451
    %v3091 = vunpack.c.l.b16 %v2452
    %v3092 = vunpack.c.l.b16 %v2453
    %v3093 = vunpack.c.l.b16 %v2454
    %v3094 = vunpack.c.l.b16 %v2455
    %v3095 = vunpack.c.l.b16 %v2456
    %v3096 = vpack.c.b16 %v3089, %v3088
    %v3097 = vpack.c.b16 %v3091, %v3090
    %v3098 = vpack.c.b16 %v3093, %v3092
    %v3099 = vpack.c.b16 %v3095, %v3094
    %v3105 = vsel %vm334, %v3075, 0
    %3107 = vmatprep.subr.bf16.mxu0 0
    %3108 = vmatpush1.bf16.msra.mxu0 0
    %3109 = vmatprep.subr.bf16.mxu0 0
    %3110 = vmatpush1.bf16.msra.mxu0 0
    %3111 = vmatprep.subr.bf16.mxu0 0
    %3112 = vmatpush1.bf16.msra.mxu0 0
    %3113 = vmatprep.subr.bf16.mxu0 0
    %3114 = vmatpush1.bf16.msra.mxu0 0
    %3115 = vmatprep.subr.bf16.mxu0 0
    %3116 = vmatpush1.bf16.msra.mxu0 %v3099
    %3117 = vmatprep.subr.bf16.mxu0 0
    %3118 = vmatpush1.bf16.msra.mxu0 %v3098
    %3119 = vmatprep.subr.bf16.mxu0 0
    %3120 = vmatpush1.bf16.msra.mxu0 %v3097
    %3121 = vmatprep.subr.bf16.mxu0 0
    %3122 = vmatpush1.bf16.msra.mxu0 %v3096
    %3123 = vmatprep.subr.bf16.mxu0 0
    %3124 = vmatpush2.bf16.msra.mxu0 0
    %3125 = vmatprep.subr.bf16.mxu0 0
    %3126 = vmatpush2.bf16.msra.mxu0 0
    %3127 = vmatprep.subr.bf16.mxu0 0
    %3128 = vmatpush2.bf16.msra.mxu0 0
    %3129 = vmatprep.subr.bf16.mxu0 0
    %3130 = vmatpush2.bf16.msra.mxu0 0
    %3131 = vmatprep.subr.bf16.mxu0 0
    %3132 = vmatpush2.bf16.msra.mxu0 0
    %3133 = vmatprep.subr.bf16.mxu0 0
    %3134 = vmatpush2.bf16.msra.mxu0 0
    %3135 = vmatprep.subr.bf16.mxu0 0
    %3136 = vmatpush2.bf16.msra.mxu0 0
    %3137 = vmatprep.subr.bf16.mxu0 0
    %3138 = vmatpush2.bf16.msra.mxu0 0
    %3139 = vmatprep.mubr.bf16.mxu0 0
    %3140 = vmatmul.mubr.bf16.gmra.mxu0 %v3105
    %v3141 = vpop.f32.mrf.mxu0
    %v3142 = vadd.f32 %v3079, %v3141
    %v3143 = vpop.f32.mrf.mxu0
    %v3144 = vpop.f32.mrf.mxu0
    %v3145 = vadd.f32 %v3079, %v3144
    %v3146 = vpop.f32.mrf.mxu0
    %3147 = vdwg.mxu0
    %v3148 = vadd.f32 %v3142, %v2437
    %v3149 = vadd.f32 %v3145, %v2438
    %v3150 = vsel %vm334, %v3148, 0.0
    %3151 = vadd.xlane.f32.xlu0 %v3150
    %v3152 = vpop.xlane.xlu0 %3151
    %v3153 = vsel %vm334, %v3149, 0.0
    %3154 = vadd.xlane.f32.xlu0 %v3153
    %v3155 = vpop.xlane.xlu0 %3154
    %v3156 = vmul.f32 %v3152, %v1281
    %v3157 = vmul.f32 %v3155, %v1281
    %v3158 = vsub.f32 %v3148, %v3156
    %v3159 = vsub.f32 %v3149, %v3157
    %v3160 = vmul.f32 %v3158, %v3158
    %v3161 = vmul.f32 %v3159, %v3159
    %v3162 = vsel %vm334, %v3160, 0.0
    %3163 = vadd.xlane.f32.xlu0 %v3162
    %v3164 = vpop.xlane.xlu0 %3163
    %v3165 = vsel %vm334, %v3161, 0.0
    %3166 = vadd.xlane.f32.xlu0 %v3165
    %v3167 = vpop.xlane.xlu0 %3166
    %v3168 = vmul.f32 %v3164, %v1281
    %v3169 = vmul.f32 %v3167, %v1281
    %v3170 = vadd.f32 %v3168, 1e-05
    %v3171 = vadd.f32 %v3169, 1e-05
    %v3172 = vrsqrt.pop %v3170
    %v3173 = vrsqrt.pop %v3171
    %v3174 = vmul.f32 %v3158, %v3172
    %v3175 = vmul.f32 %v3159, %v3173
    %v3176 = vlaneseq
    %v3177 = vshrl.u32 %v3176, 7
    %v3178 = vsub.s32 1, %v3177
    %v3179 = vrot.slane %v2474, %v3178
    %v3180 = vmul.f32 %v3174, %v3179
    %v3181 = vmul.f32 %v3175, %v3179
    %v3182 = vlaneseq
    %v3183 = vshrl.u32 %v3182, 7
    %v3184 = vsub.s32 2, %v3183
    %v3185 = vrot.slane %v2474, %v3184
    %v3186 = vadd.f32 %v3180, %v3185
    %v3187 = vadd.f32 %v3181, %v3185
    %v3188 = vpack.c.bf16 %v3187, %v3186
    %v3189 = vlaneseq
    %v3190 = vshrl.u32 %v3189, 7
    %v3191 = vsub.s32 3, %v3190
    %v3192 = vrot.slane %v2474, %v3191
    %v3201 = vunpack.c.l.b16 %v2457
    %v3202 = vunpack.c.l.b16 %v2458
    %v3203 = vunpack.c.l.b16 %v2459
    %v3204 = vunpack.c.l.b16 %v2460
    %v3205 = vunpack.c.l.b16 %v2461
    %v3206 = vunpack.c.l.b16 %v2462
    %v3207 = vunpack.c.l.b16 %v2463
    %v3208 = vunpack.c.l.b16 %v2464
    %v3209 = vpack.c.b16 %v3202, %v3201
    %v3210 = vpack.c.b16 %v3204, %v3203
    %v3211 = vpack.c.b16 %v3206, %v3205
    %v3212 = vpack.c.b16 %v3208, %v3207
    %v3218 = vsel %vm334, %v3188, 0
    %3220 = vmatprep.subr.bf16.mxu0 0
    %3221 = vmatpush1.bf16.msra.mxu0 0
    %3222 = vmatprep.subr.bf16.mxu0 0
    %3223 = vmatpush1.bf16.msra.mxu0 0
    %3224 = vmatprep.subr.bf16.mxu0 0
    %3225 = vmatpush1.bf16.msra.mxu0 0
    %3226 = vmatprep.subr.bf16.mxu0 0
    %3227 = vmatpush1.bf16.msra.mxu0 0
    %3228 = vmatprep.subr.bf16.mxu0 0
    %3229 = vmatpush1.bf16.msra.mxu0 %v3212
    %3230 = vmatprep.subr.bf16.mxu0 0
    %3231 = vmatpush1.bf16.msra.mxu0 %v3211
    %3232 = vmatprep.subr.bf16.mxu0 0
    %3233 = vmatpush1.bf16.msra.mxu0 %v3210
    %3234 = vmatprep.subr.bf16.mxu0 0
    %3235 = vmatpush1.bf16.msra.mxu0 %v3209
    %3236 = vmatprep.subr.bf16.mxu0 0
    %3237 = vmatpush2.bf16.msra.mxu0 0
    %3238 = vmatprep.subr.bf16.mxu0 0
    %3239 = vmatpush2.bf16.msra.mxu0 0
    %3240 = vmatprep.subr.bf16.mxu0 0
    %3241 = vmatpush2.bf16.msra.mxu0 0
    %3242 = vmatprep.subr.bf16.mxu0 0
    %3243 = vmatpush2.bf16.msra.mxu0 0
    %3244 = vmatprep.subr.bf16.mxu0 0
    %3245 = vmatpush2.bf16.msra.mxu0 0
    %3246 = vmatprep.subr.bf16.mxu0 0
    %3247 = vmatpush2.bf16.msra.mxu0 0
    %3248 = vmatprep.subr.bf16.mxu0 0
    %3249 = vmatpush2.bf16.msra.mxu0 0
    %3250 = vmatprep.subr.bf16.mxu0 0
    %3251 = vmatpush2.bf16.msra.mxu0 0
    %3252 = vmatprep.mubr.bf16.mxu0 0
    %3253 = vmatmul.mubr.bf16.gmra.mxu0 %v3218
    %v3254 = vpop.f32.mrf.mxu0
    %v3255 = vadd.f32 %v3192, %v3254
    %v3256 = vpop.f32.mrf.mxu0
    %v3257 = vpop.f32.mrf.mxu0
    %v3258 = vadd.f32 %v3192, %v3257
    %v3259 = vpop.f32.mrf.mxu0
    %3260 = vdwg.mxu0
    %v3261 = vmax.f32 %v3255, 0.0
    %v3262 = vmax.f32 %v3258, 0.0
    %v3263 = vpack.c.bf16 %v3262, %v3261
    %v3264 = vlaneseq
    %v3265 = vshrl.u32 %v3264, 7
    %v3266 = vsub.s32 4, %v3265
    %v3267 = vrot.slane %v2474, %v3266
    %v3276 = vunpack.c.l.b16 %v2465
    %v3277 = vunpack.c.l.b16 %v2466
    %v3278 = vunpack.c.l.b16 %v2467
    %v3279 = vunpack.c.l.b16 %v2468
    %v3280 = vunpack.c.l.b16 %v2469
    %v3281 = vunpack.c.l.b16 %v2470
    %v3282 = vunpack.c.l.b16 %v2471
    %v3283 = vunpack.c.l.b16 %v2472
    %v3284 = vpack.c.b16 %v3277, %v3276
    %v3285 = vpack.c.b16 %v3279, %v3278
    %v3286 = vpack.c.b16 %v3281, %v3280
    %v3287 = vpack.c.b16 %v3283, %v3282
    %v3293 = vsel %vm334, %v3263, 0
    %3295 = vmatprep.subr.bf16.mxu0 0
    %3296 = vmatpush1.bf16.msra.mxu0 0
    %3297 = vmatprep.subr.bf16.mxu0 0
    %3298 = vmatpush1.bf16.msra.mxu0 0
    %3299 = vmatprep.subr.bf16.mxu0 0
    %3300 = vmatpush1.bf16.msra.mxu0 0
    %3301 = vmatprep.subr.bf16.mxu0 0
    %3302 = vmatpush1.bf16.msra.mxu0 0
    %3303 = vmatprep.subr.bf16.mxu0 0
    %3304 = vmatpush1.bf16.msra.mxu0 %v3287
    %3305 = vmatprep.subr.bf16.mxu0 0
    %3306 = vmatpush1.bf16.msra.mxu0 %v3286
    %3307 = vmatprep.subr.bf16.mxu0 0
    %3308 = vmatpush1.bf16.msra.mxu0 %v3285
    %3309 = vmatprep.subr.bf16.mxu0 0
    %3310 = vmatpush1.bf16.msra.mxu0 %v3284
    %3311 = vmatprep.subr.bf16.mxu0 0
    %3312 = vmatpush2.bf16.msra.mxu0 0
    %3313 = vmatprep.subr.bf16.mxu0 0
    %3314 = vmatpush2.bf16.msra.mxu0 0
    %3315 = vmatprep.subr.bf16.mxu0 0
    %3316 = vmatpush2.bf16.msra.mxu0 0
    %3317 = vmatprep.subr.bf16.mxu0 0
    %3318 = vmatpush2.bf16.msra.mxu0 0
    %3319 = vmatprep.subr.bf16.mxu0 0
    %3320 = vmatpush2.bf16.msra.mxu0 0
    %3321 = vmatprep.subr.bf16.mxu0 0
    %3322 = vmatpush2.bf16.msra.mxu0 0
    %3323 = vmatprep.subr.bf16.mxu0 0
    %3324 = vmatpush2.bf16.msra.mxu0 0
    %3325 = vmatprep.subr.bf16.mxu0 0
    %3326 = vmatpush2.bf16.msra.mxu0 0
    %3327 = vmatprep.mubr.bf16.mxu0 0
    %3328 = vmatmul.mubr.bf16.gmra.mxu0 %v3293
    %v3329 = vpop.f32.mrf.mxu0
    %v3330 = vadd.f32 %v3267, %v3329
    %v3331 = vpop.f32.mrf.mxu0
    %v3332 = vpop.f32.mrf.mxu0
    %v3333 = vadd.f32 %v3267, %v3332
    %v3334 = vpop.f32.mrf.mxu0
    %3335 = vdwg.mxu0
    %v3336 = vadd.f32 %v3330, %v3186
    %v3337 = vadd.f32 %v3333, %v3187
    %v3338 = vsel %vm334, %v3336, 0.0
    %3339 = vadd.xlane.f32.xlu0 %v3338
    %v3340 = vpop.xlane.xlu0 %3339
    %v3341 = vsel %vm334, %v3337, 0.0
    %3342 = vadd.xlane.f32.xlu0 %v3341
    %v3343 = vpop.xlane.xlu0 %3342
    %v3344 = vmul.f32 %v3340, %v1281
    %v3345 = vmul.f32 %v3343, %v1281
    %v3346 = vsub.f32 %v3336, %v3344
    %v3347 = vsub.f32 %v3337, %v3345
    %v3348 = vmul.f32 %v3346, %v3346
    %v3349 = vmul.f32 %v3347, %v3347
    %v3350 = vsel %vm334, %v3348, 0.0
    %3351 = vadd.xlane.f32.xlu0 %v3350
    %v3352 = vpop.xlane.xlu0 %3351
    %v3353 = vsel %vm334, %v3349, 0.0
    %3354 = vadd.xlane.f32.xlu0 %v3353
    %v3355 = vpop.xlane.xlu0 %3354
    %v3356 = vmul.f32 %v3352, %v1281
    %v3357 = vmul.f32 %v3355, %v1281
    %v3358 = vadd.f32 %v3356, 1e-05
    %v3359 = vadd.f32 %v3357, 1e-05
    %v3360 = vrsqrt.pop %v3358
    %v3361 = vrsqrt.pop %v3359
    %v3362 = vmul.f32 %v3346, %v3360
    %v3363 = vmul.f32 %v3347, %v3361
    %v3364 = vlaneseq
    %v3365 = vshrl.u32 %v3364, 7
    %v3366 = vsub.s32 5, %v3365
    %v3367 = vrot.slane %v2474, %v3366
    %v3368 = vmul.f32 %v3362, %v3367
    %v3369 = vmul.f32 %v3363, %v3367
    %v3370 = vlaneseq
    %v3371 = vshrl.u32 %v3370, 7
    %v3372 = vsub.s32 6, %v3371
    %v3373 = vrot.slane %v2474, %v3372
    %v3374 = vadd.f32 %v3368, %v3373
    %v3375 = vadd.f32 %v3369, %v3373
    %s3376 = scalar_lea.vmem %s6, 192
    %v3377 = vld [vmem:[%s3376] sm:$0xff]
    %v3378 = vld [vmem:[%s3376 + $0x8] sm:$0xff]
    %v3379 = vld [vmem:[%s3376 + $0x10] sm:$0xff]
    %v3380 = vld [vmem:[%s3376 + $0x18] sm:$0xff]
    %v3381 = vld [vmem:[%s3376 + $0x20] sm:$0xff]
    %v3382 = vld [vmem:[%s3376 + $0x28] sm:$0xff]
    %v3383 = vld [vmem:[%s3376 + $0x30] sm:$0xff]
    %v3384 = vld [vmem:[%s3376 + $0x38] sm:$0xff]
    %s3385 = scalar_lea.vmem %s7, 288
    %v3386 = vld [vmem:[%s3385] sm:$0xf]
    %v3387 = vld [vmem:[%s3385 + $0x4] sm:$0xf]
    %v3388 = vld [vmem:[%s3385 + $0x8] sm:$0xf]
    %v3389 = vld [vmem:[%s3385 + $0xc] sm:$0xf]
    %v3390 = vld [vmem:[%s3385 + $0x10] sm:$0xf]
    %v3391 = vld [vmem:[%s3385 + $0x14] sm:$0xf]
    %v3392 = vld [vmem:[%s3385 + $0x18] sm:$0xf]
    %v3393 = vld [vmem:[%s3385 + $0x1c] sm:$0xf]
    %v3394 = vld [vmem:[%s3385 + $0x20] sm:$0xf]
    %v3395 = vld [vmem:[%s3385 + $0x24] sm:$0xf]
    %v3396 = vld [vmem:[%s3385 + $0x28] sm:$0xf]
    %v3397 = vld [vmem:[%s3385 + $0x2c] sm:$0xf]
    %v3398 = vld [vmem:[%s3385 + $0x30] sm:$0xf]
    %v3399 = vld [vmem:[%s3385 + $0x34] sm:$0xf]
    %v3400 = vld [vmem:[%s3385 + $0x38] sm:$0xf]
    %v3401 = vld [vmem:[%s3385 + $0x3c] sm:$0xf]
    %v3402 = vld [vmem:[%s3385 + $0x40] sm:$0xf]
    %v3403 = vld [vmem:[%s3385 + $0x44] sm:$0xf]
    %v3404 = vld [vmem:[%s3385 + $0x48] sm:$0xf]
    %v3405 = vld [vmem:[%s3385 + $0x4c] sm:$0xf]
    %v3406 = vld [vmem:[%s3385 + $0x50] sm:$0xf]
    %v3407 = vld [vmem:[%s3385 + $0x54] sm:$0xf]
    %v3408 = vld [vmem:[%s3385 + $0x58] sm:$0xf]
    %v3409 = vld [vmem:[%s3385 + $0x5c] sm:$0xf]
    %s3410 = scalar_lea.vmem [#allocation10], 24
    %v3411 = vld [vmem:[%s3410] sm:$0xff]
    %v3412 = vpack.c.bf16 %v3375, %v3374
    %v3421 = vunpack.c.l.b16 %v3377
    %v3422 = vunpack.c.h.b16 %v3377
    %v3423 = vunpack.c.l.b16 %v3378
    %v3424 = vunpack.c.h.b16 %v3378
    %v3425 = vunpack.c.l.b16 %v3379
    %v3426 = vunpack.c.h.b16 %v3379
    %v3427 = vunpack.c.l.b16 %v3380
    %v3428 = vunpack.c.h.b16 %v3380
    %v3429 = vunpack.c.l.b16 %v3381
    %v3430 = vunpack.c.h.b16 %v3381
    %v3431 = vunpack.c.l.b16 %v3382
    %v3432 = vunpack.c.h.b16 %v3382
    %v3433 = vunpack.c.l.b16 %v3383
    %v3434 = vunpack.c.h.b16 %v3383
    %v3435 = vunpack.c.l.b16 %v3384
    %v3436 = vunpack.c.h.b16 %v3384
    %v3437 = vpack.c.b16 %v3423, %v3421
    %v3438 = vpack.c.b16 %v3424, %v3422
    %v3439 = vpack.c.b16 %v3427, %v3425
    %v3440 = vpack.c.b16 %v3428, %v3426
    %v3441 = vpack.c.b16 %v3431, %v3429
    %v3442 = vpack.c.b16 %v3432, %v3430
    %v3443 = vpack.c.b16 %v3435, %v3433
    %v3444 = vpack.c.b16 %v3436, %v3434
    %v3454 = vsel %vm334, %v3412, 0
    %3456 = vmatprep.subr.bf16.mxu0 0
    %3457 = vmatpush1.bf16.msra.mxu0 0
    %3458 = vmatprep.subr.bf16.mxu0 0
    %3459 = vmatpush1.bf16.msra.mxu0 0
    %3460 = vmatprep.subr.bf16.mxu0 0
    %3461 = vmatpush1.bf16.msra.mxu0 0
    %3462 = vmatprep.subr.bf16.mxu0 0
    %3463 = vmatpush1.bf16.msra.mxu0 0
    %3464 = vmatprep.subr.bf16.mxu0 %v3444
    %3465 = vmatpush1.bf16.msra.mxu0 %v3443
    %3466 = vmatprep.subr.bf16.mxu0 %v3442
    %3467 = vmatpush1.bf16.msra.mxu0 %v3441
    %3468 = vmatprep.subr.bf16.mxu0 %v3440
    %3469 = vmatpush1.bf16.msra.mxu0 %v3439
    %3470 = vmatprep.subr.bf16.mxu0 %v3438
    %3471 = vmatpush1.bf16.msra.mxu0 %v3437
    %3472 = vmatprep.subr.bf16.mxu0 0
    %3473 = vmatpush2.bf16.msra.mxu0 0
    %3474 = vmatprep.subr.bf16.mxu0 0
    %3475 = vmatpush2.bf16.msra.mxu0 0
    %3476 = vmatprep.subr.bf16.mxu0 0
    %3477 = vmatpush2.bf16.msra.mxu0 0
    %3478 = vmatprep.subr.bf16.mxu0 0
    %3479 = vmatpush2.bf16.msra.mxu0 0
    %3480 = vmatprep.subr.bf16.mxu0 0
    %3481 = vmatpush2.bf16.msra.mxu0 0
    %3482 = vmatprep.subr.bf16.mxu0 0
    %3483 = vmatpush2.bf16.msra.mxu0 0
    %3484 = vmatprep.subr.bf16.mxu0 0
    %3485 = vmatpush2.bf16.msra.mxu0 0
    %3486 = vmatprep.subr.bf16.mxu0 0
    %3487 = vmatpush2.bf16.msra.mxu0 0
    %3488 = vmatprep.mubr.bf16.mxu0 0
    %3489 = vmatmul.mubr.bf16.gmra.mxu0 %v3454
    %v3490 = vpop.f32.mrf.mxu0
    %v3491 = vadd.f32 0.0, %v3490
    %v3492 = vpop.f32.mrf.mxu0
    %v3493 = vadd.f32 0.0, %v3492
    %v3494 = vpop.f32.mrf.mxu0
    %v3495 = vadd.f32 0.0, %v3494
    %v3496 = vpop.f32.mrf.mxu0
    %v3497 = vadd.f32 0.0, %v3496
    %3498 = vdwg.mxu0
    %v3499 = vpack.c.bf16 %v3495, %v3491
    %v3500 = vpack.c.bf16 %v3497, %v3493
    %3502 = vrot.lane.b32.xlu0 %v3499, 64
    %v3503 = vpop.permute.xlu0 %3502
    %v3505 = vsel %vm689, %v3499, 0
    %v3508 = vsel %vm689, %v3503, 0
    %3510 = vmatprep.subr.bf16.mxu0 0
    %3511 = vmatpush1.bf16.xpose.msra.mxu0 0
    %3512 = vmatprep.subr.bf16.mxu0 0
    %3513 = vmatpush1.bf16.xpose.msra.mxu0 0
    %3514 = vmatprep.subr.bf16.mxu0 0
    %3515 = vmatpush1.bf16.xpose.msra.mxu0 0
    %3516 = vmatprep.subr.bf16.mxu0 0
    %3517 = vmatpush1.bf16.xpose.msra.mxu0 0
    %3518 = vmatprep.subr.bf16.mxu0 0
    %3519 = vmatpush1.bf16.xpose.msra.mxu0 0
    %3520 = vmatprep.subr.bf16.mxu0 0
    %3521 = vmatpush1.bf16.xpose.msra.mxu0 0
    %3522 = vmatprep.subr.bf16.mxu0 0
    %3523 = vmatpush1.bf16.xpose.msra.mxu0 0
    %3524 = vmatprep.subr.bf16.mxu0 0
    %3525 = vmatpush1.bf16.xpose.msra.mxu0 %v3508
    %3526 = vmatprep.subr.bf16.mxu0 0
    %3527 = vmatpush2.bf16.xpose.msra.mxu0 0
    %3528 = vmatprep.subr.bf16.mxu0 0
    %3529 = vmatpush2.bf16.xpose.msra.mxu0 0
    %3530 = vmatprep.subr.bf16.mxu0 0
    %3531 = vmatpush2.bf16.xpose.msra.mxu0 0
    %3532 = vmatprep.subr.bf16.mxu0 0
    %3533 = vmatpush2.bf16.xpose.msra.mxu0 0
    %3534 = vmatprep.subr.bf16.mxu0 0
    %3535 = vmatpush2.bf16.xpose.msra.mxu0 0
    %3536 = vmatprep.subr.bf16.mxu0 0
    %3537 = vmatpush2.bf16.xpose.msra.mxu0 0
    %3538 = vmatprep.subr.bf16.mxu0 0
    %3539 = vmatpush2.bf16.xpose.msra.mxu0 0
    %3540 = vmatprep.subr.bf16.mxu0 0
    %3541 = vmatpush2.bf16.xpose.msra.mxu0 0
    %3542 = vmatprep.mubr.bf16.mxu0 0
    %3543 = vmatmul.mubr.bf16.gmra.mxu0 %v3505
    %v3544 = vpop.f32.mrf.mxu0
    %v3545 = vadd.f32 %v260, %v3544
    %v3546 = vpop.f32.mrf.mxu0
    %v3547 = vpop.f32.mrf.mxu0
    %v3548 = vadd.f32 %v261, %v3547
    %v3549 = vpop.f32.mrf.mxu0
    %3550 = vdwg.mxu0
    %v3551 = vsel %vm689, %v3545, -inf
    %3552 = vmax.xlane.f32.xlu0 %v3551
    %v3553 = vpop.xlane.xlu0 %3552
    %v3554 = vsel %vm689, %v3548, -inf
    %3555 = vmax.xlane.f32.xlu0 %v3554
    %v3556 = vpop.xlane.xlu0 %3555
    %v3557 = vsub.f32 %v3545, %v3553
    %v3558 = vsub.f32 %v3548, %v3556
    %v3559 = vmul.f32 %v3557, 1.442695
    %v3560 = vpow.pop %v3559
    %v3561 = vmul.f32 %v3558, 1.442695
    %v3562 = vpow.pop %v3561
    %v3563 = vsel %vm689, %v3560, 0.0
    %3564 = vadd.xlane.f32.xlu0 %v3563
    %v3565 = vpop.xlane.xlu0 %3564
    %v3566 = vsel %vm689, %v3562, 0.0
    %3567 = vadd.xlane.f32.xlu0 %v3566
    %v3568 = vpop.xlane.xlu0 %3567
    %v3569 = vrcp.pop %v3565
    %v3570 = vrcp.pop %v3568
    %v3571 = vmul.f32 %v3560, %v3569
    %v3572 = vmul.f32 %v3562, %v3570
    %v3573 = vpack.c.bf16 %v3572, %v3571
    %v3575 = vsel %vm689, %v3573, 0
    %3577 = vmatprep.subr.bf16.mxu0 0
    %3578 = vmatpush1.bf16.msra.mxu0 0
    %3579 = vmatprep.subr.bf16.mxu0 0
    %3580 = vmatpush1.bf16.msra.mxu0 0
    %3581 = vmatprep.subr.bf16.mxu0 0
    %3582 = vmatpush1.bf16.msra.mxu0 0
    %3583 = vmatprep.subr.bf16.mxu0 0
    %3584 = vmatpush1.bf16.msra.mxu0 0
    %3585 = vmatprep.subr.bf16.mxu0 0
    %3586 = vmatpush1.bf16.msra.mxu0 0
    %3587 = vmatprep.subr.bf16.mxu0 0
    %3588 = vmatpush1.bf16.msra.mxu0 0
    %3589 = vmatprep.subr.bf16.mxu0 0
    %3590 = vmatpush1.bf16.msra.mxu0 0
    %3591 = vmatprep.subr.bf16.mxu0 0
    %3592 = vmatpush1.bf16.msra.mxu0 %v3500
    %3593 = vmatprep.subr.bf16.mxu0 0
    %3594 = vmatpush2.bf16.msra.mxu0 0
    %3595 = vmatprep.subr.bf16.mxu0 0
    %3596 = vmatpush2.bf16.msra.mxu0 0
    %3597 = vmatprep.subr.bf16.mxu0 0
    %3598 = vmatpush2.bf16.msra.mxu0 0
    %3599 = vmatprep.subr.bf16.mxu0 0
    %3600 = vmatpush2.bf16.msra.mxu0 0
    %3601 = vmatprep.subr.bf16.mxu0 0
    %3602 = vmatpush2.bf16.msra.mxu0 0
    %3603 = vmatprep.subr.bf16.mxu0 0
    %3604 = vmatpush2.bf16.msra.mxu0 0
    %3605 = vmatprep.subr.bf16.mxu0 0
    %3606 = vmatpush2.bf16.msra.mxu0 0
    %3607 = vmatprep.subr.bf16.mxu0 0
    %3608 = vmatpush2.bf16.msra.mxu0 0
    %3609 = vmatprep.mubr.bf16.mxu0 0
    %3610 = vmatmul.mubr.bf16.gmra.mxu0 %v3575
    %v3611 = vpop.f32.mrf.mxu0
    %v3612 = vadd.f32 0.0, %v3611
    %v3613 = vpop.f32.mrf.mxu0
    %v3614 = vpop.f32.mrf.mxu0
    %v3615 = vadd.f32 0.0, %v3614
    %v3616 = vpop.f32.mrf.mxu0
    %3617 = vdwg.mxu0
    %3618 = vrot.lane.b32.xlu0 %v3499, 112
    %v3619 = vpop.permute.xlu0 %3618
    %3620 = vrot.lane.b32.xlu0 %v3499, 48
    %v3621 = vpop.permute.xlu0 %3620
    %v3623 = vsel %vm689, %v3619, 0
    %v3626 = vsel %vm689, %v3621, 0
    %3628 = vmatprep.subr.bf16.mxu0 0
    %3629 = vmatpush1.bf16.xpose.msra.mxu0 0
    %3630 = vmatprep.subr.bf16.mxu0 0
    %3631 = vmatpush1.bf16.xpose.msra.mxu0 0
    %3632 = vmatprep.subr.bf16.mxu0 0
    %3633 = vmatpush1.bf16.xpose.msra.mxu0 0
    %3634 = vmatprep.subr.bf16.mxu0 0
    %3635 = vmatpush1.bf16.xpose.msra.mxu0 0
    %3636 = vmatprep.subr.bf16.mxu0 0
    %3637 = vmatpush1.bf16.xpose.msra.mxu0 0
    %3638 = vmatprep.subr.bf16.mxu0 0
    %3639 = vmatpush1.bf16.xpose.msra.mxu0 0
    %3640 = vmatprep.subr.bf16.mxu0 0
    %3641 = vmatpush1.bf16.xpose.msra.mxu0 0
    %3642 = vmatprep.subr.bf16.mxu0 0
    %3643 = vmatpush1.bf16.xpose.msra.mxu0 %v3626
    %3644 = vmatprep.subr.bf16.mxu0 0
    %3645 = vmatpush2.bf16.xpose.msra.mxu0 0
    %3646 = vmatprep.subr.bf16.mxu0 0
    %3647 = vmatpush2.bf16.xpose.msra.mxu0 0
    %3648 = vmatprep.subr.bf16.mxu0 0
    %3649 = vmatpush2.bf16.xpose.msra.mxu0 0
    %3650 = vmatprep.subr.bf16.mxu0 0
    %3651 = vmatpush2.bf16.xpose.msra.mxu0 0
    %3652 = vmatprep.subr.bf16.mxu0 0
    %3653 = vmatpush2.bf16.xpose.msra.mxu0 0
    %3654 = vmatprep.subr.bf16.mxu0 0
    %3655 = vmatpush2.bf16.xpose.msra.mxu0 0
    %3656 = vmatprep.subr.bf16.mxu0 0
    %3657 = vmatpush2.bf16.xpose.msra.mxu0 0
    %3658 = vmatprep.subr.bf16.mxu0 0
    %3659 = vmatpush2.bf16.xpose.msra.mxu0 0
    %3660 = vmatprep.mubr.bf16.mxu0 0
    %3661 = vmatmul.mubr.bf16.gmra.mxu0 %v3623
    %v3662 = vpop.f32.mrf.mxu0
    %v3663 = vadd.f32 %v260, %v3662
    %v3664 = vpop.f32.mrf.mxu0
    %v3665 = vpop.f32.mrf.mxu0
    %v3666 = vadd.f32 %v261, %v3665
    %v3667 = vpop.f32.mrf.mxu0
    %3668 = vdwg.mxu0
    %v3669 = vsel %vm689, %v3663, -inf
    %3670 = vmax.xlane.f32.xlu0 %v3669
    %v3671 = vpop.xlane.xlu0 %3670
    %v3672 = vsel %vm689, %v3666, -inf
    %3673 = vmax.xlane.f32.xlu0 %v3672
    %v3674 = vpop.xlane.xlu0 %3673
    %v3675 = vsub.f32 %v3663, %v3671
    %v3676 = vsub.f32 %v3666, %v3674
    %v3677 = vmul.f32 %v3675, 1.442695
    %v3678 = vpow.pop %v3677
    %v3679 = vmul.f32 %v3676, 1.442695
    %v3680 = vpow.pop %v3679
    %v3681 = vsel %vm689, %v3678, 0.0
    %3682 = vadd.xlane.f32.xlu0 %v3681
    %v3683 = vpop.xlane.xlu0 %3682
    %v3684 = vsel %vm689, %v3680, 0.0
    %3685 = vadd.xlane.f32.xlu0 %v3684
    %v3686 = vpop.xlane.xlu0 %3685
    %v3687 = vrcp.pop %v3683
    %v3688 = vrcp.pop %v3686
    %v3689 = vmul.f32 %v3678, %v3687
    %v3690 = vmul.f32 %v3680, %v3688
    %v3691 = vpack.c.bf16 %v3690, %v3689
    %3693 = vrot.lane.b32.xlu0 %v3500, 112
    %v3694 = vpop.permute.xlu0 %3693
    %v3697 = vsel %vm689, %v3691, 0
    %3699 = vmatprep.subr.bf16.mxu0 0
    %3700 = vmatpush1.bf16.msra.mxu0 0
    %3701 = vmatprep.subr.bf16.mxu0 0
    %3702 = vmatpush1.bf16.msra.mxu0 0
    %3703 = vmatprep.subr.bf16.mxu0 0
    %3704 = vmatpush1.bf16.msra.mxu0 0
    %3705 = vmatprep.subr.bf16.mxu0 0
    %3706 = vmatpush1.bf16.msra.mxu0 0
    %3707 = vmatprep.subr.bf16.mxu0 0
    %3708 = vmatpush1.bf16.msra.mxu0 0
    %3709 = vmatprep.subr.bf16.mxu0 0
    %3710 = vmatpush1.bf16.msra.mxu0 0
    %3711 = vmatprep.subr.bf16.mxu0 0
    %3712 = vmatpush1.bf16.msra.mxu0 0
    %3713 = vmatprep.subr.bf16.mxu0 0
    %3714 = vmatpush1.bf16.msra.mxu0 %v3694
    %3715 = vmatprep.subr.bf16.mxu0 0
    %3716 = vmatpush2.bf16.msra.mxu0 0
    %3717 = vmatprep.subr.bf16.mxu0 0
    %3718 = vmatpush2.bf16.msra.mxu0 0
    %3719 = vmatprep.subr.bf16.mxu0 0
    %3720 = vmatpush2.bf16.msra.mxu0 0
    %3721 = vmatprep.subr.bf16.mxu0 0
    %3722 = vmatpush2.bf16.msra.mxu0 0
    %3723 = vmatprep.subr.bf16.mxu0 0
    %3724 = vmatpush2.bf16.msra.mxu0 0
    %3725 = vmatprep.subr.bf16.mxu0 0
    %3726 = vmatpush2.bf16.msra.mxu0 0
    %3727 = vmatprep.subr.bf16.mxu0 0
    %3728 = vmatpush2.bf16.msra.mxu0 0
    %3729 = vmatprep.subr.bf16.mxu0 0
    %3730 = vmatpush2.bf16.msra.mxu0 0
    %3731 = vmatprep.mubr.bf16.mxu0 0
    %3732 = vmatmul.mubr.bf16.gmra.mxu0 %v3697
    %v3733 = vpop.f32.mrf.mxu0
    %v3734 = vadd.f32 0.0, %v3733
    %v3735 = vpop.f32.mrf.mxu0
    %v3736 = vpop.f32.mrf.mxu0
    %v3737 = vadd.f32 0.0, %v3736
    %v3738 = vpop.f32.mrf.mxu0
    %3739 = vdwg.mxu0
    %3740 = vrot.lane.b32.xlu0 %v3499, 96
    %v3741 = vpop.permute.xlu0 %3740
    %3742 = vrot.lane.b32.xlu0 %v3499, 32
    %v3743 = vpop.permute.xlu0 %3742
    %v3745 = vsel %vm689, %v3741, 0
    %v3748 = vsel %vm689, %v3743, 0
    %3750 = vmatprep.subr.bf16.mxu0 0
    %3751 = vmatpush1.bf16.xpose.msra.mxu0 0
    %3752 = vmatprep.subr.bf16.mxu0 0
    %3753 = vmatpush1.bf16.xpose.msra.mxu0 0
    %3754 = vmatprep.subr.bf16.mxu0 0
    %3755 = vmatpush1.bf16.xpose.msra.mxu0 0
    %3756 = vmatprep.subr.bf16.mxu0 0
    %3757 = vmatpush1.bf16.xpose.msra.mxu0 0
    %3758 = vmatprep.subr.bf16.mxu0 0
    %3759 = vmatpush1.bf16.xpose.msra.mxu0 0
    %3760 = vmatprep.subr.bf16.mxu0 0
    %3761 = vmatpush1.bf16.xpose.msra.mxu0 0
    %3762 = vmatprep.subr.bf16.mxu0 0
    %3763 = vmatpush1.bf16.xpose.msra.mxu0 0
    %3764 = vmatprep.subr.bf16.mxu0 0
    %3765 = vmatpush1.bf16.xpose.msra.mxu0 %v3748
    %3766 = vmatprep.subr.bf16.mxu0 0
    %3767 = vmatpush2.bf16.xpose.msra.mxu0 0
    %3768 = vmatprep.subr.bf16.mxu0 0
    %3769 = vmatpush2.bf16.xpose.msra.mxu0 0
    %3770 = vmatprep.subr.bf16.mxu0 0
    %3771 = vmatpush2.bf16.xpose.msra.mxu0 0
    %3772 = vmatprep.subr.bf16.mxu0 0
    %3773 = vmatpush2.bf16.xpose.msra.mxu0 0
    %3774 = vmatprep.subr.bf16.mxu0 0
    %3775 = vmatpush2.bf16.xpose.msra.mxu0 0
    %3776 = vmatprep.subr.bf16.mxu0 0
    %3777 = vmatpush2.bf16.xpose.msra.mxu0 0
    %3778 = vmatprep.subr.bf16.mxu0 0
    %3779 = vmatpush2.bf16.xpose.msra.mxu0 0
    %3780 = vmatprep.subr.bf16.mxu0 0
    %3781 = vmatpush2.bf16.xpose.msra.mxu0 0
    %3782 = vmatprep.mubr.bf16.mxu0 0
    %3783 = vmatmul.mubr.bf16.gmra.mxu0 %v3745
    %v3784 = vpop.f32.mrf.mxu0
    %v3785 = vadd.f32 %v260, %v3784
    %v3786 = vpop.f32.mrf.mxu0
    %v3787 = vpop.f32.mrf.mxu0
    %v3788 = vadd.f32 %v261, %v3787
    %v3789 = vpop.f32.mrf.mxu0
    %3790 = vdwg.mxu0
    %v3791 = vsel %vm689, %v3785, -inf
    %3792 = vmax.xlane.f32.xlu0 %v3791
    %v3793 = vpop.xlane.xlu0 %3792
    %v3794 = vsel %vm689, %v3788, -inf
    %3795 = vmax.xlane.f32.xlu0 %v3794
    %v3796 = vpop.xlane.xlu0 %3795
    %v3797 = vsub.f32 %v3785, %v3793
    %v3798 = vsub.f32 %v3788, %v3796
    %v3799 = vmul.f32 %v3797, 1.442695
    %v3800 = vpow.pop %v3799
    %v3801 = vmul.f32 %v3798, 1.442695
    %v3802 = vpow.pop %v3801
    %v3803 = vsel %vm689, %v3800, 0.0
    %3804 = vadd.xlane.f32.xlu0 %v3803
    %v3805 = vpop.xlane.xlu0 %3804
    %v3806 = vsel %vm689, %v3802, 0.0
    %3807 = vadd.xlane.f32.xlu0 %v3806
    %v3808 = vpop.xlane.xlu0 %3807
    %v3809 = vrcp.pop %v3805
    %v3810 = vrcp.pop %v3808
    %v3811 = vmul.f32 %v3800, %v3809
    %v3812 = vmul.f32 %v3802, %v3810
    %v3813 = vpack.c.bf16 %v3812, %v3811
    %3814 = vrot.lane.b32.xlu0 %v3500, 96
    %v3815 = vpop.permute.xlu0 %3814
    %v3818 = vsel %vm689, %v3813, 0
    %3820 = vmatprep.subr.bf16.mxu0 0
    %3821 = vmatpush1.bf16.msra.mxu0 0
    %3822 = vmatprep.subr.bf16.mxu0 0
    %3823 = vmatpush1.bf16.msra.mxu0 0
    %3824 = vmatprep.subr.bf16.mxu0 0
    %3825 = vmatpush1.bf16.msra.mxu0 0
    %3826 = vmatprep.subr.bf16.mxu0 0
    %3827 = vmatpush1.bf16.msra.mxu0 0
    %3828 = vmatprep.subr.bf16.mxu0 0
    %3829 = vmatpush1.bf16.msra.mxu0 0
    %3830 = vmatprep.subr.bf16.mxu0 0
    %3831 = vmatpush1.bf16.msra.mxu0 0
    %3832 = vmatprep.subr.bf16.mxu0 0
    %3833 = vmatpush1.bf16.msra.mxu0 0
    %3834 = vmatprep.subr.bf16.mxu0 0
    %3835 = vmatpush1.bf16.msra.mxu0 %v3815
    %3836 = vmatprep.subr.bf16.mxu0 0
    %3837 = vmatpush2.bf16.msra.mxu0 0
    %3838 = vmatprep.subr.bf16.mxu0 0
    %3839 = vmatpush2.bf16.msra.mxu0 0
    %3840 = vmatprep.subr.bf16.mxu0 0
    %3841 = vmatpush2.bf16.msra.mxu0 0
    %3842 = vmatprep.subr.bf16.mxu0 0
    %3843 = vmatpush2.bf16.msra.mxu0 0
    %3844 = vmatprep.subr.bf16.mxu0 0
    %3845 = vmatpush2.bf16.msra.mxu0 0
    %3846 = vmatprep.subr.bf16.mxu0 0
    %3847 = vmatpush2.bf16.msra.mxu0 0
    %3848 = vmatprep.subr.bf16.mxu0 0
    %3849 = vmatpush2.bf16.msra.mxu0 0
    %3850 = vmatprep.subr.bf16.mxu0 0
    %3851 = vmatpush2.bf16.msra.mxu0 0
    %3852 = vmatprep.mubr.bf16.mxu0 0
    %3853 = vmatmul.mubr.bf16.gmra.mxu0 %v3818
    %v3854 = vpop.f32.mrf.mxu0
    %v3855 = vadd.f32 0.0, %v3854
    %v3856 = vpop.f32.mrf.mxu0
    %v3857 = vpop.f32.mrf.mxu0
    %v3858 = vadd.f32 0.0, %v3857
    %v3859 = vpop.f32.mrf.mxu0
    %3860 = vdwg.mxu0
    %3861 = vrot.lane.b32.xlu0 %v3499, 80
    %v3862 = vpop.permute.xlu0 %3861
    %3863 = vrot.lane.b32.xlu0 %v3499, 16
    %v3864 = vpop.permute.xlu0 %3863
    %v3866 = vsel %vm689, %v3862, 0
    %v3869 = vsel %vm689, %v3864, 0
    %3871 = vmatprep.subr.bf16.mxu0 0
    %3872 = vmatpush1.bf16.xpose.msra.mxu0 0
    %3873 = vmatprep.subr.bf16.mxu0 0
    %3874 = vmatpush1.bf16.xpose.msra.mxu0 0
    %3875 = vmatprep.subr.bf16.mxu0 0
    %3876 = vmatpush1.bf16.xpose.msra.mxu0 0
    %3877 = vmatprep.subr.bf16.mxu0 0
    %3878 = vmatpush1.bf16.xpose.msra.mxu0 0
    %3879 = vmatprep.subr.bf16.mxu0 0
    %3880 = vmatpush1.bf16.xpose.msra.mxu0 0
    %3881 = vmatprep.subr.bf16.mxu0 0
    %3882 = vmatpush1.bf16.xpose.msra.mxu0 0
    %3883 = vmatprep.subr.bf16.mxu0 0
    %3884 = vmatpush1.bf16.xpose.msra.mxu0 0
    %3885 = vmatprep.subr.bf16.mxu0 0
    %3886 = vmatpush1.bf16.xpose.msra.mxu0 %v3869
    %3887 = vmatprep.subr.bf16.mxu0 0
    %3888 = vmatpush2.bf16.xpose.msra.mxu0 0
    %3889 = vmatprep.subr.bf16.mxu0 0
    %3890 = vmatpush2.bf16.xpose.msra.mxu0 0
    %3891 = vmatprep.subr.bf16.mxu0 0
    %3892 = vmatpush2.bf16.xpose.msra.mxu0 0
    %3893 = vmatprep.subr.bf16.mxu0 0
    %3894 = vmatpush2.bf16.xpose.msra.mxu0 0
    %3895 = vmatprep.subr.bf16.mxu0 0
    %3896 = vmatpush2.bf16.xpose.msra.mxu0 0
    %3897 = vmatprep.subr.bf16.mxu0 0
    %3898 = vmatpush2.bf16.xpose.msra.mxu0 0
    %3899 = vmatprep.subr.bf16.mxu0 0
    %3900 = vmatpush2.bf16.xpose.msra.mxu0 0
    %3901 = vmatprep.subr.bf16.mxu0 0
    %3902 = vmatpush2.bf16.xpose.msra.mxu0 0
    %3903 = vmatprep.mubr.bf16.mxu0 0
    %3904 = vmatmul.mubr.bf16.gmra.mxu0 %v3866
    %v3905 = vpop.f32.mrf.mxu0
    %v3906 = vadd.f32 %v260, %v3905
    %v3907 = vpop.f32.mrf.mxu0
    %v3908 = vpop.f32.mrf.mxu0
    %v3909 = vadd.f32 %v261, %v3908
    %v3910 = vpop.f32.mrf.mxu0
    %3911 = vdwg.mxu0
    %v3912 = vsel %vm689, %v3906, -inf
    %3913 = vmax.xlane.f32.xlu0 %v3912
    %v3914 = vpop.xlane.xlu0 %3913
    %v3915 = vsel %vm689, %v3909, -inf
    %3916 = vmax.xlane.f32.xlu0 %v3915
    %v3917 = vpop.xlane.xlu0 %3916
    %v3918 = vsub.f32 %v3906, %v3914
    %v3919 = vsub.f32 %v3909, %v3917
    %v3920 = vmul.f32 %v3918, 1.442695
    %v3921 = vpow.pop %v3920
    %v3922 = vmul.f32 %v3919, 1.442695
    %v3923 = vpow.pop %v3922
    %v3924 = vsel %vm689, %v3921, 0.0
    %3925 = vadd.xlane.f32.xlu0 %v3924
    %v3926 = vpop.xlane.xlu0 %3925
    %v3927 = vsel %vm689, %v3923, 0.0
    %3928 = vadd.xlane.f32.xlu0 %v3927
    %v3929 = vpop.xlane.xlu0 %3928
    %v3930 = vrcp.pop %v3926
    %v3931 = vrcp.pop %v3929
    %v3932 = vmul.f32 %v3921, %v3930
    %v3933 = vmul.f32 %v3923, %v3931
    %v3934 = vpack.c.bf16 %v3933, %v3932
    %3935 = vrot.lane.b32.xlu0 %v3500, 80
    %v3936 = vpop.permute.xlu0 %3935
    %v3939 = vsel %vm689, %v3934, 0
    %3941 = vmatprep.subr.bf16.mxu0 0
    %3942 = vmatpush1.bf16.msra.mxu0 0
    %3943 = vmatprep.subr.bf16.mxu0 0
    %3944 = vmatpush1.bf16.msra.mxu0 0
    %3945 = vmatprep.subr.bf16.mxu0 0
    %3946 = vmatpush1.bf16.msra.mxu0 0
    %3947 = vmatprep.subr.bf16.mxu0 0
    %3948 = vmatpush1.bf16.msra.mxu0 0
    %3949 = vmatprep.subr.bf16.mxu0 0
    %3950 = vmatpush1.bf16.msra.mxu0 0
    %3951 = vmatprep.subr.bf16.mxu0 0
    %3952 = vmatpush1.bf16.msra.mxu0 0
    %3953 = vmatprep.subr.bf16.mxu0 0
    %3954 = vmatpush1.bf16.msra.mxu0 0
    %3955 = vmatprep.subr.bf16.mxu0 0
    %3956 = vmatpush1.bf16.msra.mxu0 %v3936
    %3957 = vmatprep.subr.bf16.mxu0 0
    %3958 = vmatpush2.bf16.msra.mxu0 0
    %3959 = vmatprep.subr.bf16.mxu0 0
    %3960 = vmatpush2.bf16.msra.mxu0 0
    %3961 = vmatprep.subr.bf16.mxu0 0
    %3962 = vmatpush2.bf16.msra.mxu0 0
    %3963 = vmatprep.subr.bf16.mxu0 0
    %3964 = vmatpush2.bf16.msra.mxu0 0
    %3965 = vmatprep.subr.bf16.mxu0 0
    %3966 = vmatpush2.bf16.msra.mxu0 0
    %3967 = vmatprep.subr.bf16.mxu0 0
    %3968 = vmatpush2.bf16.msra.mxu0 0
    %3969 = vmatprep.subr.bf16.mxu0 0
    %3970 = vmatpush2.bf16.msra.mxu0 0
    %3971 = vmatprep.subr.bf16.mxu0 0
    %3972 = vmatpush2.bf16.msra.mxu0 0
    %3973 = vmatprep.mubr.bf16.mxu0 0
    %3974 = vmatmul.mubr.bf16.gmra.mxu0 %v3939
    %v3975 = vpop.f32.mrf.mxu0
    %v3976 = vadd.f32 0.0, %v3975
    %v3977 = vpop.f32.mrf.mxu0
    %v3978 = vpop.f32.mrf.mxu0
    %v3979 = vadd.f32 0.0, %v3978
    %v3980 = vpop.f32.mrf.mxu0
    %3981 = vdwg.mxu0
    %3984 = vrot.lane.b32.xlu0 %v3734, 16
    %v3985 = vpop.permute.xlu0 %3984
    %3986 = vrot.lane.b32.xlu0 %v3737, 16
    %v3987 = vpop.permute.xlu0 %3986
    %3992 = vrot.lane.b32.xlu0 %v3855, 32
    %v3993 = vpop.permute.xlu0 %3992
    %3994 = vrot.lane.b32.xlu0 %v3858, 32
    %v3995 = vpop.permute.xlu0 %3994
    %4000 = vrot.lane.b32.xlu0 %v3976, 48
    %v4001 = vpop.permute.xlu0 %4000
    %4002 = vrot.lane.b32.xlu0 %v3979, 48
    %v4003 = vpop.permute.xlu0 %4002
    %v4006 = vsel %vm689, %v3612, %v3985
    %v4007 = vsel %vm689, %v3615, %v3987
    %v4008 = vsel %vm1194, %v4006, %v3993
    %v4009 = vsel %vm1194, %v4007, %v3995
    %v4010 = vsel %vm1197, %v4008, %v4001
    %v4011 = vsel %vm1197, %v4009, %v4003
    %v4012 = vpack.c.bf16 %v4011, %v4010
    %v4013 = vlaneseq
    %v4014 = vshrl.u32 %v4013, 7
    %v4015 = vsub.s32 0, %v4014
    %v4016 = vrot.slane %v3411, %v4015
    %v4025 = vunpack.c.l.b16 %v3386
    %v4026 = vunpack.c.l.b16 %v3387
    %v4027 = vunpack.c.l.b16 %v3388
    %v4028 = vunpack.c.l.b16 %v3389
    %v4029 = vunpack.c.l.b16 %v3390
    %v4030 = vunpack.c.l.b16 %v3391
    %v4031 = vunpack.c.l.b16 %v3392
    %v4032 = vunpack.c.l.b16 %v3393
    %v4033 = vpack.c.b16 %v4026, %v4025
    %v4034 = vpack.c.b16 %v4028, %v4027
    %v4035 = vpack.c.b16 %v4030, %v4029
    %v4036 = vpack.c.b16 %v4032, %v4031
    %v4042 = vsel %vm334, %v4012, 0
    %4044 = vmatprep.subr.bf16.mxu0 0
    %4045 = vmatpush1.bf16.msra.mxu0 0
    %4046 = vmatprep.subr.bf16.mxu0 0
    %4047 = vmatpush1.bf16.msra.mxu0 0
    %4048 = vmatprep.subr.bf16.mxu0 0
    %4049 = vmatpush1.bf16.msra.mxu0 0
    %4050 = vmatprep.subr.bf16.mxu0 0
    %4051 = vmatpush1.bf16.msra.mxu0 0
    %4052 = vmatprep.subr.bf16.mxu0 0
    %4053 = vmatpush1.bf16.msra.mxu0 %v4036
    %4054 = vmatprep.subr.bf16.mxu0 0
    %4055 = vmatpush1.bf16.msra.mxu0 %v4035
    %4056 = vmatprep.subr.bf16.mxu0 0
    %4057 = vmatpush1.bf16.msra.mxu0 %v4034
    %4058 = vmatprep.subr.bf16.mxu0 0
    %4059 = vmatpush1.bf16.msra.mxu0 %v4033
    %4060 = vmatprep.subr.bf16.mxu0 0
    %4061 = vmatpush2.bf16.msra.mxu0 0
    %4062 = vmatprep.subr.bf16.mxu0 0
    %4063 = vmatpush2.bf16.msra.mxu0 0
    %4064 = vmatprep.subr.bf16.mxu0 0
    %4065 = vmatpush2.bf16.msra.mxu0 0
    %4066 = vmatprep.subr.bf16.mxu0 0
    %4067 = vmatpush2.bf16.msra.mxu0 0
    %4068 = vmatprep.subr.bf16.mxu0 0
    %4069 = vmatpush2.bf16.msra.mxu0 0
    %4070 = vmatprep.subr.bf16.mxu0 0
    %4071 = vmatpush2.bf16.msra.mxu0 0
    %4072 = vmatprep.subr.bf16.mxu0 0
    %4073 = vmatpush2.bf16.msra.mxu0 0
    %4074 = vmatprep.subr.bf16.mxu0 0
    %4075 = vmatpush2.bf16.msra.mxu0 0
    %4076 = vmatprep.mubr.bf16.mxu0 0
    %4077 = vmatmul.mubr.bf16.gmra.mxu0 %v4042
    %v4078 = vpop.f32.mrf.mxu0
    %v4079 = vadd.f32 %v4016, %v4078
    %v4080 = vpop.f32.mrf.mxu0
    %v4081 = vpop.f32.mrf.mxu0
    %v4082 = vadd.f32 %v4016, %v4081
    %v4083 = vpop.f32.mrf.mxu0
    %4084 = vdwg.mxu0
    %v4085 = vadd.f32 %v4079, %v3374
    %v4086 = vadd.f32 %v4082, %v3375
    %v4087 = vsel %vm334, %v4085, 0.0
    %4088 = vadd.xlane.f32.xlu0 %v4087
    %v4089 = vpop.xlane.xlu0 %4088
    %v4090 = vsel %vm334, %v4086, 0.0
    %4091 = vadd.xlane.f32.xlu0 %v4090
    %v4092 = vpop.xlane.xlu0 %4091
    %v4093 = vmul.f32 %v4089, %v1281
    %v4094 = vmul.f32 %v4092, %v1281
    %v4095 = vsub.f32 %v4085, %v4093
    %v4096 = vsub.f32 %v4086, %v4094
    %v4097 = vmul.f32 %v4095, %v4095
    %v4098 = vmul.f32 %v4096, %v4096
    %v4099 = vsel %vm334, %v4097, 0.0
    %4100 = vadd.xlane.f32.xlu0 %v4099
    %v4101 = vpop.xlane.xlu0 %4100
    %v4102 = vsel %vm334, %v4098, 0.0
    %4103 = vadd.xlane.f32.xlu0 %v4102
    %v4104 = vpop.xlane.xlu0 %4103
    %v4105 = vmul.f32 %v4101, %v1281
    %v4106 = vmul.f32 %v4104, %v1281
    %v4107 = vadd.f32 %v4105, 1e-05
    %v4108 = vadd.f32 %v4106, 1e-05
    %v4109 = vrsqrt.pop %v4107
    %v4110 = vrsqrt.pop %v4108
    %v4111 = vmul.f32 %v4095, %v4109
    %v4112 = vmul.f32 %v4096, %v4110
    %v4113 = vlaneseq
    %v4114 = vshrl.u32 %v4113, 7
    %v4115 = vsub.s32 1, %v4114
    %v4116 = vrot.slane %v3411, %v4115
    %v4117 = vmul.f32 %v4111, %v4116
    %v4118 = vmul.f32 %v4112, %v4116
    %v4119 = vlaneseq
    %v4120 = vshrl.u32 %v4119, 7
    %v4121 = vsub.s32 2, %v4120
    %v4122 = vrot.slane %v3411, %v4121
    %v4123 = vadd.f32 %v4117, %v4122
    %v4124 = vadd.f32 %v4118, %v4122
    %v4125 = vpack.c.bf16 %v4124, %v4123
    %v4126 = vlaneseq
    %v4127 = vshrl.u32 %v4126, 7
    %v4128 = vsub.s32 3, %v4127
    %v4129 = vrot.slane %v3411, %v4128
    %v4138 = vunpack.c.l.b16 %v3394
    %v4139 = vunpack.c.l.b16 %v3395
    %v4140 = vunpack.c.l.b16 %v3396
    %v4141 = vunpack.c.l.b16 %v3397
    %v4142 = vunpack.c.l.b16 %v3398
    %v4143 = vunpack.c.l.b16 %v3399
    %v4144 = vunpack.c.l.b16 %v3400
    %v4145 = vunpack.c.l.b16 %v3401
    %v4146 = vpack.c.b16 %v4139, %v4138
    %v4147 = vpack.c.b16 %v4141, %v4140
    %v4148 = vpack.c.b16 %v4143, %v4142
    %v4149 = vpack.c.b16 %v4145, %v4144
    %v4155 = vsel %vm334, %v4125, 0
    %4157 = vmatprep.subr.bf16.mxu0 0
    %4158 = vmatpush1.bf16.msra.mxu0 0
    %4159 = vmatprep.subr.bf16.mxu0 0
    %4160 = vmatpush1.bf16.msra.mxu0 0
    %4161 = vmatprep.subr.bf16.mxu0 0
    %4162 = vmatpush1.bf16.msra.mxu0 0
    %4163 = vmatprep.subr.bf16.mxu0 0
    %4164 = vmatpush1.bf16.msra.mxu0 0
    %4165 = vmatprep.subr.bf16.mxu0 0
    %4166 = vmatpush1.bf16.msra.mxu0 %v4149
    %4167 = vmatprep.subr.bf16.mxu0 0
    %4168 = vmatpush1.bf16.msra.mxu0 %v4148
    %4169 = vmatprep.subr.bf16.mxu0 0
    %4170 = vmatpush1.bf16.msra.mxu0 %v4147
    %4171 = vmatprep.subr.bf16.mxu0 0
    %4172 = vmatpush1.bf16.msra.mxu0 %v4146
    %4173 = vmatprep.subr.bf16.mxu0 0
    %4174 = vmatpush2.bf16.msra.mxu0 0
    %4175 = vmatprep.subr.bf16.mxu0 0
    %4176 = vmatpush2.bf16.msra.mxu0 0
    %4177 = vmatprep.subr.bf16.mxu0 0
    %4178 = vmatpush2.bf16.msra.mxu0 0
    %4179 = vmatprep.subr.bf16.mxu0 0
    %4180 = vmatpush2.bf16.msra.mxu0 0
    %4181 = vmatprep.subr.bf16.mxu0 0
    %4182 = vmatpush2.bf16.msra.mxu0 0
    %4183 = vmatprep.subr.bf16.mxu0 0
    %4184 = vmatpush2.bf16.msra.mxu0 0
    %4185 = vmatprep.subr.bf16.mxu0 0
    %4186 = vmatpush2.bf16.msra.mxu0 0
    %4187 = vmatprep.subr.bf16.mxu0 0
    %4188 = vmatpush2.bf16.msra.mxu0 0
    %4189 = vmatprep.mubr.bf16.mxu0 0
    %4190 = vmatmul.mubr.bf16.gmra.mxu0 %v4155
    %v4191 = vpop.f32.mrf.mxu0
    %v4192 = vadd.f32 %v4129, %v4191
    %v4193 = vpop.f32.mrf.mxu0
    %v4194 = vpop.f32.mrf.mxu0
    %v4195 = vadd.f32 %v4129, %v4194
    %v4196 = vpop.f32.mrf.mxu0
    %4197 = vdwg.mxu0
    %v4198 = vmax.f32 %v4192, 0.0
    %v4199 = vmax.f32 %v4195, 0.0
    %v4200 = vpack.c.bf16 %v4199, %v4198
    %v4201 = vlaneseq
    %v4202 = vshrl.u32 %v4201, 7
    %v4203 = vsub.s32 4, %v4202
    %v4204 = vrot.slane %v3411, %v4203
    %v4213 = vunpack.c.l.b16 %v3402
    %v4214 = vunpack.c.l.b16 %v3403
    %v4215 = vunpack.c.l.b16 %v3404
    %v4216 = vunpack.c.l.b16 %v3405
    %v4217 = vunpack.c.l.b16 %v3406
    %v4218 = vunpack.c.l.b16 %v3407
    %v4219 = vunpack.c.l.b16 %v3408
    %v4220 = vunpack.c.l.b16 %v3409
    %v4221 = vpack.c.b16 %v4214, %v4213
    %v4222 = vpack.c.b16 %v4216, %v4215
    %v4223 = vpack.c.b16 %v4218, %v4217
    %v4224 = vpack.c.b16 %v4220, %v4219
    %v4230 = vsel %vm334, %v4200, 0
    %4232 = vmatprep.subr.bf16.mxu0 0
    %4233 = vmatpush1.bf16.msra.mxu0 0
    %4234 = vmatprep.subr.bf16.mxu0 0
    %4235 = vmatpush1.bf16.msra.mxu0 0
    %4236 = vmatprep.subr.bf16.mxu0 0
    %4237 = vmatpush1.bf16.msra.mxu0 0
    %4238 = vmatprep.subr.bf16.mxu0 0
    %4239 = vmatpush1.bf16.msra.mxu0 0
    %4240 = vmatprep.subr.bf16.mxu0 0
    %4241 = vmatpush1.bf16.msra.mxu0 %v4224
    %4242 = vmatprep.subr.bf16.mxu0 0
    %4243 = vmatpush1.bf16.msra.mxu0 %v4223
    %4244 = vmatprep.subr.bf16.mxu0 0
    %4245 = vmatpush1.bf16.msra.mxu0 %v4222
    %4246 = vmatprep.subr.bf16.mxu0 0
    %4247 = vmatpush1.bf16.msra.mxu0 %v4221
    %4248 = vmatprep.subr.bf16.mxu0 0
    %4249 = vmatpush2.bf16.msra.mxu0 0
    %4250 = vmatprep.subr.bf16.mxu0 0
    %4251 = vmatpush2.bf16.msra.mxu0 0
    %4252 = vmatprep.subr.bf16.mxu0 0
    %4253 = vmatpush2.bf16.msra.mxu0 0
    %4254 = vmatprep.subr.bf16.mxu0 0
    %4255 = vmatpush2.bf16.msra.mxu0 0
    %4256 = vmatprep.subr.bf16.mxu0 0
    %4257 = vmatpush2.bf16.msra.mxu0 0
    %4258 = vmatprep.subr.bf16.mxu0 0
    %4259 = vmatpush2.bf16.msra.mxu0 0
    %4260 = vmatprep.subr.bf16.mxu0 0
    %4261 = vmatpush2.bf16.msra.mxu0 0
    %4262 = vmatprep.subr.bf16.mxu0 0
    %4263 = vmatpush2.bf16.msra.mxu0 0
    %4264 = vmatprep.mubr.bf16.mxu0 0
    %4265 = vmatmul.mubr.bf16.gmra.mxu0 %v4230
    %v4266 = vpop.f32.mrf.mxu0
    %v4267 = vadd.f32 %v4204, %v4266
    %v4268 = vpop.f32.mrf.mxu0
    %v4269 = vpop.f32.mrf.mxu0
    %v4270 = vadd.f32 %v4204, %v4269
    %v4271 = vpop.f32.mrf.mxu0
    %4272 = vdwg.mxu0
    %v4273 = vadd.f32 %v4267, %v4123
    %v4274 = vadd.f32 %v4270, %v4124
    %v4275 = vsel %vm334, %v4273, 0.0
    %4276 = vadd.xlane.f32.xlu0 %v4275
    %v4277 = vpop.xlane.xlu0 %4276
    %v4278 = vsel %vm334, %v4274, 0.0
    %4279 = vadd.xlane.f32.xlu0 %v4278
    %v4280 = vpop.xlane.xlu0 %4279
    %v4281 = vmul.f32 %v4277, %v1281
    %v4282 = vmul.f32 %v4280, %v1281
    %v4283 = vsub.f32 %v4273, %v4281
    %v4284 = vsub.f32 %v4274, %v4282
    %v4285 = vmul.f32 %v4283, %v4283
    %v4286 = vmul.f32 %v4284, %v4284
    %v4287 = vsel %vm334, %v4285, 0.0
    %4288 = vadd.xlane.f32.xlu0 %v4287
    %v4289 = vpop.xlane.xlu0 %4288
    %v4290 = vsel %vm334, %v4286, 0.0
    %4291 = vadd.xlane.f32.xlu0 %v4290
    %v4292 = vpop.xlane.xlu0 %4291
    %v4293 = vmul.f32 %v4289, %v1281
    %v4294 = vmul.f32 %v4292, %v1281
    %v4295 = vadd.f32 %v4293, 1e-05
    %v4296 = vadd.f32 %v4294, 1e-05
    %v4297 = vrsqrt.pop %v4295
    %v4298 = vrsqrt.pop %v4296
    %v4299 = vmul.f32 %v4283, %v4297
    %v4300 = vmul.f32 %v4284, %v4298
    %v4301 = vlaneseq
    %v4302 = vshrl.u32 %v4301, 7
    %v4303 = vsub.s32 5, %v4302
    %v4304 = vrot.slane %v3411, %v4303
    %v4305 = vmul.f32 %v4299, %v4304
    %v4306 = vmul.f32 %v4300, %v4304
    %v4307 = vlaneseq
    %v4308 = vshrl.u32 %v4307, 7
    %v4309 = vsub.s32 6, %v4308
    %v4310 = vrot.slane %v3411, %v4309
    %v4311 = vadd.f32 %v4305, %v4310
    %v4312 = vadd.f32 %v4306, %v4310
    %s4313 = smul.u32 4, 64
    %s4314 = smul.u32 %s4313, 2
    %s4315 = sshll.u32 %s4314, 4
    %4316 = dma.done [#allocation4], %s4315
    %s4317 = smul.u32 4, 32
    %s4318 = smul.u32 %s4317, 1
    %s4319 = sshll.u32 %s4318, 4
    %4320 = dma.done %s243, %s4319
    %v4322 = vsel %vm689, %v263, 0
    %v4325 = vsel %vm689, %v264, 0
    %4327 = vmatprep.subr.mxu0 0.0
    %4328 = vmatpush1.msra.mxu0 0.0
    %4329 = vmatprep.subr.mxu0 0.0
    %4330 = vmatpush1.msra.mxu0 0.0
    %4331 = vmatprep.subr.mxu0 0.0
    %4332 = vmatpush1.msra.mxu0 0.0
    %4333 = vmatprep.subr.mxu0 0.0
    %4334 = vmatpush1.msra.mxu0 0.0
    %4335 = vmatprep.subr.mxu0 0.0
    %4336 = vmatpush1.msra.mxu0 0.0
    %4337 = vmatprep.subr.mxu0 0.0
    %4338 = vmatpush1.msra.mxu0 0.0
    %4339 = vmatprep.subr.mxu0 0.0
    %4340 = vmatpush1.msra.mxu0 0.0
    %4341 = vmatprep.subr.mxu0 0.0
    %4342 = vmatpush1.msra.mxu0 0.0
    %4343 = vmatprep.subr.mxu0 0.0
    %4344 = vmatpush1.msra.mxu0 0.0
    %4345 = vmatprep.subr.mxu0 0.0
    %4346 = vmatpush1.msra.mxu0 0.0
    %4347 = vmatprep.subr.mxu0 0.0
    %4348 = vmatpush1.msra.mxu0 0.0
    %4349 = vmatprep.subr.mxu0 0.0
    %4350 = vmatpush1.msra.mxu0 0.0
    %4351 = vmatprep.subr.mxu0 0.0
    %4352 = vmatpush1.msra.mxu0 0.0
    %4353 = vmatprep.subr.mxu0 0.0
    %4354 = vmatpush1.msra.mxu0 0.0
    %4355 = vmatprep.subr.mxu0 0.0
    %4356 = vmatpush1.msra.mxu0 %v4312
    %4357 = vmatprep.subr.mxu0 0.0
    %4358 = vmatpush1.msra.mxu0 %v4311
    %4359 = vmatprep.subr.mxu0 0.0
    %4360 = vmatpush2.msra.mxu0 0.0
    %4361 = vmatprep.subr.mxu0 0.0
    %4362 = vmatpush2.msra.mxu0 0.0
    %4363 = vmatprep.subr.mxu0 0.0
    %4364 = vmatpush2.msra.mxu0 0.0
    %4365 = vmatprep.subr.mxu0 0.0
    %4366 = vmatpush2.msra.mxu0 0.0
    %4367 = vmatprep.subr.mxu0 0.0
    %4368 = vmatpush2.msra.mxu0 0.0
    %4369 = vmatprep.subr.mxu0 0.0
    %4370 = vmatpush2.msra.mxu0 0.0
    %4371 = vmatprep.subr.mxu0 0.0
    %4372 = vmatpush2.msra.mxu0 0.0
    %4373 = vmatprep.subr.mxu0 0.0
    %4374 = vmatpush2.msra.mxu0 0.0
    %4375 = vmatprep.subr.mxu0 0.0
    %4376 = vmatpush2.msra.mxu0 0.0
    %4377 = vmatprep.subr.mxu0 0.0
    %4378 = vmatpush2.msra.mxu0 0.0
    %4379 = vmatprep.subr.mxu0 0.0
    %4380 = vmatpush2.msra.mxu0 0.0
    %4381 = vmatprep.subr.mxu0 0.0
    %4382 = vmatpush2.msra.mxu0 0.0
    %4383 = vmatprep.subr.mxu0 0.0
    %4384 = vmatpush2.msra.mxu0 0.0
    %4385 = vmatprep.subr.mxu0 0.0
    %4386 = vmatpush2.msra.mxu0 0.0
    %4387 = vmatprep.subr.mxu0 0.0
    %4388 = vmatpush2.msra.mxu0 0.0
    %4389 = vmatprep.subr.mxu0 0.0
    %4390 = vmatpush2.msra.mxu0 0.0
    %4391 = vmatprep.mubr.f32.mxu0 0.0
    %4392 = vmatmul.mubr.f32.gmra.mxu0 %v4322
    %v4393 = vpop.f32.mrf.mxu0
    %v4394 = vadd.f32 0.0, %v4393
    %v4395 = vpop.f32.mrf.mxu0
    %4396 = vmatprep.mubr.f32.mxu0 0.0
    %4397 = vmatmul.mubr.f32.gmra.mxu0 %v4325
    %v4398 = vpop.f32.mrf.mxu0
    %v4399 = vadd.f32 0.0, %v4398
    %v4400 = vpop.f32.mrf.mxu0
    %4401 = vdwg.mxu0
    %v4403 = vrot.slane %v4394, 2
    %4404 = vrot.lane.b32.xlu0 %v4403, 64
    %v4405 = vpop.permute.xlu0 %4404
    %v4407 = vrot.slane %v4394, 4
    %v4409 = vrot.slane %v4394, 6
    %4410 = vrot.lane.b32.xlu0 %v4409, 64
    %v4411 = vpop.permute.xlu0 %4410
    %v4414 = vrot.slane %v4399, 2
    %4415 = vrot.lane.b32.xlu0 %v4414, 64
    %v4416 = vpop.permute.xlu0 %4415
    %v4418 = vrot.slane %v4399, 4
    %v4420 = vrot.slane %v4399, 6
    %4421 = vrot.lane.b32.xlu0 %v4420, 64
    %v4422 = vpop.permute.xlu0 %4421
    %v4424 = vsel %vm334, %v4394, %v4405
    %v4425 = vsel %vm334, %v4407, %v4411
    %v4426 = vsel %vm334, %v4399, %v4416
    %v4427 = vsel %vm334, %v4418, %v4422
    %v4428 = vld [vmem:[#allocation2] sm:$0xff]
    %v4429 = vld [vmem:[#allocation2 + $0x8] sm:$0xff]
    %v4430 = vld [vmem:[#allocation2 + $0x10] sm:$0xff]
    %v4431 = vld [vmem:[#allocation2 + $0x18] sm:$0xff]
    %v4432 = vld [vmem:[#allocation2 + $0x20] sm:$0xff]
    %v4433 = vld [vmem:[#allocation2 + $0x28] sm:$0xff]
    %v4434 = vld [vmem:[#allocation2 + $0x30] sm:$0xff]
    %v4435 = vld [vmem:[#allocation2 + $0x38] sm:$0xff]
    %v4436 = vld [vmem:[#allocation2 + $0x40] sm:$0xff]
    %v4437 = vld [vmem:[#allocation2 + $0x48] sm:$0xff]
    %v4438 = vld [vmem:[#allocation2 + $0x50] sm:$0xff]
    %v4439 = vld [vmem:[#allocation2 + $0x58] sm:$0xff]
    %v4440 = vld [vmem:[#allocation2 + $0x60] sm:$0xff]
    %v4441 = vld [vmem:[#allocation2 + $0x68] sm:$0xff]
    %v4442 = vld [vmem:[#allocation2 + $0x70] sm:$0xff]
    %v4443 = vld [vmem:[#allocation2 + $0x78] sm:$0xff]
    %v4444 = vld [vmem:[#allocation2 + $0x80] sm:$0xff]
    %v4445 = vld [vmem:[#allocation2 + $0x88] sm:$0xff]
    %v4446 = vld [vmem:[#allocation2 + $0x90] sm:$0xff]
    %v4447 = vld [vmem:[#allocation2 + $0x98] sm:$0xff]
    %v4448 = vld [vmem:[#allocation2 + $0xa0] sm:$0xff]
    %v4449 = vld [vmem:[#allocation2 + $0xa8] sm:$0xff]
    %v4450 = vld [vmem:[#allocation2 + $0xb0] sm:$0xff]
    %v4451 = vld [vmem:[#allocation2 + $0xb8] sm:$0xff]
    %v4452 = vld [vmem:[#allocation2 + $0xc0] sm:$0xff]
    %v4453 = vld [vmem:[#allocation2 + $0xc8] sm:$0xff]
    %v4454 = vld [vmem:[#allocation2 + $0xd0] sm:$0xff]
    %v4455 = vld [vmem:[#allocation2 + $0xd8] sm:$0xff]
    %v4456 = vld [vmem:[#allocation2 + $0xe0] sm:$0xff]
    %v4457 = vld [vmem:[#allocation2 + $0xe8] sm:$0xff]
    %v4458 = vld [vmem:[#allocation2 + $0xf0] sm:$0xff]
    %v4459 = vld [vmem:[#allocation2 + $0xf8] sm:$0xff]
    %v4460 = vld [vmem:[#allocation2 + $0x100] sm:$0xff]
    %v4461 = vld [vmem:[#allocation2 + $0x108] sm:$0xff]
    %v4462 = vld [vmem:[#allocation2 + $0x110] sm:$0xff]
    %v4463 = vld [vmem:[#allocation2 + $0x118] sm:$0xff]
    %v4464 = vld [vmem:[#allocation2 + $0x120] sm:$0xff]
    %v4465 = vld [vmem:[#allocation2 + $0x128] sm:$0xff]
    %v4466 = vld [vmem:[#allocation2 + $0x130] sm:$0xff]
    %v4467 = vld [vmem:[#allocation2 + $0x138] sm:$0xff]
    %v4468 = vld [vmem:[#allocation2 + $0x140] sm:$0xff]
    %v4469 = vld [vmem:[#allocation2 + $0x148] sm:$0xff]
    %v4470 = vld [vmem:[#allocation2 + $0x150] sm:$0xff]
    %v4471 = vld [vmem:[#allocation2 + $0x158] sm:$0xff]
    %v4472 = vld [vmem:[#allocation2 + $0x160] sm:$0xff]
    %v4473 = vld [vmem:[#allocation2 + $0x168] sm:$0xff]
    %v4474 = vld [vmem:[#allocation2 + $0x170] sm:$0xff]
    %v4475 = vld [vmem:[#allocation2 + $0x178] sm:$0xff]
    %v4476 = vld [vmem:[#allocation2 + $0x180] sm:$0xff]
    %v4477 = vld [vmem:[#allocation2 + $0x188] sm:$0xff]
    %v4478 = vld [vmem:[#allocation2 + $0x190] sm:$0xff]
    %v4479 = vld [vmem:[#allocation2 + $0x198] sm:$0xff]
    %v4480 = vld [vmem:[#allocation2 + $0x1a0] sm:$0xff]
    %v4481 = vld [vmem:[#allocation2 + $0x1a8] sm:$0xff]
    %v4482 = vld [vmem:[#allocation2 + $0x1b0] sm:$0xff]
    %v4483 = vld [vmem:[#allocation2 + $0x1b8] sm:$0xff]
    %v4484 = vld [vmem:[#allocation2 + $0x1c0] sm:$0xff]
    %v4485 = vld [vmem:[#allocation2 + $0x1c8] sm:$0xff]
    %v4486 = vld [vmem:[#allocation2 + $0x1d0] sm:$0xff]
    %v4487 = vld [vmem:[#allocation2 + $0x1d8] sm:$0xff]
    %v4488 = vld [vmem:[#allocation2 + $0x1e0] sm:$0xff]
    %v4489 = vld [vmem:[#allocation2 + $0x1e8] sm:$0xff]
    %v4490 = vld [vmem:[#allocation2 + $0x1f0] sm:$0xff]
    %v4491 = vld [vmem:[#allocation2 + $0x1f8] sm:$0xff]
    %v4492 = vpack.c.bf16 %v4424, %v4424
    %v4493 = vpack.c.bf16 %v4425, %v4425
    %v4494 = vpack.c.bf16 %v4426, %v4426
    %v4495 = vpack.c.bf16 %v4427, %v4427
    %v4496 = vlaneseq
    %v4497 = vshrl.u32 %v4496, 7
    %v4498 = vsub.s32 1, %v4497
    %v4499 = vrot.slane %v265, %v4498
    %v4500 = vlaneseq
    %v4501 = vshrl.u32 %v4500, 7
    %v4502 = vsub.s32 5, %v4501
    %v4503 = vrot.slane %v265, %v4502
    %v4506 = vlaneseq
    %v4507 = vshrl.u32 %v4506, 7
    %v4508 = vsub.s32 1, %v4507
    %v4509 = vrot.slane %v4499, %v4508
    %v4510 = vlaneseq
    %v4511 = vshrl.u32 %v4510, 7
    %v4512 = vsub.s32 1, %v4511
    %v4513 = vrot.slane %v4503, %v4512
    %v4578 = vunpack.c.l.b16 %v4428
    %v4579 = vunpack.c.h.b16 %v4428
    %v4580 = vunpack.c.l.b16 %v4429
    %v4581 = vunpack.c.h.b16 %v4429
    %v4582 = vunpack.c.l.b16 %v4430
    %v4583 = vunpack.c.h.b16 %v4430
    %v4584 = vunpack.c.l.b16 %v4431
    %v4585 = vunpack.c.h.b16 %v4431
    %v4586 = vunpack.c.l.b16 %v4432
    %v4587 = vunpack.c.h.b16 %v4432
    %v4588 = vunpack.c.l.b16 %v4433
    %v4589 = vunpack.c.h.b16 %v4433
    %v4590 = vunpack.c.l.b16 %v4434
    %v4591 = vunpack.c.h.b16 %v4434
    %v4592 = vunpack.c.l.b16 %v4435
    %v4593 = vunpack.c.h.b16 %v4435
    %v4594 = vunpack.c.l.b16 %v4436
    %v4595 = vunpack.c.h.b16 %v4436
    %v4596 = vunpack.c.l.b16 %v4437
    %v4597 = vunpack.c.h.b16 %v4437
    %v4598 = vunpack.c.l.b16 %v4438
    %v4599 = vunpack.c.h.b16 %v4438
    %v4600 = vunpack.c.l.b16 %v4439
    %v4601 = vunpack.c.h.b16 %v4439
    %v4602 = vunpack.c.l.b16 %v4440
    %v4603 = vunpack.c.h.b16 %v4440
    %v4604 = vunpack.c.l.b16 %v4441
    %v4605 = vunpack.c.h.b16 %v4441
    %v4606 = vunpack.c.l.b16 %v4442
    %v4607 = vunpack.c.h.b16 %v4442
    %v4608 = vunpack.c.l.b16 %v4443
    %v4609 = vunpack.c.h.b16 %v4443
    %v4610 = vunpack.c.l.b16 %v4444
    %v4611 = vunpack.c.h.b16 %v4444
    %v4612 = vunpack.c.l.b16 %v4445
    %v4613 = vunpack.c.h.b16 %v4445
    %v4614 = vunpack.c.l.b16 %v4446
    %v4615 = vunpack.c.h.b16 %v4446
    %v4616 = vunpack.c.l.b16 %v4447
    %v4617 = vunpack.c.h.b16 %v4447
    %v4618 = vunpack.c.l.b16 %v4448
    %v4619 = vunpack.c.h.b16 %v4448
    %v4620 = vunpack.c.l.b16 %v4449
    %v4621 = vunpack.c.h.b16 %v4449
    %v4622 = vunpack.c.l.b16 %v4450
    %v4623 = vunpack.c.h.b16 %v4450
    %v4624 = vunpack.c.l.b16 %v4451
    %v4625 = vunpack.c.h.b16 %v4451
    %v4626 = vunpack.c.l.b16 %v4452
    %v4627 = vunpack.c.h.b16 %v4452
    %v4628 = vunpack.c.l.b16 %v4453
    %v4629 = vunpack.c.h.b16 %v4453
    %v4630 = vunpack.c.l.b16 %v4454
    %v4631 = vunpack.c.h.b16 %v4454
    %v4632 = vunpack.c.l.b16 %v4455
    %v4633 = vunpack.c.h.b16 %v4455
    %v4634 = vunpack.c.l.b16 %v4456
    %v4635 = vunpack.c.h.b16 %v4456
    %v4636 = vunpack.c.l.b16 %v4457
    %v4637 = vunpack.c.h.b16 %v4457
    %v4638 = vunpack.c.l.b16 %v4458
    %v4639 = vunpack.c.h.b16 %v4458
    %v4640 = vunpack.c.l.b16 %v4459
    %v4641 = vunpack.c.h.b16 %v4459
    %v4642 = vunpack.c.l.b16 %v4460
    %v4643 = vunpack.c.h.b16 %v4460
    %v4644 = vunpack.c.l.b16 %v4461
    %v4645 = vunpack.c.h.b16 %v4461
    %v4646 = vunpack.c.l.b16 %v4462
    %v4647 = vunpack.c.h.b16 %v4462
    %v4648 = vunpack.c.l.b16 %v4463
    %v4649 = vunpack.c.h.b16 %v4463
    %v4650 = vunpack.c.l.b16 %v4464
    %v4651 = vunpack.c.h.b16 %v4464
    %v4652 = vunpack.c.l.b16 %v4465
    %v4653 = vunpack.c.h.b16 %v4465
    %v4654 = vunpack.c.l.b16 %v4466
    %v4655 = vunpack.c.h.b16 %v4466
    %v4656 = vunpack.c.l.b16 %v4467
    %v4657 = vunpack.c.h.b16 %v4467
    %v4658 = vunpack.c.l.b16 %v4468
    %v4659 = vunpack.c.h.b16 %v4468
    %v4660 = vunpack.c.l.b16 %v4469
    %v4661 = vunpack.c.h.b16 %v4469
    %v4662 = vunpack.c.l.b16 %v4470
    %v4663 = vunpack.c.h.b16 %v4470
    %v4664 = vunpack.c.l.b16 %v4471
    %v4665 = vunpack.c.h.b16 %v4471
    %v4666 = vunpack.c.l.b16 %v4472
    %v4667 = vunpack.c.h.b16 %v4472
    %v4668 = vunpack.c.l.b16 %v4473
    %v4669 = vunpack.c.h.b16 %v4473
    %v4670 = vunpack.c.l.b16 %v4474
    %v4671 = vunpack.c.h.b16 %v4474
    %v4672 = vunpack.c.l.b16 %v4475
    %v4673 = vunpack.c.h.b16 %v4475
    %v4674 = vunpack.c.l.b16 %v4476
    %v4675 = vunpack.c.h.b16 %v4476
    %v4676 = vunpack.c.l.b16 %v4477
    %v4677 = vunpack.c.h.b16 %v4477
    %v4678 = vunpack.c.l.b16 %v4478
    %v4679 = vunpack.c.h.b16 %v4478
    %v4680 = vunpack.c.l.b16 %v4479
    %v4681 = vunpack.c.h.b16 %v4479
    %v4682 = vunpack.c.l.b16 %v4480
    %v4683 = vunpack.c.h.b16 %v4480
    %v4684 = vunpack.c.l.b16 %v4481
    %v4685 = vunpack.c.h.b16 %v4481
    %v4686 = vunpack.c.l.b16 %v4482
    %v4687 = vunpack.c.h.b16 %v4482
    %v4688 = vunpack.c.l.b16 %v4483
    %v4689 = vunpack.c.h.b16 %v4483
    %v4690 = vunpack.c.l.b16 %v4484
    %v4691 = vunpack.c.h.b16 %v4484
    %v4692 = vunpack.c.l.b16 %v4485
    %v4693 = vunpack.c.h.b16 %v4485
    %v4694 = vunpack.c.l.b16 %v4486
    %v4695 = vunpack.c.h.b16 %v4486
    %v4696 = vunpack.c.l.b16 %v4487
    %v4697 = vunpack.c.h.b16 %v4487
    %v4698 = vunpack.c.l.b16 %v4488
    %v4699 = vunpack.c.h.b16 %v4488
    %v4700 = vunpack.c.l.b16 %v4489
    %v4701 = vunpack.c.h.b16 %v4489
    %v4702 = vunpack.c.l.b16 %v4490
    %v4703 = vunpack.c.h.b16 %v4490
    %v4704 = vunpack.c.l.b16 %v4491
    %v4705 = vunpack.c.h.b16 %v4491
    %v4706 = vpack.c.b16 %v4580, %v4578
    %v4707 = vpack.c.b16 %v4581, %v4579
    %v4708 = vpack.c.b16 %v4584, %v4582
    %v4709 = vpack.c.b16 %v4585, %v4583
    %v4710 = vpack.c.b16 %v4588, %v4586
    %v4711 = vpack.c.b16 %v4589, %v4587
    %v4712 = vpack.c.b16 %v4592, %v4590
    %v4713 = vpack.c.b16 %v4593, %v4591
    %v4714 = vpack.c.b16 %v4596, %v4594
    %v4715 = vpack.c.b16 %v4597, %v4595
    %v4716 = vpack.c.b16 %v4600, %v4598
    %v4717 = vpack.c.b16 %v4601, %v4599
    %v4718 = vpack.c.b16 %v4604, %v4602
    %v4719 = vpack.c.b16 %v4605, %v4603
    %v4720 = vpack.c.b16 %v4608, %v4606
    %v4721 = vpack.c.b16 %v4609, %v4607
    %v4722 = vpack.c.b16 %v4612, %v4610
    %v4723 = vpack.c.b16 %v4613, %v4611
    %v4724 = vpack.c.b16 %v4616, %v4614
    %v4725 = vpack.c.b16 %v4617, %v4615
    %v4726 = vpack.c.b16 %v4620, %v4618
    %v4727 = vpack.c.b16 %v4621, %v4619
    %v4728 = vpack.c.b16 %v4624, %v4622
    %v4729 = vpack.c.b16 %v4625, %v4623
    %v4730 = vpack.c.b16 %v4628, %v4626
    %v4731 = vpack.c.b16 %v4629, %v4627
    %v4732 = vpack.c.b16 %v4632, %v4630
    %v4733 = vpack.c.b16 %v4633, %v4631
    %v4734 = vpack.c.b16 %v4636, %v4634
    %v4735 = vpack.c.b16 %v4637, %v4635
    %v4736 = vpack.c.b16 %v4640, %v4638
    %v4737 = vpack.c.b16 %v4641, %v4639
    %v4738 = vpack.c.b16 %v4644, %v4642
    %v4739 = vpack.c.b16 %v4645, %v4643
    %v4740 = vpack.c.b16 %v4648, %v4646
    %v4741 = vpack.c.b16 %v4649, %v4647
    %v4742 = vpack.c.b16 %v4652, %v4650
    %v4743 = vpack.c.b16 %v4653, %v4651
    %v4744 = vpack.c.b16 %v4656, %v4654
    %v4745 = vpack.c.b16 %v4657, %v4655
    %v4746 = vpack.c.b16 %v4660, %v4658
    %v4747 = vpack.c.b16 %v4661, %v4659
    %v4748 = vpack.c.b16 %v4664, %v4662
    %v4749 = vpack.c.b16 %v4665, %v4663
    %v4750 = vpack.c.b16 %v4668, %v4666
    %v4751 = vpack.c.b16 %v4669, %v4667
    %v4752 = vpack.c.b16 %v4672, %v4670
    %v4753 = vpack.c.b16 %v4673, %v4671
    %v4754 = vpack.c.b16 %v4676, %v4674
    %v4755 = vpack.c.b16 %v4677, %v4675
    %v4756 = vpack.c.b16 %v4680, %v4678
    %v4757 = vpack.c.b16 %v4681, %v4679
    %v4758 = vpack.c.b16 %v4684, %v4682
    %v4759 = vpack.c.b16 %v4685, %v4683
    %v4760 = vpack.c.b16 %v4688, %v4686
    %v4761 = vpack.c.b16 %v4689, %v4687
    %v4762 = vpack.c.b16 %v4692, %v4690
    %v4763 = vpack.c.b16 %v4693, %v4691
    %v4764 = vpack.c.b16 %v4696, %v4694
    %v4765 = vpack.c.b16 %v4697, %v4695
    %v4766 = vpack.c.b16 %v4700, %v4698
    %v4767 = vpack.c.b16 %v4701, %v4699
    %v4768 = vpack.c.b16 %v4704, %v4702
    %v4769 = vpack.c.b16 %v4705, %v4703
    %4834 = vmatprep.subr.bf16.mxu0 %v4721
    %4835 = vmatpush1.bf16.msra.mxu0 %v4720
    %4836 = vmatprep.subr.bf16.mxu0 %v4719
    %4837 = vmatpush1.bf16.msra.mxu0 %v4718
    %4838 = vmatprep.subr.bf16.mxu0 %v4717
    %4839 = vmatpush1.bf16.msra.mxu0 %v4716
    %4840 = vmatprep.subr.bf16.mxu0 %v4715
    %4841 = vmatpush1.bf16.msra.mxu0 %v4714
    %4842 = vmatprep.subr.bf16.mxu0 %v4713
    %4843 = vmatpush1.bf16.msra.mxu0 %v4712
    %4844 = vmatprep.subr.bf16.mxu0 %v4711
    %4845 = vmatpush1.bf16.msra.mxu0 %v4710
    %4846 = vmatprep.subr.bf16.mxu0 %v4709
    %4847 = vmatpush1.bf16.msra.mxu0 %v4708
    %4848 = vmatprep.subr.bf16.mxu0 %v4707
    %4849 = vmatpush1.bf16.msra.mxu0 %v4706
    %4850 = vmatprep.subr.bf16.mxu0 %v4737
    %4851 = vmatpush2.bf16.msra.mxu0 %v4736
    %4852 = vmatprep.subr.bf16.mxu0 %v4735
    %4853 = vmatpush2.bf16.msra.mxu0 %v4734
    %4854 = vmatprep.subr.bf16.mxu0 %v4733
    %4855 = vmatpush2.bf16.msra.mxu0 %v4732
    %4856 = vmatprep.subr.bf16.mxu0 %v4731
    %4857 = vmatpush2.bf16.msra.mxu0 %v4730
    %4858 = vmatprep.subr.bf16.mxu0 %v4729
    %4859 = vmatpush2.bf16.msra.mxu0 %v4728
    %4860 = vmatprep.subr.bf16.mxu0 %v4727
    %4861 = vmatpush2.bf16.msra.mxu0 %v4726
    %4862 = vmatprep.subr.bf16.mxu0 %v4725
    %4863 = vmatpush2.bf16.msra.mxu0 %v4724
    %4864 = vmatprep.subr.bf16.mxu0 %v4723
    %4865 = vmatpush2.bf16.msra.mxu0 %v4722
    %4866 = vmatprep.mubr.bf16.mxu0 %v4493
    %4867 = vmatmul.mubr.bf16.gmra.mxu0 %v4492
    %v4868 = vpop.f32.mrf.mxu0
    %v4869 = vadd.f32 %v4509, %v4868
    %v4870 = vpop.f32.mrf.mxu0
    %v4871 = vadd.f32 %v4513, %v4870
    %v4872 = vpop.f32.mrf.mxu0
    %v4873 = vpop.f32.mrf.mxu0
    %4874 = vdwg.mxu0
    %4875 = vmatprep.subr.bf16.mxu0 %v4753
    %4876 = vmatpush1.bf16.msra.mxu0 %v4752
    %4877 = vmatprep.subr.bf16.mxu0 %v4751
    %4878 = vmatpush1.bf16.msra.mxu0 %v4750
    %4879 = vmatprep.subr.bf16.mxu0 %v4749
    %4880 = vmatpush1.bf16.msra.mxu0 %v4748
    %4881 = vmatprep.subr.bf16.mxu0 %v4747
    %4882 = vmatpush1.bf16.msra.mxu0 %v4746
    %4883 = vmatprep.subr.bf16.mxu0 %v4745
    %4884 = vmatpush1.bf16.msra.mxu0 %v4744
    %4885 = vmatprep.subr.bf16.mxu0 %v4743
    %4886 = vmatpush1.bf16.msra.mxu0 %v4742
    %4887 = vmatprep.subr.bf16.mxu0 %v4741
    %4888 = vmatpush1.bf16.msra.mxu0 %v4740
    %4889 = vmatprep.subr.bf16.mxu0 %v4739
    %4890 = vmatpush1.bf16.msra.mxu0 %v4738
    %4891 = vmatprep.subr.bf16.mxu0 %v4769
    %4892 = vmatpush2.bf16.msra.mxu0 %v4768
    %4893 = vmatprep.subr.bf16.mxu0 %v4767
    %4894 = vmatpush2.bf16.msra.mxu0 %v4766
    %4895 = vmatprep.subr.bf16.mxu0 %v4765
    %4896 = vmatpush2.bf16.msra.mxu0 %v4764
    %4897 = vmatprep.subr.bf16.mxu0 %v4763
    %4898 = vmatpush2.bf16.msra.mxu0 %v4762
    %4899 = vmatprep.subr.bf16.mxu0 %v4761
    %4900 = vmatpush2.bf16.msra.mxu0 %v4760
    %4901 = vmatprep.subr.bf16.mxu0 %v4759
    %4902 = vmatpush2.bf16.msra.mxu0 %v4758
    %4903 = vmatprep.subr.bf16.mxu0 %v4757
    %4904 = vmatpush2.bf16.msra.mxu0 %v4756
    %4905 = vmatprep.subr.bf16.mxu0 %v4755
    %4906 = vmatpush2.bf16.msra.mxu0 %v4754
    %4907 = vmatprep.mubr.bf16.mxu0 %v4495
    %4908 = vmatmul.mubr.bf16.gmra.mxu0 %v4494
    %v4909 = vpop.f32.mrf.mxu0
    %v4910 = vadd.f32 %v4869, %v4909
    %v4911 = vpop.f32.mrf.mxu0
    %v4912 = vadd.f32 %v4871, %v4911
    %v4913 = vpop.f32.mrf.mxu0
    %v4914 = vpop.f32.mrf.mxu0
    %4915 = vdwg.mxu0
    %v4916 = vmax.f32 %v4910, 0.0
    %v4917 = vmax.f32 %v4912, 0.0
    %v4918 = vld [vmem:[#allocation3] sm:$0xf]
    %v4919 = vld [vmem:[#allocation3 + $0x4] sm:$0xf]
    %v4920 = vld [vmem:[#allocation3 + $0x8] sm:$0xf]
    %v4921 = vld [vmem:[#allocation3 + $0xc] sm:$0xf]
    %v4922 = vld [vmem:[#allocation3 + $0x10] sm:$0xf]
    %v4923 = vld [vmem:[#allocation3 + $0x14] sm:$0xf]
    %v4924 = vld [vmem:[#allocation3 + $0x18] sm:$0xf]
    %v4925 = vld [vmem:[#allocation3 + $0x1c] sm:$0xf]
    %v4926 = vld [vmem:[#allocation3 + $0x20] sm:$0xf]
    %v4927 = vld [vmem:[#allocation3 + $0x24] sm:$0xf]
    %v4928 = vld [vmem:[#allocation3 + $0x28] sm:$0xf]
    %v4929 = vld [vmem:[#allocation3 + $0x2c] sm:$0xf]
    %v4930 = vld [vmem:[#allocation3 + $0x30] sm:$0xf]
    %v4931 = vld [vmem:[#allocation3 + $0x34] sm:$0xf]
    %v4932 = vld [vmem:[#allocation3 + $0x38] sm:$0xf]
    %v4933 = vld [vmem:[#allocation3 + $0x3c] sm:$0xf]
    %v4934 = vld [vmem:[#allocation3 + $0x40] sm:$0xf]
    %v4935 = vld [vmem:[#allocation3 + $0x44] sm:$0xf]
    %v4936 = vld [vmem:[#allocation3 + $0x48] sm:$0xf]
    %v4937 = vld [vmem:[#allocation3 + $0x4c] sm:$0xf]
    %v4938 = vld [vmem:[#allocation3 + $0x50] sm:$0xf]
    %v4939 = vld [vmem:[#allocation3 + $0x54] sm:$0xf]
    %v4940 = vld [vmem:[#allocation3 + $0x58] sm:$0xf]
    %v4941 = vld [vmem:[#allocation3 + $0x5c] sm:$0xf]
    %v4942 = vld [vmem:[#allocation3 + $0x60] sm:$0xf]
    %v4943 = vld [vmem:[#allocation3 + $0x64] sm:$0xf]
    %v4944 = vld [vmem:[#allocation3 + $0x68] sm:$0xf]
    %v4945 = vld [vmem:[#allocation3 + $0x6c] sm:$0xf]
    %v4946 = vld [vmem:[#allocation3 + $0x70] sm:$0xf]
    %v4947 = vld [vmem:[#allocation3 + $0x74] sm:$0xf]
    %v4948 = vld [vmem:[#allocation3 + $0x78] sm:$0xf]
    %v4949 = vld [vmem:[#allocation3 + $0x7c] sm:$0xf]
    %v4950 = vpack.c.bf16 %v4916, %v4916
    %v4951 = vpack.c.bf16 %v4917, %v4917
    %v4952 = vlaneseq
    %v4953 = vshrl.u32 %v4952, 7
    %v4954 = vsub.s32 2, %v4953
    %v4955 = vrot.slane %v265, %v4954
    %v4988 = vunpack.c.l.b16 %v4918
    %v4989 = vunpack.c.l.b16 %v4919
    %v4990 = vunpack.c.l.b16 %v4920
    %v4991 = vunpack.c.l.b16 %v4921
    %v4992 = vunpack.c.l.b16 %v4922
    %v4993 = vunpack.c.l.b16 %v4923
    %v4994 = vunpack.c.l.b16 %v4924
    %v4995 = vunpack.c.l.b16 %v4925
    %v4996 = vunpack.c.l.b16 %v4926
    %v4997 = vunpack.c.l.b16 %v4927
    %v4998 = vunpack.c.l.b16 %v4928
    %v4999 = vunpack.c.l.b16 %v4929
    %v5000 = vunpack.c.l.b16 %v4930
    %v5001 = vunpack.c.l.b16 %v4931
    %v5002 = vunpack.c.l.b16 %v4932
    %v5003 = vunpack.c.l.b16 %v4933
    %v5004 = vunpack.c.l.b16 %v4934
    %v5005 = vunpack.c.l.b16 %v4935
    %v5006 = vunpack.c.l.b16 %v4936
    %v5007 = vunpack.c.l.b16 %v4937
    %v5008 = vunpack.c.l.b16 %v4938
    %v5009 = vunpack.c.l.b16 %v4939
    %v5010 = vunpack.c.l.b16 %v4940
    %v5011 = vunpack.c.l.b16 %v4941
    %v5012 = vunpack.c.l.b16 %v4942
    %v5013 = vunpack.c.l.b16 %v4943
    %v5014 = vunpack.c.l.b16 %v4944
    %v5015 = vunpack.c.l.b16 %v4945
    %v5016 = vunpack.c.l.b16 %v4946
    %v5017 = vunpack.c.l.b16 %v4947
    %v5018 = vunpack.c.l.b16 %v4948
    %v5019 = vunpack.c.l.b16 %v4949
    %v5020 = vpack.c.b16 %v4989, %v4988
    %v5021 = vpack.c.b16 %v4991, %v4990
    %v5022 = vpack.c.b16 %v4993, %v4992
    %v5023 = vpack.c.b16 %v4995, %v4994
    %v5024 = vpack.c.b16 %v4997, %v4996
    %v5025 = vpack.c.b16 %v4999, %v4998
    %v5026 = vpack.c.b16 %v5001, %v5000
    %v5027 = vpack.c.b16 %v5003, %v5002
    %v5028 = vpack.c.b16 %v5005, %v5004
    %v5029 = vpack.c.b16 %v5007, %v5006
    %v5030 = vpack.c.b16 %v5009, %v5008
    %v5031 = vpack.c.b16 %v5011, %v5010
    %v5032 = vpack.c.b16 %v5013, %v5012
    %v5033 = vpack.c.b16 %v5015, %v5014
    %v5034 = vpack.c.b16 %v5017, %v5016
    %v5035 = vpack.c.b16 %v5019, %v5018
    %5052 = vmatprep.subr.bf16.mxu0 0
    %5053 = vmatpush1.bf16.msra.mxu0 %v5027
    %5054 = vmatprep.subr.bf16.mxu0 0
    %5055 = vmatpush1.bf16.msra.mxu0 %v5026
    %5056 = vmatprep.subr.bf16.mxu0 0
    %5057 = vmatpush1.bf16.msra.mxu0 %v5025
    %5058 = vmatprep.subr.bf16.mxu0 0
    %5059 = vmatpush1.bf16.msra.mxu0 %v5024
    %5060 = vmatprep.subr.bf16.mxu0 0
    %5061 = vmatpush1.bf16.msra.mxu0 %v5023
    %5062 = vmatprep.subr.bf16.mxu0 0
    %5063 = vmatpush1.bf16.msra.mxu0 %v5022
    %5064 = vmatprep.subr.bf16.mxu0 0
    %5065 = vmatpush1.bf16.msra.mxu0 %v5021
    %5066 = vmatprep.subr.bf16.mxu0 0
    %5067 = vmatpush1.bf16.msra.mxu0 %v5020
    %5068 = vmatprep.subr.bf16.mxu0 0
    %5069 = vmatpush2.bf16.msra.mxu0 %v5035
    %5070 = vmatprep.subr.bf16.mxu0 0
    %5071 = vmatpush2.bf16.msra.mxu0 %v5034
    %5072 = vmatprep.subr.bf16.mxu0 0
    %5073 = vmatpush2.bf16.msra.mxu0 %v5033
    %5074 = vmatprep.subr.bf16.mxu0 0
    %5075 = vmatpush2.bf16.msra.mxu0 %v5032
    %5076 = vmatprep.subr.bf16.mxu0 0
    %5077 = vmatpush2.bf16.msra.mxu0 %v5031
    %5078 = vmatprep.subr.bf16.mxu0 0
    %5079 = vmatpush2.bf16.msra.mxu0 %v5030
    %5080 = vmatprep.subr.bf16.mxu0 0
    %5081 = vmatpush2.bf16.msra.mxu0 %v5029
    %5082 = vmatprep.subr.bf16.mxu0 0
    %5083 = vmatpush2.bf16.msra.mxu0 %v5028
    %5084 = vmatprep.mubr.bf16.mxu0 %v4951
    %5085 = vmatmul.mubr.bf16.gmra.mxu0 %v4950
    %v5086 = vpop.f32.mrf.mxu0
    %v5087 = vadd.f32 %v4955, %v5086
    %v5088 = vpop.f32.mrf.mxu0
    %v5089 = vpop.f32.mrf.mxu0
    %v5090 = vpop.f32.mrf.mxu0
    %5091 = vdwg.mxu0
    %5092 = vst [vmem:[#allocation11] sm:$0x3] %v5087
    // Predicated region
    $region84: #{tpu_custom_call.1} parent=1 // pred_check
      _
    $region85: #{tpu_custom_call.1} parent=1 // pred_check_branch
      %5094 = sbr.rel (0) target = $region87
    $region86: #{tpu_custom_call.1} parent=1 // pred_region
      %s5096 = ssub.s32 32, 32
      %5097 = vsyncadd [#allocation7], %s5096
      %s5099 = sshll.u32 [#allocation11], 4
      %s5100 = int_to_ptr.vmem [resolvable:$true] %s5099
      %5102 = dma.vmem_to_hbm [thread:$0]  %s5100, 32, %s10, [#allocation7]
    $region87: #{tpu_custom_call.1} parent=1 // pred_fallthru
      _
    // Predicated region
    $region88: #{tpu_custom_call.1} parent=1 // pred_check
      _
    $region89: #{tpu_custom_call.1} parent=1 // pred_check_branch
      %5104 = sbr.rel (0) target = $region91
    $region90: #{tpu_custom_call.1} parent=1 // pred_region
      %5105 = dma.done [#allocation7], 32
    $region91: #{tpu_custom_call.1} parent=1 // pred_fallthru
      _
    %5106 = vsyncpa [#allocation6], 1
    %5107 = vsyncpa [#allocation9], 1
    %5108 = vsyncpa [#allocation7], 1
  %5109 = vsyncmov [#allocation4]
  %s5110 = vpop.sfrf %5109
  %p5111 = scmp.eq.s32.totalorder %s5110, 0
  %p5112 = pneg %p5111
  %5114 = shalt.err (%p5112)
  %s5115 = scalar_lea.sflag [#allocation4], 1
  %5116 = vsyncmov %s5115
  %s5117 = vpop.sfrf %5116
  %p5118 = scmp.eq.s32.totalorder %s5117, 0
  %p5119 = pneg %p5118
  %5121 = shalt.err (%p5119)

</llo_original>
